<compile_context>
chip_gen: v5e
topology: v5e:2x2
jax: 0.10.0
libtpu: 0.0.40
codegen_flags: <defaults>
</compile_context>

<pallas_src>
import math
from functools import partial

import jax
import jax.numpy as jnp
from jax.experimental import pallas as pl
from jax.experimental.pallas import tpu as pltpu

IMAGE_CHANNELS = 4
ENC_FILTERS = [8, 16]
ENC_K = [3, 3]
ENC_S = [2, 2]
DEC_FILTERS = [8, 4]
DEC_K = [3, 3]
DEC_S = [2, 2]
Z_DIM = 32
IMG_HW = 16

HIGHEST = jax.lax.Precision.HIGHEST


def _round_up(n, m):
    return ((n + m - 1) // m) * m


# ----------------------------------------------------------------------------
# Fused Pallas kernel: whole forward for one batch tile = 4 MXU matmuls +
# bias + activation; intermediates never leave vregs/VMEM.
# ----------------------------------------------------------------------------
def _fused_ae_kernel(x_ref, w1_ref, b1_ref, w2_ref, b2_ref,
                     w3_ref, b3_ref, w4_ref, b4_ref, o_ref):
    """Per batch tile:
         h1 = relu(x  @ w1 + b1)    # conv1   (densified)
         h2 = relu(h1 @ w2 + b2)    # conv2   (densified)
         h3 = relu(h2 @ w3 + b3)    # enc_out o dec_in o convT1 (densified+folded)
         y  = tanh(h3 @ w4 + b4)    # convT2  (densified)
       Weights arrive as bf16 (single-pass MXU); activations are cast to bf16
       only at the dot inputs; accumulation and all elementwise math are f32
       (v5e-safe).  This matches (slightly exceeds) the precision of XLA's
       default f32 matmul lowering on TPU.
    """

    def affine(h, w_ref, b_ref):
        return jnp.dot(h.astype(jnp.bfloat16), w_ref[...],
                       preferred_element_type=jnp.float32) + b_ref[...]

    h = x_ref[...]                                     # f32 (TILE_B, 1024)
    h = jnp.maximum(affine(h, w1_ref, b1_ref), 0.0)    # conv1  + ReLU
    h = jnp.maximum(affine(h, w2_ref, b2_ref), 0.0)    # conv2  + ReLU
    h = jnp.maximum(affine(h, w3_ref, b3_ref), 0.0)    # fc∘convT1 + ReLU
    h = jnp.tanh(affine(h, w4_ref, b4_ref))            # convT2 + Tanh
    o_ref[...] = h.astype(o_ref.dtype)


def autoencoder_forward(dense, x, *, tile_b=256):
    """Forward pass. x: (B, C, H, W) NCHW float32."""
    (w1, b1), (w2, b2), (w3, b3), (w4, b4) = dense["layers"]
    din = w1.shape[0]
    dout = w4.shape[1]

    B = x.shape[0]
    x2d = x.reshape(B, -1).astype(jnp.float32)         # torch.flatten order

    # Batch tile: multiple of 8 (f32 sublane); 256 default fills the MXU rows
    # on v6e/v7x (2x256x256) and is 2x128 on v5e.  Pad B up to a tile multiple
    # (Pallas does not bounds-check VMEM refs); padded rows are sliced off.
    tb = min(tile_b, _round_up(B, 8))
    b_pad = _round_up(B, tb)
    if b_pad != B:
        x2d = jnp.pad(x2d, ((0, b_pad - B), (0, 0)))
    grid = (b_pad // tb,)

    def _resident(arr):
        # Constant index map: block is fetched once and stays VMEM-resident
        # across all (consecutive) grid steps on a core.
        return pl.BlockSpec(arr.shape, lambda i: (0, 0))

    in_specs = [
        # TODO(synk): if xprof shows exposed input DMA at large B, add
        # pipeline_mode=pl.Buffered(3) to this activation BlockSpec.
        pl.BlockSpec((tb, din), lambda i: (i, 0)),
    ]
    for w, b in ((w1, b1), (w2, b2), (w3, b3), (w4, b4)):
        in_specs += [_resident(w), _resident(b)]

    out2d = pl.pallas_call(
        _fused_ae_kernel,
        out_shape=jax.ShapeDtypeStruct((b_pad, dout), jnp.float32),
        grid_spec=pltpu.PrefetchScalarGridSpec(
            num_scalar_prefetch=0,
            grid=grid,
            in_specs=in_specs,
            out_specs=pl.BlockSpec((tb, dout), lambda i: (i, 0)),
        ),
        compiler_params=pltpu.CompilerParams(
            dimension_semantics=("parallel",),          # 2 TCs on v7x
            vmem_limit_bytes=32 * 1024 * 1024,          # v7x-safe scoped budget
        ),
    )(x2d, w1, b1, w2, b2, w3, b3, w4, b4)

    c, h, w = dense["out_chw"]
    return out2d[:B].reshape(B, c, h, w)


# ----------------------------------------------------------------------------
# One-time parameter preprocessing (plain JAX, runs once at init):
# fold convs / conv-transposes / the fc pair into dense bf16 matmul operands.
# ----------------------------------------------------------------------------
def _conv2d(x, w, stride, pad, precision=None):
    """PyTorch-semantics Conv2d (no bias). x:(B,Cin,H,W), w:(Cout,Cin,kh,kw)."""
    return jax.lax.conv_general_dilated(
        x, w, window_strides=(stride, stride),
        padding=[(pad, pad), (pad, pad)],
        dimension_numbers=("NCHW", "OIHW", "NCHW"),
        precision=precision)


def _conv_transpose2d(x, w, stride, pad, out_pad, precision=None):
    """PyTorch-semantics ConvTranspose2d (no bias). x:(B,Cin,H,W), w:(Cin,Cout,kh,kw)."""
    kh, kw = w.shape[2], w.shape[3]
    w_eq = jnp.flip(w, axis=(2, 3)).transpose(1, 0, 2, 3)   # (Cout,Cin,kh,kw)
    return jax.lax.conv_general_dilated(
        x, w_eq, window_strides=(1, 1),
        padding=[(kh - 1 - pad, kh - 1 - pad + out_pad),
                 (kw - 1 - pad, kw - 1 - pad + out_pad)],
        lhs_dilation=(stride, stride),
        dimension_numbers=("NCHW", "OIHW", "NCHW"),
        precision=precision)


def _densify(linear_op, in_chw, bias):
    """Fold a linear NCHW->NCHW op into a dense (Din, Dout) matrix + (1, Dout)
    bias acting on torch.flatten(start_dim=1)-ordered vectors.  Exact: each
    identity-basis response is a pure scatter of the original weights."""
    din = math.prod(in_chw)
    basis = jnp.eye(din, dtype=jnp.float32).reshape((din,) + tuple(in_chw))
    y = linear_op(basis)                                  # (din, Cout, Ho, Wo)
    out_chw = tuple(int(d) for d in y.shape[1:])
    w_dense = y.reshape(din, -1)                          # (Din, Dout)
    b_dense = jnp.broadcast_to(bias[:, None, None], out_chw).reshape(1, -1)
    return w_dense, b_dense, out_chw


def preprocess_params(params):
    chw = (IMAGE_CHANNELS, IMG_HW, IMG_HW)

    # Encoder convs -> dense.
    enc = []
    for (w, b), s in zip(params["enc"], ENC_S):
        wd, bd, chw = _densify(
            partial(_conv2d, w=w, stride=s, pad=1, precision=HIGHEST), chw, b)
        enc.append((wd, bd))

    # enc_out (fc_in->z) immediately followed by dec_in (z->fc_in), no
    # nonlinearity between them and z unused by forward(): collapse exactly.
    wf = jnp.dot(params["enc_out_w"], params["dec_in_w"], precision=HIGHEST)
    bf = jnp.dot(params["enc_out_b"], params["dec_in_w"],
                 precision=HIGHEST) + params["dec_in_b"]

    # Decoder transposed convs -> dense.
    dec = []
    for (w, b), s in zip(params["dec"], DEC_S):
        wd, bd, chw = _densify(
            partial(_conv_transpose2d, w=w, stride=s, pad=1, out_pad=s - 1,
                    precision=HIGHEST), chw, b)
        dec.append((wd, bd))

    # Fold the collapsed fc forward into convT1 (exact: the torch module has
    # no activation between decoder_in and the first ConvTranspose).
    w3d, b3d = dec[0]
    w3f = jnp.dot(wf, w3d, precision=HIGHEST)                       # (256, 512)
    b3f = jnp.dot(bf.reshape(1, -1), w3d, precision=HIGHEST) + b3d  # (1, 512)

    # bf16 weights (single-pass MXU, half the HBM bytes), f32 biases (VPU add).
    layers = []
    for w, b in (enc[0], enc[1], (w3f, b3f), dec[1]):
        layers.append((w.astype(jnp.bfloat16), b.astype(jnp.float32)))
    return {"layers": layers, "out_chw": chw}


# ----------------------------------------------------------------------------
# Raw (torch-layout) parameter init + pure-JAX reference forward (validation)
# ----------------------------------------------------------------------------
def init_params(key):
    params = {}
    keys = iter(jax.random.split(key, 16))

    enc = []
    cin = IMAGE_CHANNELS
    for f, k in zip(ENC_FILTERS, ENC_K):
        w = 0.1 * jax.random.normal(next(keys), (f, cin, k, k), jnp.float32)
        b = 0.1 * jax.random.normal(next(keys), (f,), jnp.float32)
        enc.append((w, b))
        cin = f
    params["enc"] = enc

    hw = IMG_HW
    for k, s in zip(ENC_K, ENC_S):
        hw = (hw + 2 * 1 - k) // s + 1
    fc_in = ENC_FILTERS[-1] * hw * hw

    params["enc_out_w"] = 0.1 * jax.random.normal(next(keys), (fc_in, Z_DIM), jnp.float32)
    params["enc_out_b"] = 0.1 * jax.random.normal(next(keys), (Z_DIM,), jnp.float32)
    params["dec_in_w"] = 0.1 * jax.random.normal(next(keys), (Z_DIM, fc_in), jnp.float32)
    params["dec_in_b"] = 0.1 * jax.random.normal(next(keys), (fc_in,), jnp.float32)

    dec = []
    cin = ENC_FILTERS[-1]
    for f, k in zip(DEC_FILTERS, DEC_K):
        w = 0.1 * jax.random.normal(next(keys), (cin, f, k, k), jnp.float32)
        b = 0.1 * jax.random.normal(next(keys), (f,), jnp.float32)
        dec.append((w, b))
        cin = f
    params["dec"] = dec
    return params


def reference_forward(params, x):
    """Layer-by-layer XLA reference with the exact structure of the torch module."""
    h = x
    for (w, b), s in zip(params["enc"], ENC_S):
        h = jax.nn.relu(_conv2d(h, w, s, 1, precision=HIGHEST)
                        + b[None, :, None, None])
    conv_shape = h.shape
    h = h.reshape(h.shape[0], -1)
    z = jnp.dot(h, params["enc_out_w"], precision=HIGHEST) + params["enc_out_b"]
    h = jnp.dot(z, params["dec_in_w"], precision=HIGHEST) + params["dec_in_b"]
    h = h.reshape(conv_shape)
    n = len(params["dec"])
    for i, ((w, b), s) in enumerate(zip(params["dec"], DEC_S)):
        h = _conv_transpose2d(h, w, s, 1, s - 1, precision=HIGHEST) \
            + b[None, :, None, None]
        h = jnp.tanh(h) if i == n - 1 else jax.nn.relu(h)
    return h


if __name__ == "__main__":
    key = jax.random.PRNGKey(0)
    pkey, xkey = jax.random.split(key)
    params = init_params(pkey)
    dense = preprocess_params(params)      # one-time folding, not in the hot path

    x = jax.random.normal(xkey, (2, IMAGE_CHANNELS, IMG_HW, IMG_HW), jnp.float32)

    fwd = jax.jit(lambda xx: autoencoder_forward(dense, xx))
    y = fwd(x)
    jax.block_until_ready(y)

    assert y.shape == (2, IMAGE_CHANNELS, IMG_HW, IMG_HW), y.shape
    assert bool(jnp.all(jnp.isfinite(y)))
    assert bool(jnp.all(jnp.abs(y) <= 1.0 + 1e-6))       # final Tanh bound

    # Validate against the un-fused pure-JAX reference (HIGHEST precision).
    y_ref = jax.jit(lambda xx: reference_forward(params, xx))(x)
    max_err = float(jnp.max(jnp.abs(y - y_ref)))
    assert max_err < 5e-2, f"mismatch vs reference: {max_err}"

    print("KERNEL_OK")
</pallas_src>

<mosaic_0001>
module attributes {stable_mosaic.version = 11 : i64} {
  func.func @_fused_ae_kernel(%arg0: i32, %arg1: memref<8x1024xf32, #tpu.memory_space<vmem>>, %arg2: memref<1024x512xbf16, #tpu.memory_space<vmem>>, %arg3: memref<1x512xf32, #tpu.memory_space<vmem>>, %arg4: memref<512x256xbf16, #tpu.memory_space<vmem>>, %arg5: memref<1x256xf32, #tpu.memory_space<vmem>>, %arg6: memref<256x512xbf16, #tpu.memory_space<vmem>>, %arg7: memref<1x512xf32, #tpu.memory_space<vmem>>, %arg8: memref<512x1024xbf16, #tpu.memory_space<vmem>>, %arg9: memref<1x1024xf32, #tpu.memory_space<vmem>>, %arg10: memref<8x1024xf32, #tpu.memory_space<vmem>>) attributes {dimension_semantics = [#tpu.dimension_semantics<parallel>], iteration_bounds = array<i64: 1>, scalar_prefetch = 0 : i64, scratch_operands = 0 : i64, tpu.core_type = #tpu.core_type<tc>, window_params = [{transform_indices = @transform_0, window_bounds = array<i64: 8, 1024>}, {pipeline_mode = #tpu.pipeline_mode<synchronous>, transform_indices = @transform_1, window_bounds = array<i64: 1024, 512>}, {pipeline_mode = #tpu.pipeline_mode<synchronous>, transform_indices = @transform_2, window_bounds = array<i64: 1, 512>}, {pipeline_mode = #tpu.pipeline_mode<synchronous>, transform_indices = @transform_3, window_bounds = array<i64: 512, 256>}, {pipeline_mode = #tpu.pipeline_mode<synchronous>, transform_indices = @transform_4, window_bounds = array<i64: 1, 256>}, {pipeline_mode = #tpu.pipeline_mode<synchronous>, transform_indices = @transform_5, window_bounds = array<i64: 256, 512>}, {pipeline_mode = #tpu.pipeline_mode<synchronous>, transform_indices = @transform_6, window_bounds = array<i64: 1, 512>}, {pipeline_mode = #tpu.pipeline_mode<synchronous>, transform_indices = @transform_7, window_bounds = array<i64: 512, 1024>}, {pipeline_mode = #tpu.pipeline_mode<synchronous>, transform_indices = @transform_8, window_bounds = array<i64: 1, 1024>}, {transform_indices = @transform_9, window_bounds = array<i64: 8, 1024>}]} {
    %c0 = arith.constant 0 : index
    %c0_0 = arith.constant 0 : index
    %0 = vector.load %arg1[%c0, %c0_0] : memref<8x1024xf32, #tpu.memory_space<vmem>>, vector<8x1024xf32>
    %1 = arith.truncf %0 : vector<8x1024xf32> to vector<8x1024xbf16>
    %c0_1 = arith.constant 0 : index
    %c0_2 = arith.constant 0 : index
    %2 = vector.load %arg2[%c0_1, %c0_2] : memref<1024x512xbf16, #tpu.memory_space<vmem>>, vector<1024x512xbf16>
    %cst = arith.constant dense<0.000000e+00> : vector<8x512xf32>
    %3 = tpu.matmul %1, %2, %cst {dimension_numbers = #tpu.dot_dimension_numbers<[1], [0], [0], [1], [0, 0, 1, 1], [], []>} : vector<8x1024xbf16>, vector<1024x512xbf16>, vector<8x512xf32> -> vector<8x512xf32>
    %c0_3 = arith.constant 0 : index
    %c0_4 = arith.constant 0 : index
    %4 = vector.load %arg3[%c0_3, %c0_4] : memref<1x512xf32, #tpu.memory_space<vmem>>, vector<1x512xf32>
    %5 = vector.broadcast %4 : vector<1x512xf32> to vector<8x512xf32>
    %6 = arith.addf %3, %5 : vector<8x512xf32>
    %cst_5 = arith.constant 0.000000e+00 : f32
    %7 = vector.broadcast %cst_5 : f32 to vector<8x512xf32>
    %8 = arith.maximumf %6, %7 : vector<8x512xf32>
    %9 = arith.truncf %8 : vector<8x512xf32> to vector<8x512xbf16>
    %c0_6 = arith.constant 0 : index
    %c0_7 = arith.constant 0 : index
    %10 = vector.load %arg4[%c0_6, %c0_7] : memref<512x256xbf16, #tpu.memory_space<vmem>>, vector<512x256xbf16>
    %cst_8 = arith.constant dense<0.000000e+00> : vector<8x256xf32>
    %11 = tpu.matmul %9, %10, %cst_8 {dimension_numbers = #tpu.dot_dimension_numbers<[1], [0], [0], [1], [0, 0, 1, 1], [], []>} : vector<8x512xbf16>, vector<512x256xbf16>, vector<8x256xf32> -> vector<8x256xf32>
    %c0_9 = arith.constant 0 : index
    %c0_10 = arith.constant 0 : index
    %12 = vector.load %arg5[%c0_9, %c0_10] : memref<1x256xf32, #tpu.memory_space<vmem>>, vector<1x256xf32>
    %13 = vector.broadcast %12 : vector<1x256xf32> to vector<8x256xf32>
    %14 = arith.addf %11, %13 : vector<8x256xf32>
    %cst_11 = arith.constant 0.000000e+00 : f32
    %15 = vector.broadcast %cst_11 : f32 to vector<8x256xf32>
    %16 = arith.maximumf %14, %15 : vector<8x256xf32>
    %17 = arith.truncf %16 : vector<8x256xf32> to vector<8x256xbf16>
    %c0_12 = arith.constant 0 : index
    %c0_13 = arith.constant 0 : index
    %18 = vector.load %arg6[%c0_12, %c0_13] : memref<256x512xbf16, #tpu.memory_space<vmem>>, vector<256x512xbf16>
    %cst_14 = arith.constant dense<0.000000e+00> : vector<8x512xf32>
    %19 = tpu.matmul %17, %18, %cst_14 {dimension_numbers = #tpu.dot_dimension_numbers<[1], [0], [0], [1], [0, 0, 1, 1], [], []>} : vector<8x256xbf16>, vector<256x512xbf16>, vector<8x512xf32> -> vector<8x512xf32>
    %c0_15 = arith.constant 0 : index
    %c0_16 = arith.constant 0 : index
    %20 = vector.load %arg7[%c0_15, %c0_16] : memref<1x512xf32, #tpu.memory_space<vmem>>, vector<1x512xf32>
    %21 = vector.broadcast %20 : vector<1x512xf32> to vector<8x512xf32>
    %22 = arith.addf %19, %21 : vector<8x512xf32>
    %cst_17 = arith.constant 0.000000e+00 : f32
    %23 = vector.broadcast %cst_17 : f32 to vector<8x512xf32>
    %24 = arith.maximumf %22, %23 : vector<8x512xf32>
    %25 = arith.truncf %24 : vector<8x512xf32> to vector<8x512xbf16>
    %c0_18 = arith.constant 0 : index
    %c0_19 = arith.constant 0 : index
    %26 = vector.load %arg8[%c0_18, %c0_19] : memref<512x1024xbf16, #tpu.memory_space<vmem>>, vector<512x1024xbf16>
    %cst_20 = arith.constant dense<0.000000e+00> : vector<8x1024xf32>
    %27 = tpu.matmul %25, %26, %cst_20 {dimension_numbers = #tpu.dot_dimension_numbers<[1], [0], [0], [1], [0, 0, 1, 1], [], []>} : vector<8x512xbf16>, vector<512x1024xbf16>, vector<8x1024xf32> -> vector<8x1024xf32>
    %c0_21 = arith.constant 0 : index
    %c0_22 = arith.constant 0 : index
    %28 = vector.load %arg9[%c0_21, %c0_22] : memref<1x1024xf32, #tpu.memory_space<vmem>>, vector<1x1024xf32>
    %29 = vector.broadcast %28 : vector<1x1024xf32> to vector<8x1024xf32>
    %30 = arith.addf %27, %29 : vector<8x1024xf32>
    %31 = math.tanh %30 : vector<8x1024xf32>
    %c0_23 = arith.constant 0 : index
    %c0_24 = arith.constant 0 : index
    %32 = vector.load %arg10[%c0_23, %c0_24] : memref<8x1024xf32, #tpu.memory_space<vmem>>, vector<8x1024xf32>
    tpu.vector_store %arg10[%c0_23, %c0_24], %31 {strides = array<i32>} : memref<8x1024xf32, #tpu.memory_space<vmem>>, vector<8x1024xf32>,
    return
  }
  func.func @transform_0(%arg0: i32) -> (i32, i32) {
    %c0_i32 = arith.constant 0 : i32
    %c0_i32_0 = arith.constant 0 : i32
    return %arg0, %c0_i32 : i32, i32
  }
  func.func @transform_1(%arg0: i32) -> (i32, i32) {
    %c0_i32 = arith.constant 0 : i32
    %c0_i32_0 = arith.constant 0 : i32
    %c0_i32_1 = arith.constant 0 : i32
    return %c0_i32, %c0_i32_0 : i32, i32
  }
  func.func @transform_2(%arg0: i32) -> (i32, i32) {
    %c0_i32 = arith.constant 0 : i32
    %c0_i32_0 = arith.constant 0 : i32
    %c0_i32_1 = arith.constant 0 : i32
    return %c0_i32, %c0_i32_0 : i32, i32
  }
  func.func @transform_3(%arg0: i32) -> (i32, i32) {
    %c0_i32 = arith.constant 0 : i32
    %c0_i32_0 = arith.constant 0 : i32
    %c0_i32_1 = arith.constant 0 : i32
    return %c0_i32, %c0_i32_0 : i32, i32
  }
  func.func @transform_4(%arg0: i32) -> (i32, i32) {
    %c0_i32 = arith.constant 0 : i32
    %c0_i32_0 = arith.constant 0 : i32
    %c0_i32_1 = arith.constant 0 : i32
    return %c0_i32, %c0_i32_0 : i32, i32
  }
  func.func @transform_5(%arg0: i32) -> (i32, i32) {
    %c0_i32 = arith.constant 0 : i32
    %c0_i32_0 = arith.constant 0 : i32
    %c0_i32_1 = arith.constant 0 : i32
    return %c0_i32, %c0_i32_0 : i32, i32
  }
  func.func @transform_6(%arg0: i32) -> (i32, i32) {
    %c0_i32 = arith.constant 0 : i32
    %c0_i32_0 = arith.constant 0 : i32
    %c0_i32_1 = arith.constant 0 : i32
    return %c0_i32, %c0_i32_0 : i32, i32
  }
  func.func @transform_7(%arg0: i32) -> (i32, i32) {
    %c0_i32 = arith.constant 0 : i32
    %c0_i32_0 = arith.constant 0 : i32
    %c0_i32_1 = arith.constant 0 : i32
    return %c0_i32, %c0_i32_0 : i32, i32
  }
  func.func @transform_8(%arg0: i32) -> (i32, i32) {
    %c0_i32 = arith.constant 0 : i32
    %c0_i32_0 = arith.constant 0 : i32
    %c0_i32_1 = arith.constant 0 : i32
    return %c0_i32, %c0_i32_0 : i32, i32
  }
  func.func @transform_9(%arg0: i32) -> (i32, i32) {
    %c0_i32 = arith.constant 0 : i32
    %c0_i32_0 = arith.constant 0 : i32
    return %arg0, %c0_i32 : i32, i32
  }
}

</mosaic_0001>

<llo_original>
// kernel: _lambda_.1
$region0: #{_lambda_.1}
  #allocation0 [shape = 'u32[]', space=smem, size = 0x4, offset = 0x4, fixed_abs, tag = 'smem constant byte address 0x4 - core index']
  #allocation1 [shape = 'u32[72,128]{1,0:T(1,128)}', space=vmem, size = 0x9000, scoped, tag = 'internal scratch']
  %s0 = inlined_call_operand.vmem [shape: f32[8,1024], index: 0, kind: input, shape index: {}]
  %s1 = inlined_call_operand.hbm [shape: bf16[1024,512], index: 1, kind: input, shape index: {}]
  %s2 = inlined_call_operand.vmem [shape: f32[1,512], index: 2, kind: input, shape index: {}]
  %s3 = inlined_call_operand.hbm [shape: bf16[512,256], index: 3, kind: input, shape index: {}]
  %s4 = inlined_call_operand.vmem [shape: f32[1,256], index: 4, kind: input, shape index: {}]
  %s5 = inlined_call_operand.hbm [shape: bf16[256,512], index: 5, kind: input, shape index: {}]
  %s6 = inlined_call_operand.vmem [shape: f32[1,512], index: 6, kind: input, shape index: {}]
  %s7 = inlined_call_operand.hbm [shape: bf16[512,1024], index: 7, kind: input, shape index: {}]
  %s8 = inlined_call_operand.vmem [shape: f32[1,1024], index: 8, kind: input, shape index: {}]
  %s9 = inlined_call_operand.vmem [shape: f32[8,1024], index: 9, kind: output, shape index: {}]
  %s10 = sld [smem:[#allocation0]]
  $region62: #{_lambda_.1} parent=0
    _
  %s12 = ssub.s32 1, %s10
  %s13 = scalar_select 0, %s12, %s10
  $region1: #{_lambda_.1} parent=0
    #allocation2 [shape = 'u8[1048576]{0}', space=vmem, size = 0x100000, scoped, tag = 'input window, operand 1, single buffered']
    #allocation3 [shape = 's32[1]{0}', space=sflag, size = 0x4, scoped, tag = 'scoped memory for _lambda_.1']
    #allocation4 [shape = 'u8[262144]{0}', space=vmem, size = 0x40000, scoped, tag = 'input window, operand 3, single buffered']
    #allocation5 [shape = 's32[1]{0}', space=sflag, size = 0x4, scoped, tag = 'scoped memory for _lambda_.1']
    #allocation6 [shape = 'u8[262144]{0}', space=vmem, size = 0x40000, scoped, tag = 'input window, operand 5, single buffered']
    #allocation7 [shape = 'u8[1048576]{0}', space=vmem, size = 0x100000, scoped, tag = 'input window, operand 7, single buffered']
    #allocation8 [shape = 's32[1]{0}', space=sflag, size = 0x4, scoped, tag = 'scoped memory for _lambda_.1']
    %14 = vsyncpa [#allocation3], 0
    %15 = vsyncpa [#allocation5], 0
    %16 = vsyncpa [#allocation8], 0
    // Predicated region
    $region2: #{_lambda_.1} parent=1 // pred_check
      _
    $region3: #{_lambda_.1} parent=1 // pred_check_branch
      %18 = sbr.rel (0) target = $region5
    $region4: #{_lambda_.1} parent=1 // pred_region
      _
    $region5: #{_lambda_.1} parent=1 // pred_fallthru
      _
    // Predicated region
    $region6: #{_lambda_.1} parent=1 // pred_check
      _
    $region7: #{_lambda_.1} parent=1 // pred_check_branch
      %20 = sbr.rel (0) target = $region9
    $region8: #{_lambda_.1} parent=1 // pred_region
      %22 = vsyncadd [#allocation3], 0
      %s23 = sshll.u32 %s1, 4
      %s24 = int_to_ptr.hbm [resolvable:$true] %s23
      %s25 = sshll.u32 [#allocation2], 4
      %s26 = int_to_ptr.vmem [resolvable:$true] %s25
      %31 = dma.hbm_to_vmem [thread:$0]  %s24, 32768, %s26, [#allocation3], 256, 256, 16
    $region9: #{_lambda_.1} parent=1 // pred_fallthru
      _
    // Predicated region
    $region10: #{_lambda_.1} parent=1 // pred_check
      _
    $region11: #{_lambda_.1} parent=1 // pred_check_branch
      %33 = sbr.rel (0) target = $region13
    $region12: #{_lambda_.1} parent=1 // pred_region
      _
    $region13: #{_lambda_.1} parent=1 // pred_fallthru
      _
    // Predicated region
    $region14: #{_lambda_.1} parent=1 // pred_check
      _
    $region15: #{_lambda_.1} parent=1 // pred_check_branch
      %35 = sbr.rel (0) target = $region17
    $region16: #{_lambda_.1} parent=1 // pred_region
      %37 = vsyncadd [#allocation5], 0
      %s38 = sshll.u32 %s3, 4
      %s39 = int_to_ptr.hbm [resolvable:$true] %s38
      %s40 = sshll.u32 [#allocation4], 4
      %s41 = int_to_ptr.vmem [resolvable:$true] %s40
      %46 = dma.hbm_to_vmem [thread:$0]  %s39, 8192, %s41, [#allocation5], 128, 128, 8
    $region17: #{_lambda_.1} parent=1 // pred_fallthru
      _
    // Predicated region
    $region18: #{_lambda_.1} parent=1 // pred_check
      _
    $region19: #{_lambda_.1} parent=1 // pred_check_branch
      %48 = sbr.rel (0) target = $region21
    $region20: #{_lambda_.1} parent=1 // pred_region
      _
    $region21: #{_lambda_.1} parent=1 // pred_fallthru
      _
    // Predicated region
    $region22: #{_lambda_.1} parent=1 // pred_check
      _
    $region23: #{_lambda_.1} parent=1 // pred_check_branch
      %50 = sbr.rel (0) target = $region25
    $region24: #{_lambda_.1} parent=1 // pred_region
      %52 = vsyncadd [#allocation5], 0
      %s53 = sshll.u32 %s5, 4
      %s54 = int_to_ptr.hbm [resolvable:$true] %s53
      %s55 = sshll.u32 [#allocation6], 4
      %s56 = int_to_ptr.vmem [resolvable:$true] %s55
      %61 = dma.hbm_to_vmem [thread:$0]  %s54, 8192, %s56, [#allocation5], 256, 256, 16
    $region25: #{_lambda_.1} parent=1 // pred_fallthru
      _
    // Predicated region
    $region26: #{_lambda_.1} parent=1 // pred_check
      _
    $region27: #{_lambda_.1} parent=1 // pred_check_branch
      %63 = sbr.rel (0) target = $region29
    $region28: #{_lambda_.1} parent=1 // pred_region
      _
    $region29: #{_lambda_.1} parent=1 // pred_fallthru
      _
    // Predicated region
    $region30: #{_lambda_.1} parent=1 // pred_check
      _
    $region31: #{_lambda_.1} parent=1 // pred_check_branch
      %65 = sbr.rel (0) target = $region33
    $region32: #{_lambda_.1} parent=1 // pred_region
      %67 = vsyncadd [#allocation8], 0
      %s68 = sshll.u32 %s7, 4
      %s69 = int_to_ptr.hbm [resolvable:$true] %s68
      %s70 = sshll.u32 [#allocation7], 4
      %s71 = int_to_ptr.vmem [resolvable:$true] %s70
      %76 = dma.hbm_to_vmem [thread:$0]  %s69, 32768, %s71, [#allocation8], 512, 512, 32
    $region33: #{_lambda_.1} parent=1 // pred_fallthru
      _
    // Predicated region
    $region34: #{_lambda_.1} parent=1 // pred_check
      _
    $region35: #{_lambda_.1} parent=1 // pred_check_branch
      %78 = sbr.rel (0) target = $region37
    $region36: #{_lambda_.1} parent=1 // pred_region
      _
    $region37: #{_lambda_.1} parent=1 // pred_fallthru
      _
    // Predicated region
    $region38: #{_lambda_.1} parent=1 // pred_check
      _
    $region39: #{_lambda_.1} parent=1 // pred_check_branch
      %80 = sbr.rel (0) target = $region41
    $region40: #{_lambda_.1} parent=1 // pred_region
      %82 = dma.done [#allocation3], 32768
    $region41: #{_lambda_.1} parent=1 // pred_fallthru
      _
    // Predicated region
    $region42: #{_lambda_.1} parent=1 // pred_check
      _
    $region43: #{_lambda_.1} parent=1 // pred_check_branch
      %84 = sbr.rel (0) target = $region45
    $region44: #{_lambda_.1} parent=1 // pred_region
      %86 = dma.done [#allocation5], 8192
    $region45: #{_lambda_.1} parent=1 // pred_fallthru
      _
    // Predicated region
    $region46: #{_lambda_.1} parent=1 // pred_check
      _
    $region47: #{_lambda_.1} parent=1 // pred_check_branch
      %88 = sbr.rel (0) target = $region49
    $region48: #{_lambda_.1} parent=1 // pred_region
      %90 = dma.done [#allocation5], 8192
    $region49: #{_lambda_.1} parent=1 // pred_fallthru
      _
    // Predicated region
    $region50: #{_lambda_.1} parent=1 // pred_check
      _
    $region51: #{_lambda_.1} parent=1 // pred_check_branch
      %92 = sbr.rel (0) target = $region53
    $region52: #{_lambda_.1} parent=1 // pred_region
      %94 = dma.done [#allocation8], 32768
    $region53: #{_lambda_.1} parent=1 // pred_fallthru
      _
    %v95 = vld [vmem:[%s0] sm:$0xff]
    %v96 = vld [vmem:[%s0 + $0x8] sm:$0xff]
    %v97 = vld [vmem:[%s0 + $0x10] sm:$0xff]
    %v98 = vld [vmem:[%s0 + $0x18] sm:$0xff]
    %v99 = vld [vmem:[%s0 + $0x20] sm:$0xff]
    %v100 = vld [vmem:[%s0 + $0x28] sm:$0xff]
    %v101 = vld [vmem:[%s0 + $0x30] sm:$0xff]
    %v102 = vld [vmem:[%s0 + $0x38] sm:$0xff]
    %v103 = vpack.c.bf16 %v95, %v95
    %v104 = vpack.c.bf16 %v96, %v96
    %v105 = vpack.c.bf16 %v97, %v97
    %v106 = vpack.c.bf16 %v98, %v98
    %v107 = vpack.c.bf16 %v99, %v99
    %v108 = vpack.c.bf16 %v100, %v100
    %v109 = vpack.c.bf16 %v101, %v101
    %v110 = vpack.c.bf16 %v102, %v102
    %v111 = vld [vmem:[#allocation2] sm:$0xff]
    %v112 = vld [vmem:[#allocation2 + $0x8] sm:$0xff]
    %v113 = vld [vmem:[#allocation2 + $0x10] sm:$0xff]
    %v114 = vld [vmem:[#allocation2 + $0x18] sm:$0xff]
    %v115 = vld [vmem:[#allocation2 + $0x20] sm:$0xff]
    %v116 = vld [vmem:[#allocation2 + $0x28] sm:$0xff]
    %v117 = vld [vmem:[#allocation2 + $0x30] sm:$0xff]
    %v118 = vld [vmem:[#allocation2 + $0x38] sm:$0xff]
    %v119 = vld [vmem:[#allocation2 + $0x40] sm:$0xff]
    %v120 = vld [vmem:[#allocation2 + $0x48] sm:$0xff]
    %v121 = vld [vmem:[#allocation2 + $0x50] sm:$0xff]
    %v122 = vld [vmem:[#allocation2 + $0x58] sm:$0xff]
    %v123 = vld [vmem:[#allocation2 + $0x60] sm:$0xff]
    %v124 = vld [vmem:[#allocation2 + $0x68] sm:$0xff]
    %v125 = vld [vmem:[#allocation2 + $0x70] sm:$0xff]
    %v126 = vld [vmem:[#allocation2 + $0x78] sm:$0xff]
    %v127 = vld [vmem:[#allocation2 + $0x80] sm:$0xff]
    %v128 = vld [vmem:[#allocation2 + $0x88] sm:$0xff]
    %v129 = vld [vmem:[#allocation2 + $0x90] sm:$0xff]
    %v130 = vld [vmem:[#allocation2 + $0x98] sm:$0xff]
    %v131 = vld [vmem:[#allocation2 + $0xa0] sm:$0xff]
    %v132 = vld [vmem:[#allocation2 + $0xa8] sm:$0xff]
    %v133 = vld [vmem:[#allocation2 + $0xb0] sm:$0xff]
    %v134 = vld [vmem:[#allocation2 + $0xb8] sm:$0xff]
    %v135 = vld [vmem:[#allocation2 + $0xc0] sm:$0xff]
    %v136 = vld [vmem:[#allocation2 + $0xc8] sm:$0xff]
    %v137 = vld [vmem:[#allocation2 + $0xd0] sm:$0xff]
    %v138 = vld [vmem:[#allocation2 + $0xd8] sm:$0xff]
    %v139 = vld [vmem:[#allocation2 + $0xe0] sm:$0xff]
    %v140 = vld [vmem:[#allocation2 + $0xe8] sm:$0xff]
    %v141 = vld [vmem:[#allocation2 + $0xf0] sm:$0xff]
    %v142 = vld [vmem:[#allocation2 + $0xf8] sm:$0xff]
    %v143 = vld [vmem:[#allocation2 + $0x100] sm:$0xff]
    %v144 = vld [vmem:[#allocation2 + $0x108] sm:$0xff]
    %v145 = vld [vmem:[#allocation2 + $0x110] sm:$0xff]
    %v146 = vld [vmem:[#allocation2 + $0x118] sm:$0xff]
    %v147 = vld [vmem:[#allocation2 + $0x120] sm:$0xff]
    %v148 = vld [vmem:[#allocation2 + $0x128] sm:$0xff]
    %v149 = vld [vmem:[#allocation2 + $0x130] sm:$0xff]
    %v150 = vld [vmem:[#allocation2 + $0x138] sm:$0xff]
    %v151 = vld [vmem:[#allocation2 + $0x140] sm:$0xff]
    %v152 = vld [vmem:[#allocation2 + $0x148] sm:$0xff]
    %v153 = vld [vmem:[#allocation2 + $0x150] sm:$0xff]
    %v154 = vld [vmem:[#allocation2 + $0x158] sm:$0xff]
    %v155 = vld [vmem:[#allocation2 + $0x160] sm:$0xff]
    %v156 = vld [vmem:[#allocation2 + $0x168] sm:$0xff]
    %v157 = vld [vmem:[#allocation2 + $0x170] sm:$0xff]
    %v158 = vld [vmem:[#allocation2 + $0x178] sm:$0xff]
    %v159 = vld [vmem:[#allocation2 + $0x180] sm:$0xff]
    %v160 = vld [vmem:[#allocation2 + $0x188] sm:$0xff]
    %v161 = vld [vmem:[#allocation2 + $0x190] sm:$0xff]
    %v162 = vld [vmem:[#allocation2 + $0x198] sm:$0xff]
    %v163 = vld [vmem:[#allocation2 + $0x1a0] sm:$0xff]
    %v164 = vld [vmem:[#allocation2 + $0x1a8] sm:$0xff]
    %v165 = vld [vmem:[#allocation2 + $0x1b0] sm:$0xff]
    %v166 = vld [vmem:[#allocation2 + $0x1b8] sm:$0xff]
    %v167 = vld [vmem:[#allocation2 + $0x1c0] sm:$0xff]
    %v168 = vld [vmem:[#allocation2 + $0x1c8] sm:$0xff]
    %v169 = vld [vmem:[#allocation2 + $0x1d0] sm:$0xff]
    %v170 = vld [vmem:[#allocation2 + $0x1d8] sm:$0xff]
    %v171 = vld [vmem:[#allocation2 + $0x1e0] sm:$0xff]
    %v172 = vld [vmem:[#allocation2 + $0x1e8] sm:$0xff]
    %v173 = vld [vmem:[#allocation2 + $0x1f0] sm:$0xff]
    %v174 = vld [vmem:[#allocation2 + $0x1f8] sm:$0xff]
    %v175 = vld [vmem:[#allocation2 + $0x200] sm:$0xff]
    %v176 = vld [vmem:[#allocation2 + $0x208] sm:$0xff]
    %v177 = vld [vmem:[#allocation2 + $0x210] sm:$0xff]
    %v178 = vld [vmem:[#allocation2 + $0x218] sm:$0xff]
    %v179 = vld [vmem:[#allocation2 + $0x220] sm:$0xff]
    %v180 = vld [vmem:[#allocation2 + $0x228] sm:$0xff]
    %v181 = vld [vmem:[#allocation2 + $0x230] sm:$0xff]
    %v182 = vld [vmem:[#allocation2 + $0x238] sm:$0xff]
    %v183 = vld [vmem:[#allocation2 + $0x240] sm:$0xff]
    %v184 = vld [vmem:[#allocation2 + $0x248] sm:$0xff]
    %v185 = vld [vmem:[#allocation2 + $0x250] sm:$0xff]
    %v186 = vld [vmem:[#allocation2 + $0x258] sm:$0xff]
    %v187 = vld [vmem:[#allocation2 + $0x260] sm:$0xff]
    %v188 = vld [vmem:[#allocation2 + $0x268] sm:$0xff]
    %v189 = vld [vmem:[#allocation2 + $0x270] sm:$0xff]
    %v190 = vld [vmem:[#allocation2 + $0x278] sm:$0xff]
    %v191 = vld [vmem:[#allocation2 + $0x280] sm:$0xff]
    %v192 = vld [vmem:[#allocation2 + $0x288] sm:$0xff]
    %v193 = vld [vmem:[#allocation2 + $0x290] sm:$0xff]
    %v194 = vld [vmem:[#allocation2 + $0x298] sm:$0xff]
    %v195 = vld [vmem:[#allocation2 + $0x2a0] sm:$0xff]
    %v196 = vld [vmem:[#allocation2 + $0x2a8] sm:$0xff]
    %v197 = vld [vmem:[#allocation2 + $0x2b0] sm:$0xff]
    %v198 = vld [vmem:[#allocation2 + $0x2b8] sm:$0xff]
    %v199 = vld [vmem:[#allocation2 + $0x2c0] sm:$0xff]
    %v200 = vld [vmem:[#allocation2 + $0x2c8] sm:$0xff]
    %v201 = vld [vmem:[#allocation2 + $0x2d0] sm:$0xff]
    %v202 = vld [vmem:[#allocation2 + $0x2d8] sm:$0xff]
    %v203 = vld [vmem:[#allocation2 + $0x2e0] sm:$0xff]
    %v204 = vld [vmem:[#allocation2 + $0x2e8] sm:$0xff]
    %v205 = vld [vmem:[#allocation2 + $0x2f0] sm:$0xff]
    %v206 = vld [vmem:[#allocation2 + $0x2f8] sm:$0xff]
    %v207 = vld [vmem:[#allocation2 + $0x300] sm:$0xff]
    %v208 = vld [vmem:[#allocation2 + $0x308] sm:$0xff]
    %v209 = vld [vmem:[#allocation2 + $0x310] sm:$0xff]
    %v210 = vld [vmem:[#allocation2 + $0x318] sm:$0xff]
    %v211 = vld [vmem:[#allocation2 + $0x320] sm:$0xff]
    %v212 = vld [vmem:[#allocation2 + $0x328] sm:$0xff]
    %v213 = vld [vmem:[#allocation2 + $0x330] sm:$0xff]
    %v214 = vld [vmem:[#allocation2 + $0x338] sm:$0xff]
    %v215 = vld [vmem:[#allocation2 + $0x340] sm:$0xff]
    %v216 = vld [vmem:[#allocation2 + $0x348] sm:$0xff]
    %v217 = vld [vmem:[#allocation2 + $0x350] sm:$0xff]
    %v218 = vld [vmem:[#allocation2 + $0x358] sm:$0xff]
    %v219 = vld [vmem:[#allocation2 + $0x360] sm:$0xff]
    %v220 = vld [vmem:[#allocation2 + $0x368] sm:$0xff]
    %v221 = vld [vmem:[#allocation2 + $0x370] sm:$0xff]
    %v222 = vld [vmem:[#allocation2 + $0x378] sm:$0xff]
    %v223 = vld [vmem:[#allocation2 + $0x380] sm:$0xff]
    %v224 = vld [vmem:[#allocation2 + $0x388] sm:$0xff]
    %v225 = vld [vmem:[#allocation2 + $0x390] sm:$0xff]
    %v226 = vld [vmem:[#allocation2 + $0x398] sm:$0xff]
    %v227 = vld [vmem:[#allocation2 + $0x3a0] sm:$0xff]
    %v228 = vld [vmem:[#allocation2 + $0x3a8] sm:$0xff]
    %v229 = vld [vmem:[#allocation2 + $0x3b0] sm:$0xff]
    %v230 = vld [vmem:[#allocation2 + $0x3b8] sm:$0xff]
    %v231 = vld [vmem:[#allocation2 + $0x3c0] sm:$0xff]
    %v232 = vld [vmem:[#allocation2 + $0x3c8] sm:$0xff]
    %v233 = vld [vmem:[#allocation2 + $0x3d0] sm:$0xff]
    %v234 = vld [vmem:[#allocation2 + $0x3d8] sm:$0xff]
    %v235 = vld [vmem:[#allocation2 + $0x3e0] sm:$0xff]
    %v236 = vld [vmem:[#allocation2 + $0x3e8] sm:$0xff]
    %v237 = vld [vmem:[#allocation2 + $0x3f0] sm:$0xff]
    %v238 = vld [vmem:[#allocation2 + $0x3f8] sm:$0xff]
    %v239 = vld [vmem:[#allocation2 + $0x400] sm:$0xff]
    %v240 = vld [vmem:[#allocation2 + $0x408] sm:$0xff]
    %v241 = vld [vmem:[#allocation2 + $0x410] sm:$0xff]
    %v242 = vld [vmem:[#allocation2 + $0x418] sm:$0xff]
    %v243 = vld [vmem:[#allocation2 + $0x420] sm:$0xff]
    %v244 = vld [vmem:[#allocation2 + $0x428] sm:$0xff]
    %v245 = vld [vmem:[#allocation2 + $0x430] sm:$0xff]
    %v246 = vld [vmem:[#allocation2 + $0x438] sm:$0xff]
    %v247 = vld [vmem:[#allocation2 + $0x440] sm:$0xff]
    %v248 = vld [vmem:[#allocation2 + $0x448] sm:$0xff]
    %v249 = vld [vmem:[#allocation2 + $0x450] sm:$0xff]
    %v250 = vld [vmem:[#allocation2 + $0x458] sm:$0xff]
    %v251 = vld [vmem:[#allocation2 + $0x460] sm:$0xff]
    %v252 = vld [vmem:[#allocation2 + $0x468] sm:$0xff]
    %v253 = vld [vmem:[#allocation2 + $0x470] sm:$0xff]
    %v254 = vld [vmem:[#allocation2 + $0x478] sm:$0xff]
    %v255 = vld [vmem:[#allocation2 + $0x480] sm:$0xff]
    %v256 = vld [vmem:[#allocation2 + $0x488] sm:$0xff]
    %v257 = vld [vmem:[#allocation2 + $0x490] sm:$0xff]
    %v258 = vld [vmem:[#allocation2 + $0x498] sm:$0xff]
    %v259 = vld [vmem:[#allocation2 + $0x4a0] sm:$0xff]
    %v260 = vld [vmem:[#allocation2 + $0x4a8] sm:$0xff]
    %v261 = vld [vmem:[#allocation2 + $0x4b0] sm:$0xff]
    %v262 = vld [vmem:[#allocation2 + $0x4b8] sm:$0xff]
    %v263 = vld [vmem:[#allocation2 + $0x4c0] sm:$0xff]
    %v264 = vld [vmem:[#allocation2 + $0x4c8] sm:$0xff]
    %v265 = vld [vmem:[#allocation2 + $0x4d0] sm:$0xff]
    %v266 = vld [vmem:[#allocation2 + $0x4d8] sm:$0xff]
    %v267 = vld [vmem:[#allocation2 + $0x4e0] sm:$0xff]
    %v268 = vld [vmem:[#allocation2 + $0x4e8] sm:$0xff]
    %v269 = vld [vmem:[#allocation2 + $0x4f0] sm:$0xff]
    %v270 = vld [vmem:[#allocation2 + $0x4f8] sm:$0xff]
    %v271 = vld [vmem:[#allocation2 + $0x500] sm:$0xff]
    %v272 = vld [vmem:[#allocation2 + $0x508] sm:$0xff]
    %v273 = vld [vmem:[#allocation2 + $0x510] sm:$0xff]
    %v274 = vld [vmem:[#allocation2 + $0x518] sm:$0xff]
    %v275 = vld [vmem:[#allocation2 + $0x520] sm:$0xff]
    %v276 = vld [vmem:[#allocation2 + $0x528] sm:$0xff]
    %v277 = vld [vmem:[#allocation2 + $0x530] sm:$0xff]
    %v278 = vld [vmem:[#allocation2 + $0x538] sm:$0xff]
    %v279 = vld [vmem:[#allocation2 + $0x540] sm:$0xff]
    %v280 = vld [vmem:[#allocation2 + $0x548] sm:$0xff]
    %v281 = vld [vmem:[#allocation2 + $0x550] sm:$0xff]
    %v282 = vld [vmem:[#allocation2 + $0x558] sm:$0xff]
    %v283 = vld [vmem:[#allocation2 + $0x560] sm:$0xff]
    %v284 = vld [vmem:[#allocation2 + $0x568] sm:$0xff]
    %v285 = vld [vmem:[#allocation2 + $0x570] sm:$0xff]
    %v286 = vld [vmem:[#allocation2 + $0x578] sm:$0xff]
    %v287 = vld [vmem:[#allocation2 + $0x580] sm:$0xff]
    %v288 = vld [vmem:[#allocation2 + $0x588] sm:$0xff]
    %v289 = vld [vmem:[#allocation2 + $0x590] sm:$0xff]
    %v290 = vld [vmem:[#allocation2 + $0x598] sm:$0xff]
    %v291 = vld [vmem:[#allocation2 + $0x5a0] sm:$0xff]
    %v292 = vld [vmem:[#allocation2 + $0x5a8] sm:$0xff]
    %v293 = vld [vmem:[#allocation2 + $0x5b0] sm:$0xff]
    %v294 = vld [vmem:[#allocation2 + $0x5b8] sm:$0xff]
    %v295 = vld [vmem:[#allocation2 + $0x5c0] sm:$0xff]
    %v296 = vld [vmem:[#allocation2 + $0x5c8] sm:$0xff]
    %v297 = vld [vmem:[#allocation2 + $0x5d0] sm:$0xff]
    %v298 = vld [vmem:[#allocation2 + $0x5d8] sm:$0xff]
    %v299 = vld [vmem:[#allocation2 + $0x5e0] sm:$0xff]
    %v300 = vld [vmem:[#allocation2 + $0x5e8] sm:$0xff]
    %v301 = vld [vmem:[#allocation2 + $0x5f0] sm:$0xff]
    %v302 = vld [vmem:[#allocation2 + $0x5f8] sm:$0xff]
    %v303 = vld [vmem:[#allocation2 + $0x600] sm:$0xff]
    %v304 = vld [vmem:[#allocation2 + $0x608] sm:$0xff]
    %v305 = vld [vmem:[#allocation2 + $0x610] sm:$0xff]
    %v306 = vld [vmem:[#allocation2 + $0x618] sm:$0xff]
    %v307 = vld [vmem:[#allocation2 + $0x620] sm:$0xff]
    %v308 = vld [vmem:[#allocation2 + $0x628] sm:$0xff]
    %v309 = vld [vmem:[#allocation2 + $0x630] sm:$0xff]
    %v310 = vld [vmem:[#allocation2 + $0x638] sm:$0xff]
    %v311 = vld [vmem:[#allocation2 + $0x640] sm:$0xff]
    %v312 = vld [vmem:[#allocation2 + $0x648] sm:$0xff]
    %v313 = vld [vmem:[#allocation2 + $0x650] sm:$0xff]
    %v314 = vld [vmem:[#allocation2 + $0x658] sm:$0xff]
    %v315 = vld [vmem:[#allocation2 + $0x660] sm:$0xff]
    %v316 = vld [vmem:[#allocation2 + $0x668] sm:$0xff]
    %v317 = vld [vmem:[#allocation2 + $0x670] sm:$0xff]
    %v318 = vld [vmem:[#allocation2 + $0x678] sm:$0xff]
    %v319 = vld [vmem:[#allocation2 + $0x680] sm:$0xff]
    %v320 = vld [vmem:[#allocation2 + $0x688] sm:$0xff]
    %v321 = vld [vmem:[#allocation2 + $0x690] sm:$0xff]
    %v322 = vld [vmem:[#allocation2 + $0x698] sm:$0xff]
    %v323 = vld [vmem:[#allocation2 + $0x6a0] sm:$0xff]
    %v324 = vld [vmem:[#allocation2 + $0x6a8] sm:$0xff]
    %v325 = vld [vmem:[#allocation2 + $0x6b0] sm:$0xff]
    %v326 = vld [vmem:[#allocation2 + $0x6b8] sm:$0xff]
    %v327 = vld [vmem:[#allocation2 + $0x6c0] sm:$0xff]
    %v328 = vld [vmem:[#allocation2 + $0x6c8] sm:$0xff]
    %v329 = vld [vmem:[#allocation2 + $0x6d0] sm:$0xff]
    %v330 = vld [vmem:[#allocation2 + $0x6d8] sm:$0xff]
    %v331 = vld [vmem:[#allocation2 + $0x6e0] sm:$0xff]
    %v332 = vld [vmem:[#allocation2 + $0x6e8] sm:$0xff]
    %v333 = vld [vmem:[#allocation2 + $0x6f0] sm:$0xff]
    %v334 = vld [vmem:[#allocation2 + $0x6f8] sm:$0xff]
    %v335 = vld [vmem:[#allocation2 + $0x700] sm:$0xff]
    %v336 = vld [vmem:[#allocation2 + $0x708] sm:$0xff]
    %v337 = vld [vmem:[#allocation2 + $0x710] sm:$0xff]
    %v338 = vld [vmem:[#allocation2 + $0x718] sm:$0xff]
    %v339 = vld [vmem:[#allocation2 + $0x720] sm:$0xff]
    %v340 = vld [vmem:[#allocation2 + $0x728] sm:$0xff]
    %v341 = vld [vmem:[#allocation2 + $0x730] sm:$0xff]
    %v342 = vld [vmem:[#allocation2 + $0x738] sm:$0xff]
    %v343 = vld [vmem:[#allocation2 + $0x740] sm:$0xff]
    %v344 = vld [vmem:[#allocation2 + $0x748] sm:$0xff]
    %v345 = vld [vmem:[#allocation2 + $0x750] sm:$0xff]
    %v346 = vld [vmem:[#allocation2 + $0x758] sm:$0xff]
    %v347 = vld [vmem:[#allocation2 + $0x760] sm:$0xff]
    %v348 = vld [vmem:[#allocation2 + $0x768] sm:$0xff]
    %v349 = vld [vmem:[#allocation2 + $0x770] sm:$0xff]
    %v350 = vld [vmem:[#allocation2 + $0x778] sm:$0xff]
    %v351 = vld [vmem:[#allocation2 + $0x780] sm:$0xff]
    %v352 = vld [vmem:[#allocation2 + $0x788] sm:$0xff]
    %v353 = vld [vmem:[#allocation2 + $0x790] sm:$0xff]
    %v354 = vld [vmem:[#allocation2 + $0x798] sm:$0xff]
    %v355 = vld [vmem:[#allocation2 + $0x7a0] sm:$0xff]
    %v356 = vld [vmem:[#allocation2 + $0x7a8] sm:$0xff]
    %v357 = vld [vmem:[#allocation2 + $0x7b0] sm:$0xff]
    %v358 = vld [vmem:[#allocation2 + $0x7b8] sm:$0xff]
    %v359 = vld [vmem:[#allocation2 + $0x7c0] sm:$0xff]
    %v360 = vld [vmem:[#allocation2 + $0x7c8] sm:$0xff]
    %v361 = vld [vmem:[#allocation2 + $0x7d0] sm:$0xff]
    %v362 = vld [vmem:[#allocation2 + $0x7d8] sm:$0xff]
    %v363 = vld [vmem:[#allocation2 + $0x7e0] sm:$0xff]
    %v364 = vld [vmem:[#allocation2 + $0x7e8] sm:$0xff]
    %v365 = vld [vmem:[#allocation2 + $0x7f0] sm:$0xff]
    %v366 = vld [vmem:[#allocation2 + $0x7f8] sm:$0xff]
    %v367 = vld [vmem:[%s2] sm:$0xf]
    %v369 = vperm.slane %v367, 0
    %v370 = vperm.slane %v367, 1
    %v371 = vperm.slane %v367, 2
    %v372 = vperm.slane %v367, 3
    %v633 = vunpack.c.l.b16 %v111
    %v634 = vunpack.c.h.b16 %v111
    %v635 = vunpack.c.l.b16 %v112
    %v636 = vunpack.c.h.b16 %v112
    %v637 = vunpack.c.l.b16 %v113
    %v638 = vunpack.c.h.b16 %v113
    %v639 = vunpack.c.l.b16 %v114
    %v640 = vunpack.c.h.b16 %v114
    %v641 = vunpack.c.l.b16 %v115
    %v642 = vunpack.c.h.b16 %v115
    %v643 = vunpack.c.l.b16 %v116
    %v644 = vunpack.c.h.b16 %v116
    %v645 = vunpack.c.l.b16 %v117
    %v646 = vunpack.c.h.b16 %v117
    %v647 = vunpack.c.l.b16 %v118
    %v648 = vunpack.c.h.b16 %v118
    %v649 = vunpack.c.l.b16 %v119
    %v650 = vunpack.c.h.b16 %v119
    %v651 = vunpack.c.l.b16 %v120
    %v652 = vunpack.c.h.b16 %v120
    %v653 = vunpack.c.l.b16 %v121
    %v654 = vunpack.c.h.b16 %v121
    %v655 = vunpack.c.l.b16 %v122
    %v656 = vunpack.c.h.b16 %v122
    %v657 = vunpack.c.l.b16 %v123
    %v658 = vunpack.c.h.b16 %v123
    %v659 = vunpack.c.l.b16 %v124
    %v660 = vunpack.c.h.b16 %v124
    %v661 = vunpack.c.l.b16 %v125
    %v662 = vunpack.c.h.b16 %v125
    %v663 = vunpack.c.l.b16 %v126
    %v664 = vunpack.c.h.b16 %v126
    %v665 = vunpack.c.l.b16 %v127
    %v666 = vunpack.c.h.b16 %v127
    %v667 = vunpack.c.l.b16 %v128
    %v668 = vunpack.c.h.b16 %v128
    %v669 = vunpack.c.l.b16 %v129
    %v670 = vunpack.c.h.b16 %v129
    %v671 = vunpack.c.l.b16 %v130
    %v672 = vunpack.c.h.b16 %v130
    %v673 = vunpack.c.l.b16 %v131
    %v674 = vunpack.c.h.b16 %v131
    %v675 = vunpack.c.l.b16 %v132
    %v676 = vunpack.c.h.b16 %v132
    %v677 = vunpack.c.l.b16 %v133
    %v678 = vunpack.c.h.b16 %v133
    %v679 = vunpack.c.l.b16 %v134
    %v680 = vunpack.c.h.b16 %v134
    %v681 = vunpack.c.l.b16 %v135
    %v682 = vunpack.c.h.b16 %v135
    %v683 = vunpack.c.l.b16 %v136
    %v684 = vunpack.c.h.b16 %v136
    %v685 = vunpack.c.l.b16 %v137
    %v686 = vunpack.c.h.b16 %v137
    %v687 = vunpack.c.l.b16 %v138
    %v688 = vunpack.c.h.b16 %v138
    %v689 = vunpack.c.l.b16 %v139
    %v690 = vunpack.c.h.b16 %v139
    %v691 = vunpack.c.l.b16 %v140
    %v692 = vunpack.c.h.b16 %v140
    %v693 = vunpack.c.l.b16 %v141
    %v694 = vunpack.c.h.b16 %v141
    %v695 = vunpack.c.l.b16 %v142
    %v696 = vunpack.c.h.b16 %v142
    %v697 = vunpack.c.l.b16 %v143
    %v698 = vunpack.c.h.b16 %v143
    %v699 = vunpack.c.l.b16 %v144
    %v700 = vunpack.c.h.b16 %v144
    %v701 = vunpack.c.l.b16 %v145
    %v702 = vunpack.c.h.b16 %v145
    %v703 = vunpack.c.l.b16 %v146
    %v704 = vunpack.c.h.b16 %v146
    %v705 = vunpack.c.l.b16 %v147
    %v706 = vunpack.c.h.b16 %v147
    %v707 = vunpack.c.l.b16 %v148
    %v708 = vunpack.c.h.b16 %v148
    %v709 = vunpack.c.l.b16 %v149
    %v710 = vunpack.c.h.b16 %v149
    %v711 = vunpack.c.l.b16 %v150
    %v712 = vunpack.c.h.b16 %v150
    %v713 = vunpack.c.l.b16 %v151
    %v714 = vunpack.c.h.b16 %v151
    %v715 = vunpack.c.l.b16 %v152
    %v716 = vunpack.c.h.b16 %v152
    %v717 = vunpack.c.l.b16 %v153
    %v718 = vunpack.c.h.b16 %v153
    %v719 = vunpack.c.l.b16 %v154
    %v720 = vunpack.c.h.b16 %v154
    %v721 = vunpack.c.l.b16 %v155
    %v722 = vunpack.c.h.b16 %v155
    %v723 = vunpack.c.l.b16 %v156
    %v724 = vunpack.c.h.b16 %v156
    %v725 = vunpack.c.l.b16 %v157
    %v726 = vunpack.c.h.b16 %v157
    %v727 = vunpack.c.l.b16 %v158
    %v728 = vunpack.c.h.b16 %v158
    %v729 = vunpack.c.l.b16 %v159
    %v730 = vunpack.c.h.b16 %v159
    %v731 = vunpack.c.l.b16 %v160
    %v732 = vunpack.c.h.b16 %v160
    %v733 = vunpack.c.l.b16 %v161
    %v734 = vunpack.c.h.b16 %v161
    %v735 = vunpack.c.l.b16 %v162
    %v736 = vunpack.c.h.b16 %v162
    %v737 = vunpack.c.l.b16 %v163
    %v738 = vunpack.c.h.b16 %v163
    %v739 = vunpack.c.l.b16 %v164
    %v740 = vunpack.c.h.b16 %v164
    %v741 = vunpack.c.l.b16 %v165
    %v742 = vunpack.c.h.b16 %v165
    %v743 = vunpack.c.l.b16 %v166
    %v744 = vunpack.c.h.b16 %v166
    %v745 = vunpack.c.l.b16 %v167
    %v746 = vunpack.c.h.b16 %v167
    %v747 = vunpack.c.l.b16 %v168
    %v748 = vunpack.c.h.b16 %v168
    %v749 = vunpack.c.l.b16 %v169
    %v750 = vunpack.c.h.b16 %v169
    %v751 = vunpack.c.l.b16 %v170
    %v752 = vunpack.c.h.b16 %v170
    %v753 = vunpack.c.l.b16 %v171
    %v754 = vunpack.c.h.b16 %v171
    %v755 = vunpack.c.l.b16 %v172
    %v756 = vunpack.c.h.b16 %v172
    %v757 = vunpack.c.l.b16 %v173
    %v758 = vunpack.c.h.b16 %v173
    %v759 = vunpack.c.l.b16 %v174
    %v760 = vunpack.c.h.b16 %v174
    %v761 = vunpack.c.l.b16 %v175
    %v762 = vunpack.c.h.b16 %v175
    %v763 = vunpack.c.l.b16 %v176
    %v764 = vunpack.c.h.b16 %v176
    %v765 = vunpack.c.l.b16 %v177
    %v766 = vunpack.c.h.b16 %v177
    %v767 = vunpack.c.l.b16 %v178
    %v768 = vunpack.c.h.b16 %v178
    %v769 = vunpack.c.l.b16 %v179
    %v770 = vunpack.c.h.b16 %v179
    %v771 = vunpack.c.l.b16 %v180
    %v772 = vunpack.c.h.b16 %v180
    %v773 = vunpack.c.l.b16 %v181
    %v774 = vunpack.c.h.b16 %v181
    %v775 = vunpack.c.l.b16 %v182
    %v776 = vunpack.c.h.b16 %v182
    %v777 = vunpack.c.l.b16 %v183
    %v778 = vunpack.c.h.b16 %v183
    %v779 = vunpack.c.l.b16 %v184
    %v780 = vunpack.c.h.b16 %v184
    %v781 = vunpack.c.l.b16 %v185
    %v782 = vunpack.c.h.b16 %v185
    %v783 = vunpack.c.l.b16 %v186
    %v784 = vunpack.c.h.b16 %v186
    %v785 = vunpack.c.l.b16 %v187
    %v786 = vunpack.c.h.b16 %v187
    %v787 = vunpack.c.l.b16 %v188
    %v788 = vunpack.c.h.b16 %v188
    %v789 = vunpack.c.l.b16 %v189
    %v790 = vunpack.c.h.b16 %v189
    %v791 = vunpack.c.l.b16 %v190
    %v792 = vunpack.c.h.b16 %v190
    %v793 = vunpack.c.l.b16 %v191
    %v794 = vunpack.c.h.b16 %v191
    %v795 = vunpack.c.l.b16 %v192
    %v796 = vunpack.c.h.b16 %v192
    %v797 = vunpack.c.l.b16 %v193
    %v798 = vunpack.c.h.b16 %v193
    %v799 = vunpack.c.l.b16 %v194
    %v800 = vunpack.c.h.b16 %v194
    %v801 = vunpack.c.l.b16 %v195
    %v802 = vunpack.c.h.b16 %v195
    %v803 = vunpack.c.l.b16 %v196
    %v804 = vunpack.c.h.b16 %v196
    %v805 = vunpack.c.l.b16 %v197
    %v806 = vunpack.c.h.b16 %v197
    %v807 = vunpack.c.l.b16 %v198
    %v808 = vunpack.c.h.b16 %v198
    %v809 = vunpack.c.l.b16 %v199
    %v810 = vunpack.c.h.b16 %v199
    %v811 = vunpack.c.l.b16 %v200
    %v812 = vunpack.c.h.b16 %v200
    %v813 = vunpack.c.l.b16 %v201
    %v814 = vunpack.c.h.b16 %v201
    %v815 = vunpack.c.l.b16 %v202
    %v816 = vunpack.c.h.b16 %v202
    %v817 = vunpack.c.l.b16 %v203
    %v818 = vunpack.c.h.b16 %v203
    %v819 = vunpack.c.l.b16 %v204
    %v820 = vunpack.c.h.b16 %v204
    %v821 = vunpack.c.l.b16 %v205
    %v822 = vunpack.c.h.b16 %v205
    %v823 = vunpack.c.l.b16 %v206
    %v824 = vunpack.c.h.b16 %v206
    %v825 = vunpack.c.l.b16 %v207
    %v826 = vunpack.c.h.b16 %v207
    %v827 = vunpack.c.l.b16 %v208
    %v828 = vunpack.c.h.b16 %v208
    %v829 = vunpack.c.l.b16 %v209
    %v830 = vunpack.c.h.b16 %v209
    %v831 = vunpack.c.l.b16 %v210
    %v832 = vunpack.c.h.b16 %v210
    %v833 = vunpack.c.l.b16 %v211
    %v834 = vunpack.c.h.b16 %v211
    %v835 = vunpack.c.l.b16 %v212
    %v836 = vunpack.c.h.b16 %v212
    %v837 = vunpack.c.l.b16 %v213
    %v838 = vunpack.c.h.b16 %v213
    %v839 = vunpack.c.l.b16 %v214
    %v840 = vunpack.c.h.b16 %v214
    %v841 = vunpack.c.l.b16 %v215
    %v842 = vunpack.c.h.b16 %v215
    %v843 = vunpack.c.l.b16 %v216
    %v844 = vunpack.c.h.b16 %v216
    %v845 = vunpack.c.l.b16 %v217
    %v846 = vunpack.c.h.b16 %v217
    %v847 = vunpack.c.l.b16 %v218
    %v848 = vunpack.c.h.b16 %v218
    %v849 = vunpack.c.l.b16 %v219
    %v850 = vunpack.c.h.b16 %v219
    %v851 = vunpack.c.l.b16 %v220
    %v852 = vunpack.c.h.b16 %v220
    %v853 = vunpack.c.l.b16 %v221
    %v854 = vunpack.c.h.b16 %v221
    %v855 = vunpack.c.l.b16 %v222
    %v856 = vunpack.c.h.b16 %v222
    %v857 = vunpack.c.l.b16 %v223
    %v858 = vunpack.c.h.b16 %v223
    %v859 = vunpack.c.l.b16 %v224
    %v860 = vunpack.c.h.b16 %v224
    %v861 = vunpack.c.l.b16 %v225
    %v862 = vunpack.c.h.b16 %v225
    %v863 = vunpack.c.l.b16 %v226
    %v864 = vunpack.c.h.b16 %v226
    %v865 = vunpack.c.l.b16 %v227
    %v866 = vunpack.c.h.b16 %v227
    %v867 = vunpack.c.l.b16 %v228
    %v868 = vunpack.c.h.b16 %v228
    %v869 = vunpack.c.l.b16 %v229
    %v870 = vunpack.c.h.b16 %v229
    %v871 = vunpack.c.l.b16 %v230
    %v872 = vunpack.c.h.b16 %v230
    %v873 = vunpack.c.l.b16 %v231
    %v874 = vunpack.c.h.b16 %v231
    %v875 = vunpack.c.l.b16 %v232
    %v876 = vunpack.c.h.b16 %v232
    %v877 = vunpack.c.l.b16 %v233
    %v878 = vunpack.c.h.b16 %v233
    %v879 = vunpack.c.l.b16 %v234
    %v880 = vunpack.c.h.b16 %v234
    %v881 = vunpack.c.l.b16 %v235
    %v882 = vunpack.c.h.b16 %v235
    %v883 = vunpack.c.l.b16 %v236
    %v884 = vunpack.c.h.b16 %v236
    %v885 = vunpack.c.l.b16 %v237
    %v886 = vunpack.c.h.b16 %v237
    %v887 = vunpack.c.l.b16 %v238
    %v888 = vunpack.c.h.b16 %v238
    %v889 = vunpack.c.l.b16 %v239
    %v890 = vunpack.c.h.b16 %v239
    %v891 = vunpack.c.l.b16 %v240
    %v892 = vunpack.c.h.b16 %v240
    %v893 = vunpack.c.l.b16 %v241
    %v894 = vunpack.c.h.b16 %v241
    %v895 = vunpack.c.l.b16 %v242
    %v896 = vunpack.c.h.b16 %v242
    %v897 = vunpack.c.l.b16 %v243
    %v898 = vunpack.c.h.b16 %v243
    %v899 = vunpack.c.l.b16 %v244
    %v900 = vunpack.c.h.b16 %v244
    %v901 = vunpack.c.l.b16 %v245
    %v902 = vunpack.c.h.b16 %v245
    %v903 = vunpack.c.l.b16 %v246
    %v904 = vunpack.c.h.b16 %v246
    %v905 = vunpack.c.l.b16 %v247
    %v906 = vunpack.c.h.b16 %v247
    %v907 = vunpack.c.l.b16 %v248
    %v908 = vunpack.c.h.b16 %v248
    %v909 = vunpack.c.l.b16 %v249
    %v910 = vunpack.c.h.b16 %v249
    %v911 = vunpack.c.l.b16 %v250
    %v912 = vunpack.c.h.b16 %v250
    %v913 = vunpack.c.l.b16 %v251
    %v914 = vunpack.c.h.b16 %v251
    %v915 = vunpack.c.l.b16 %v252
    %v916 = vunpack.c.h.b16 %v252
    %v917 = vunpack.c.l.b16 %v253
    %v918 = vunpack.c.h.b16 %v253
    %v919 = vunpack.c.l.b16 %v254
    %v920 = vunpack.c.h.b16 %v254
    %v921 = vunpack.c.l.b16 %v255
    %v922 = vunpack.c.h.b16 %v255
    %v923 = vunpack.c.l.b16 %v256
    %v924 = vunpack.c.h.b16 %v256
    %v925 = vunpack.c.l.b16 %v257
    %v926 = vunpack.c.h.b16 %v257
    %v927 = vunpack.c.l.b16 %v258
    %v928 = vunpack.c.h.b16 %v258
    %v929 = vunpack.c.l.b16 %v259
    %v930 = vunpack.c.h.b16 %v259
    %v931 = vunpack.c.l.b16 %v260
    %v932 = vunpack.c.h.b16 %v260
    %v933 = vunpack.c.l.b16 %v261
    %v934 = vunpack.c.h.b16 %v261
    %v935 = vunpack.c.l.b16 %v262
    %v936 = vunpack.c.h.b16 %v262
    %v937 = vunpack.c.l.b16 %v263
    %v938 = vunpack.c.h.b16 %v263
    %v939 = vunpack.c.l.b16 %v264
    %v940 = vunpack.c.h.b16 %v264
    %v941 = vunpack.c.l.b16 %v265
    %v942 = vunpack.c.h.b16 %v265
    %v943 = vunpack.c.l.b16 %v266
    %v944 = vunpack.c.h.b16 %v266
    %v945 = vunpack.c.l.b16 %v267
    %v946 = vunpack.c.h.b16 %v267
    %v947 = vunpack.c.l.b16 %v268
    %v948 = vunpack.c.h.b16 %v268
    %v949 = vunpack.c.l.b16 %v269
    %v950 = vunpack.c.h.b16 %v269
    %v951 = vunpack.c.l.b16 %v270
    %v952 = vunpack.c.h.b16 %v270
    %v953 = vunpack.c.l.b16 %v271
    %v954 = vunpack.c.h.b16 %v271
    %v955 = vunpack.c.l.b16 %v272
    %v956 = vunpack.c.h.b16 %v272
    %v957 = vunpack.c.l.b16 %v273
    %v958 = vunpack.c.h.b16 %v273
    %v959 = vunpack.c.l.b16 %v274
    %v960 = vunpack.c.h.b16 %v274
    %v961 = vunpack.c.l.b16 %v275
    %v962 = vunpack.c.h.b16 %v275
    %v963 = vunpack.c.l.b16 %v276
    %v964 = vunpack.c.h.b16 %v276
    %v965 = vunpack.c.l.b16 %v277
    %v966 = vunpack.c.h.b16 %v277
    %v967 = vunpack.c.l.b16 %v278
    %v968 = vunpack.c.h.b16 %v278
    %v969 = vunpack.c.l.b16 %v279
    %v970 = vunpack.c.h.b16 %v279
    %v971 = vunpack.c.l.b16 %v280
    %v972 = vunpack.c.h.b16 %v280
    %v973 = vunpack.c.l.b16 %v281
    %v974 = vunpack.c.h.b16 %v281
    %v975 = vunpack.c.l.b16 %v282
    %v976 = vunpack.c.h.b16 %v282
    %v977 = vunpack.c.l.b16 %v283
    %v978 = vunpack.c.h.b16 %v283
    %v979 = vunpack.c.l.b16 %v284
    %v980 = vunpack.c.h.b16 %v284
    %v981 = vunpack.c.l.b16 %v285
    %v982 = vunpack.c.h.b16 %v285
    %v983 = vunpack.c.l.b16 %v286
    %v984 = vunpack.c.h.b16 %v286
    %v985 = vunpack.c.l.b16 %v287
    %v986 = vunpack.c.h.b16 %v287
    %v987 = vunpack.c.l.b16 %v288
    %v988 = vunpack.c.h.b16 %v288
    %v989 = vunpack.c.l.b16 %v289
    %v990 = vunpack.c.h.b16 %v289
    %v991 = vunpack.c.l.b16 %v290
    %v992 = vunpack.c.h.b16 %v290
    %v993 = vunpack.c.l.b16 %v291
    %v994 = vunpack.c.h.b16 %v291
    %v995 = vunpack.c.l.b16 %v292
    %v996 = vunpack.c.h.b16 %v292
    %v997 = vunpack.c.l.b16 %v293
    %v998 = vunpack.c.h.b16 %v293
    %v999 = vunpack.c.l.b16 %v294
    %v1000 = vunpack.c.h.b16 %v294
    %v1001 = vunpack.c.l.b16 %v295
    %v1002 = vunpack.c.h.b16 %v295
    %v1003 = vunpack.c.l.b16 %v296
    %v1004 = vunpack.c.h.b16 %v296
    %v1005 = vunpack.c.l.b16 %v297
    %v1006 = vunpack.c.h.b16 %v297
    %v1007 = vunpack.c.l.b16 %v298
    %v1008 = vunpack.c.h.b16 %v298
    %v1009 = vunpack.c.l.b16 %v299
    %v1010 = vunpack.c.h.b16 %v299
    %v1011 = vunpack.c.l.b16 %v300
    %v1012 = vunpack.c.h.b16 %v300
    %v1013 = vunpack.c.l.b16 %v301
    %v1014 = vunpack.c.h.b16 %v301
    %v1015 = vunpack.c.l.b16 %v302
    %v1016 = vunpack.c.h.b16 %v302
    %v1017 = vunpack.c.l.b16 %v303
    %v1018 = vunpack.c.h.b16 %v303
    %v1019 = vunpack.c.l.b16 %v304
    %v1020 = vunpack.c.h.b16 %v304
    %v1021 = vunpack.c.l.b16 %v305
    %v1022 = vunpack.c.h.b16 %v305
    %v1023 = vunpack.c.l.b16 %v306
    %v1024 = vunpack.c.h.b16 %v306
    %v1025 = vunpack.c.l.b16 %v307
    %v1026 = vunpack.c.h.b16 %v307
    %v1027 = vunpack.c.l.b16 %v308
    %v1028 = vunpack.c.h.b16 %v308
    %v1029 = vunpack.c.l.b16 %v309
    %v1030 = vunpack.c.h.b16 %v309
    %v1031 = vunpack.c.l.b16 %v310
    %v1032 = vunpack.c.h.b16 %v310
    %v1033 = vunpack.c.l.b16 %v311
    %v1034 = vunpack.c.h.b16 %v311
    %v1035 = vunpack.c.l.b16 %v312
    %v1036 = vunpack.c.h.b16 %v312
    %v1037 = vunpack.c.l.b16 %v313
    %v1038 = vunpack.c.h.b16 %v313
    %v1039 = vunpack.c.l.b16 %v314
    %v1040 = vunpack.c.h.b16 %v314
    %v1041 = vunpack.c.l.b16 %v315
    %v1042 = vunpack.c.h.b16 %v315
    %v1043 = vunpack.c.l.b16 %v316
    %v1044 = vunpack.c.h.b16 %v316
    %v1045 = vunpack.c.l.b16 %v317
    %v1046 = vunpack.c.h.b16 %v317
    %v1047 = vunpack.c.l.b16 %v318
    %v1048 = vunpack.c.h.b16 %v318
    %v1049 = vunpack.c.l.b16 %v319
    %v1050 = vunpack.c.h.b16 %v319
    %v1051 = vunpack.c.l.b16 %v320
    %v1052 = vunpack.c.h.b16 %v320
    %v1053 = vunpack.c.l.b16 %v321
    %v1054 = vunpack.c.h.b16 %v321
    %v1055 = vunpack.c.l.b16 %v322
    %v1056 = vunpack.c.h.b16 %v322
    %v1057 = vunpack.c.l.b16 %v323
    %v1058 = vunpack.c.h.b16 %v323
    %v1059 = vunpack.c.l.b16 %v324
    %v1060 = vunpack.c.h.b16 %v324
    %v1061 = vunpack.c.l.b16 %v325
    %v1062 = vunpack.c.h.b16 %v325
    %v1063 = vunpack.c.l.b16 %v326
    %v1064 = vunpack.c.h.b16 %v326
    %v1065 = vunpack.c.l.b16 %v327
    %v1066 = vunpack.c.h.b16 %v327
    %v1067 = vunpack.c.l.b16 %v328
    %v1068 = vunpack.c.h.b16 %v328
    %v1069 = vunpack.c.l.b16 %v329
    %v1070 = vunpack.c.h.b16 %v329
    %v1071 = vunpack.c.l.b16 %v330
    %v1072 = vunpack.c.h.b16 %v330
    %v1073 = vunpack.c.l.b16 %v331
    %v1074 = vunpack.c.h.b16 %v331
    %v1075 = vunpack.c.l.b16 %v332
    %v1076 = vunpack.c.h.b16 %v332
    %v1077 = vunpack.c.l.b16 %v333
    %v1078 = vunpack.c.h.b16 %v333
    %v1079 = vunpack.c.l.b16 %v334
    %v1080 = vunpack.c.h.b16 %v334
    %v1081 = vunpack.c.l.b16 %v335
    %v1082 = vunpack.c.h.b16 %v335
    %v1083 = vunpack.c.l.b16 %v336
    %v1084 = vunpack.c.h.b16 %v336
    %v1085 = vunpack.c.l.b16 %v337
    %v1086 = vunpack.c.h.b16 %v337
    %v1087 = vunpack.c.l.b16 %v338
    %v1088 = vunpack.c.h.b16 %v338
    %v1089 = vunpack.c.l.b16 %v339
    %v1090 = vunpack.c.h.b16 %v339
    %v1091 = vunpack.c.l.b16 %v340
    %v1092 = vunpack.c.h.b16 %v340
    %v1093 = vunpack.c.l.b16 %v341
    %v1094 = vunpack.c.h.b16 %v341
    %v1095 = vunpack.c.l.b16 %v342
    %v1096 = vunpack.c.h.b16 %v342
    %v1097 = vunpack.c.l.b16 %v343
    %v1098 = vunpack.c.h.b16 %v343
    %v1099 = vunpack.c.l.b16 %v344
    %v1100 = vunpack.c.h.b16 %v344
    %v1101 = vunpack.c.l.b16 %v345
    %v1102 = vunpack.c.h.b16 %v345
    %v1103 = vunpack.c.l.b16 %v346
    %v1104 = vunpack.c.h.b16 %v346
    %v1105 = vunpack.c.l.b16 %v347
    %v1106 = vunpack.c.h.b16 %v347
    %v1107 = vunpack.c.l.b16 %v348
    %v1108 = vunpack.c.h.b16 %v348
    %v1109 = vunpack.c.l.b16 %v349
    %v1110 = vunpack.c.h.b16 %v349
    %v1111 = vunpack.c.l.b16 %v350
    %v1112 = vunpack.c.h.b16 %v350
    %v1113 = vunpack.c.l.b16 %v351
    %v1114 = vunpack.c.h.b16 %v351
    %v1115 = vunpack.c.l.b16 %v352
    %v1116 = vunpack.c.h.b16 %v352
    %v1117 = vunpack.c.l.b16 %v353
    %v1118 = vunpack.c.h.b16 %v353
    %v1119 = vunpack.c.l.b16 %v354
    %v1120 = vunpack.c.h.b16 %v354
    %v1121 = vunpack.c.l.b16 %v355
    %v1122 = vunpack.c.h.b16 %v355
    %v1123 = vunpack.c.l.b16 %v356
    %v1124 = vunpack.c.h.b16 %v356
    %v1125 = vunpack.c.l.b16 %v357
    %v1126 = vunpack.c.h.b16 %v357
    %v1127 = vunpack.c.l.b16 %v358
    %v1128 = vunpack.c.h.b16 %v358
    %v1129 = vunpack.c.l.b16 %v359
    %v1130 = vunpack.c.h.b16 %v359
    %v1131 = vunpack.c.l.b16 %v360
    %v1132 = vunpack.c.h.b16 %v360
    %v1133 = vunpack.c.l.b16 %v361
    %v1134 = vunpack.c.h.b16 %v361
    %v1135 = vunpack.c.l.b16 %v362
    %v1136 = vunpack.c.h.b16 %v362
    %v1137 = vunpack.c.l.b16 %v363
    %v1138 = vunpack.c.h.b16 %v363
    %v1139 = vunpack.c.l.b16 %v364
    %v1140 = vunpack.c.h.b16 %v364
    %v1141 = vunpack.c.l.b16 %v365
    %v1142 = vunpack.c.h.b16 %v365
    %v1143 = vunpack.c.l.b16 %v366
    %v1144 = vunpack.c.h.b16 %v366
    %v1145 = vpack.c.b16 %v637, %v633
    %v1146 = vpack.c.b16 %v638, %v634
    %v1147 = vpack.c.b16 %v639, %v635
    %v1148 = vpack.c.b16 %v640, %v636
    %v1149 = vpack.c.b16 %v645, %v641
    %v1150 = vpack.c.b16 %v646, %v642
    %v1151 = vpack.c.b16 %v647, %v643
    %v1152 = vpack.c.b16 %v648, %v644
    %v1153 = vpack.c.b16 %v653, %v649
    %v1154 = vpack.c.b16 %v654, %v650
    %v1155 = vpack.c.b16 %v655, %v651
    %v1156 = vpack.c.b16 %v656, %v652
    %v1157 = vpack.c.b16 %v661, %v657
    %v1158 = vpack.c.b16 %v662, %v658
    %v1159 = vpack.c.b16 %v663, %v659
    %v1160 = vpack.c.b16 %v664, %v660
    %v1161 = vpack.c.b16 %v669, %v665
    %v1162 = vpack.c.b16 %v670, %v666
    %v1163 = vpack.c.b16 %v671, %v667
    %v1164 = vpack.c.b16 %v672, %v668
    %v1165 = vpack.c.b16 %v677, %v673
    %v1166 = vpack.c.b16 %v678, %v674
    %v1167 = vpack.c.b16 %v679, %v675
    %v1168 = vpack.c.b16 %v680, %v676
    %v1169 = vpack.c.b16 %v685, %v681
    %v1170 = vpack.c.b16 %v686, %v682
    %v1171 = vpack.c.b16 %v687, %v683
    %v1172 = vpack.c.b16 %v688, %v684
    %v1173 = vpack.c.b16 %v693, %v689
    %v1174 = vpack.c.b16 %v694, %v690
    %v1175 = vpack.c.b16 %v695, %v691
    %v1176 = vpack.c.b16 %v696, %v692
    %v1177 = vpack.c.b16 %v701, %v697
    %v1178 = vpack.c.b16 %v702, %v698
    %v1179 = vpack.c.b16 %v703, %v699
    %v1180 = vpack.c.b16 %v704, %v700
    %v1181 = vpack.c.b16 %v709, %v705
    %v1182 = vpack.c.b16 %v710, %v706
    %v1183 = vpack.c.b16 %v711, %v707
    %v1184 = vpack.c.b16 %v712, %v708
    %v1185 = vpack.c.b16 %v717, %v713
    %v1186 = vpack.c.b16 %v718, %v714
    %v1187 = vpack.c.b16 %v719, %v715
    %v1188 = vpack.c.b16 %v720, %v716
    %v1189 = vpack.c.b16 %v725, %v721
    %v1190 = vpack.c.b16 %v726, %v722
    %v1191 = vpack.c.b16 %v727, %v723
    %v1192 = vpack.c.b16 %v728, %v724
    %v1193 = vpack.c.b16 %v733, %v729
    %v1194 = vpack.c.b16 %v734, %v730
    %v1195 = vpack.c.b16 %v735, %v731
    %v1196 = vpack.c.b16 %v736, %v732
    %v1197 = vpack.c.b16 %v741, %v737
    %v1198 = vpack.c.b16 %v742, %v738
    %v1199 = vpack.c.b16 %v743, %v739
    %v1200 = vpack.c.b16 %v744, %v740
    %v1201 = vpack.c.b16 %v749, %v745
    %v1202 = vpack.c.b16 %v750, %v746
    %v1203 = vpack.c.b16 %v751, %v747
    %v1204 = vpack.c.b16 %v752, %v748
    %v1205 = vpack.c.b16 %v757, %v753
    %v1206 = vpack.c.b16 %v758, %v754
    %v1207 = vpack.c.b16 %v759, %v755
    %v1208 = vpack.c.b16 %v760, %v756
    %v1209 = vpack.c.b16 %v765, %v761
    %v1210 = vpack.c.b16 %v766, %v762
    %v1211 = vpack.c.b16 %v767, %v763
    %v1212 = vpack.c.b16 %v768, %v764
    %v1213 = vpack.c.b16 %v773, %v769
    %v1214 = vpack.c.b16 %v774, %v770
    %v1215 = vpack.c.b16 %v775, %v771
    %v1216 = vpack.c.b16 %v776, %v772
    %v1217 = vpack.c.b16 %v781, %v777
    %v1218 = vpack.c.b16 %v782, %v778
    %v1219 = vpack.c.b16 %v783, %v779
    %v1220 = vpack.c.b16 %v784, %v780
    %v1221 = vpack.c.b16 %v789, %v785
    %v1222 = vpack.c.b16 %v790, %v786
    %v1223 = vpack.c.b16 %v791, %v787
    %v1224 = vpack.c.b16 %v792, %v788
    %v1225 = vpack.c.b16 %v797, %v793
    %v1226 = vpack.c.b16 %v798, %v794
    %v1227 = vpack.c.b16 %v799, %v795
    %v1228 = vpack.c.b16 %v800, %v796
    %v1229 = vpack.c.b16 %v805, %v801
    %v1230 = vpack.c.b16 %v806, %v802
    %v1231 = vpack.c.b16 %v807, %v803
    %v1232 = vpack.c.b16 %v808, %v804
    %v1233 = vpack.c.b16 %v813, %v809
    %v1234 = vpack.c.b16 %v814, %v810
    %v1235 = vpack.c.b16 %v815, %v811
    %v1236 = vpack.c.b16 %v816, %v812
    %v1237 = vpack.c.b16 %v821, %v817
    %v1238 = vpack.c.b16 %v822, %v818
    %v1239 = vpack.c.b16 %v823, %v819
    %v1240 = vpack.c.b16 %v824, %v820
    %v1241 = vpack.c.b16 %v829, %v825
    %v1242 = vpack.c.b16 %v830, %v826
    %v1243 = vpack.c.b16 %v831, %v827
    %v1244 = vpack.c.b16 %v832, %v828
    %v1245 = vpack.c.b16 %v837, %v833
    %v1246 = vpack.c.b16 %v838, %v834
    %v1247 = vpack.c.b16 %v839, %v835
    %v1248 = vpack.c.b16 %v840, %v836
    %v1249 = vpack.c.b16 %v845, %v841
    %v1250 = vpack.c.b16 %v846, %v842
    %v1251 = vpack.c.b16 %v847, %v843
    %v1252 = vpack.c.b16 %v848, %v844
    %v1253 = vpack.c.b16 %v853, %v849
    %v1254 = vpack.c.b16 %v854, %v850
    %v1255 = vpack.c.b16 %v855, %v851
    %v1256 = vpack.c.b16 %v856, %v852
    %v1257 = vpack.c.b16 %v861, %v857
    %v1258 = vpack.c.b16 %v862, %v858
    %v1259 = vpack.c.b16 %v863, %v859
    %v1260 = vpack.c.b16 %v864, %v860
    %v1261 = vpack.c.b16 %v869, %v865
    %v1262 = vpack.c.b16 %v870, %v866
    %v1263 = vpack.c.b16 %v871, %v867
    %v1264 = vpack.c.b16 %v872, %v868
    %v1265 = vpack.c.b16 %v877, %v873
    %v1266 = vpack.c.b16 %v878, %v874
    %v1267 = vpack.c.b16 %v879, %v875
    %v1268 = vpack.c.b16 %v880, %v876
    %v1269 = vpack.c.b16 %v885, %v881
    %v1270 = vpack.c.b16 %v886, %v882
    %v1271 = vpack.c.b16 %v887, %v883
    %v1272 = vpack.c.b16 %v888, %v884
    %v1273 = vpack.c.b16 %v893, %v889
    %v1274 = vpack.c.b16 %v894, %v890
    %v1275 = vpack.c.b16 %v895, %v891
    %v1276 = vpack.c.b16 %v896, %v892
    %v1277 = vpack.c.b16 %v901, %v897
    %v1278 = vpack.c.b16 %v902, %v898
    %v1279 = vpack.c.b16 %v903, %v899
    %v1280 = vpack.c.b16 %v904, %v900
    %v1281 = vpack.c.b16 %v909, %v905
    %v1282 = vpack.c.b16 %v910, %v906
    %v1283 = vpack.c.b16 %v911, %v907
    %v1284 = vpack.c.b16 %v912, %v908
    %v1285 = vpack.c.b16 %v917, %v913
    %v1286 = vpack.c.b16 %v918, %v914
    %v1287 = vpack.c.b16 %v919, %v915
    %v1288 = vpack.c.b16 %v920, %v916
    %v1289 = vpack.c.b16 %v925, %v921
    %v1290 = vpack.c.b16 %v926, %v922
    %v1291 = vpack.c.b16 %v927, %v923
    %v1292 = vpack.c.b16 %v928, %v924
    %v1293 = vpack.c.b16 %v933, %v929
    %v1294 = vpack.c.b16 %v934, %v930
    %v1295 = vpack.c.b16 %v935, %v931
    %v1296 = vpack.c.b16 %v936, %v932
    %v1297 = vpack.c.b16 %v941, %v937
    %v1298 = vpack.c.b16 %v942, %v938
    %v1299 = vpack.c.b16 %v943, %v939
    %v1300 = vpack.c.b16 %v944, %v940
    %v1301 = vpack.c.b16 %v949, %v945
    %v1302 = vpack.c.b16 %v950, %v946
    %v1303 = vpack.c.b16 %v951, %v947
    %v1304 = vpack.c.b16 %v952, %v948
    %v1305 = vpack.c.b16 %v957, %v953
    %v1306 = vpack.c.b16 %v958, %v954
    %v1307 = vpack.c.b16 %v959, %v955
    %v1308 = vpack.c.b16 %v960, %v956
    %v1309 = vpack.c.b16 %v965, %v961
    %v1310 = vpack.c.b16 %v966, %v962
    %v1311 = vpack.c.b16 %v967, %v963
    %v1312 = vpack.c.b16 %v968, %v964
    %v1313 = vpack.c.b16 %v973, %v969
    %v1314 = vpack.c.b16 %v974, %v970
    %v1315 = vpack.c.b16 %v975, %v971
    %v1316 = vpack.c.b16 %v976, %v972
    %v1317 = vpack.c.b16 %v981, %v977
    %v1318 = vpack.c.b16 %v982, %v978
    %v1319 = vpack.c.b16 %v983, %v979
    %v1320 = vpack.c.b16 %v984, %v980
    %v1321 = vpack.c.b16 %v989, %v985
    %v1322 = vpack.c.b16 %v990, %v986
    %v1323 = vpack.c.b16 %v991, %v987
    %v1324 = vpack.c.b16 %v992, %v988
    %v1325 = vpack.c.b16 %v997, %v993
    %v1326 = vpack.c.b16 %v998, %v994
    %v1327 = vpack.c.b16 %v999, %v995
    %v1328 = vpack.c.b16 %v1000, %v996
    %v1329 = vpack.c.b16 %v1005, %v1001
    %v1330 = vpack.c.b16 %v1006, %v1002
    %v1331 = vpack.c.b16 %v1007, %v1003
    %v1332 = vpack.c.b16 %v1008, %v1004
    %v1333 = vpack.c.b16 %v1013, %v1009
    %v1334 = vpack.c.b16 %v1014, %v1010
    %v1335 = vpack.c.b16 %v1015, %v1011
    %v1336 = vpack.c.b16 %v1016, %v1012
    %v1337 = vpack.c.b16 %v1021, %v1017
    %v1338 = vpack.c.b16 %v1022, %v1018
    %v1339 = vpack.c.b16 %v1023, %v1019
    %v1340 = vpack.c.b16 %v1024, %v1020
    %v1341 = vpack.c.b16 %v1029, %v1025
    %v1342 = vpack.c.b16 %v1030, %v1026
    %v1343 = vpack.c.b16 %v1031, %v1027
    %v1344 = vpack.c.b16 %v1032, %v1028
    %v1345 = vpack.c.b16 %v1037, %v1033
    %v1346 = vpack.c.b16 %v1038, %v1034
    %v1347 = vpack.c.b16 %v1039, %v1035
    %v1348 = vpack.c.b16 %v1040, %v1036
    %v1349 = vpack.c.b16 %v1045, %v1041
    %v1350 = vpack.c.b16 %v1046, %v1042
    %v1351 = vpack.c.b16 %v1047, %v1043
    %v1352 = vpack.c.b16 %v1048, %v1044
    %v1353 = vpack.c.b16 %v1053, %v1049
    %v1354 = vpack.c.b16 %v1054, %v1050
    %v1355 = vpack.c.b16 %v1055, %v1051
    %v1356 = vpack.c.b16 %v1056, %v1052
    %v1357 = vpack.c.b16 %v1061, %v1057
    %v1358 = vpack.c.b16 %v1062, %v1058
    %v1359 = vpack.c.b16 %v1063, %v1059
    %v1360 = vpack.c.b16 %v1064, %v1060
    %v1361 = vpack.c.b16 %v1069, %v1065
    %v1362 = vpack.c.b16 %v1070, %v1066
    %v1363 = vpack.c.b16 %v1071, %v1067
    %v1364 = vpack.c.b16 %v1072, %v1068
    %v1365 = vpack.c.b16 %v1077, %v1073
    %v1366 = vpack.c.b16 %v1078, %v1074
    %v1367 = vpack.c.b16 %v1079, %v1075
    %v1368 = vpack.c.b16 %v1080, %v1076
    %v1369 = vpack.c.b16 %v1085, %v1081
    %v1370 = vpack.c.b16 %v1086, %v1082
    %v1371 = vpack.c.b16 %v1087, %v1083
    %v1372 = vpack.c.b16 %v1088, %v1084
    %v1373 = vpack.c.b16 %v1093, %v1089
    %v1374 = vpack.c.b16 %v1094, %v1090
    %v1375 = vpack.c.b16 %v1095, %v1091
    %v1376 = vpack.c.b16 %v1096, %v1092
    %v1377 = vpack.c.b16 %v1101, %v1097
    %v1378 = vpack.c.b16 %v1102, %v1098
    %v1379 = vpack.c.b16 %v1103, %v1099
    %v1380 = vpack.c.b16 %v1104, %v1100
    %v1381 = vpack.c.b16 %v1109, %v1105
    %v1382 = vpack.c.b16 %v1110, %v1106
    %v1383 = vpack.c.b16 %v1111, %v1107
    %v1384 = vpack.c.b16 %v1112, %v1108
    %v1385 = vpack.c.b16 %v1117, %v1113
    %v1386 = vpack.c.b16 %v1118, %v1114
    %v1387 = vpack.c.b16 %v1119, %v1115
    %v1388 = vpack.c.b16 %v1120, %v1116
    %v1389 = vpack.c.b16 %v1125, %v1121
    %v1390 = vpack.c.b16 %v1126, %v1122
    %v1391 = vpack.c.b16 %v1127, %v1123
    %v1392 = vpack.c.b16 %v1128, %v1124
    %v1393 = vpack.c.b16 %v1133, %v1129
    %v1394 = vpack.c.b16 %v1134, %v1130
    %v1395 = vpack.c.b16 %v1135, %v1131
    %v1396 = vpack.c.b16 %v1136, %v1132
    %v1397 = vpack.c.b16 %v1141, %v1137
    %v1398 = vpack.c.b16 %v1142, %v1138
    %v1399 = vpack.c.b16 %v1143, %v1139
    %v1400 = vpack.c.b16 %v1144, %v1140
    %1657 = vmatpush.bf16.msra.mxu0 %v1173
    %1658 = vmatpush.bf16.msra.mxu0 %v1169
    %1659 = vmatpush.bf16.msra.mxu0 %v1165
    %1660 = vmatpush.bf16.msra.mxu0 %v1161
    %1661 = vmatpush.bf16.msra.mxu0 %v1157
    %1662 = vmatpush.bf16.msra.mxu0 %v1153
    %1663 = vmatpush.bf16.msra.mxu0 %v1149
    %1664 = vmatpush.bf16.msra.mxu0 %v1145
    %1665 = vmatmul.bf16.gmra.mxu0 %v103
    %v1666 = vpop.f32.mrf.mxu0
    %v1667 = vadd.f32 %v369, %v1666
    %v1668 = vpop.f32.mrf.mxu0
    %1669 = vdwg.mxu0
    %1670 = vmatpush.bf16.msra.mxu0 %v1205
    %1671 = vmatpush.bf16.msra.mxu0 %v1201
    %1672 = vmatpush.bf16.msra.mxu0 %v1197
    %1673 = vmatpush.bf16.msra.mxu0 %v1193
    %1674 = vmatpush.bf16.msra.mxu0 %v1189
    %1675 = vmatpush.bf16.msra.mxu0 %v1185
    %1676 = vmatpush.bf16.msra.mxu0 %v1181
    %1677 = vmatpush.bf16.msra.mxu0 %v1177
    %1678 = vmatmul.bf16.gmra.mxu0 %v104
    %v1679 = vpop.f32.mrf.mxu0
    %v1680 = vadd.f32 %v1667, %v1679
    %v1681 = vpop.f32.mrf.mxu0
    %1682 = vdwg.mxu0
    %1683 = vmatpush.bf16.msra.mxu0 %v1237
    %1684 = vmatpush.bf16.msra.mxu0 %v1233
    %1685 = vmatpush.bf16.msra.mxu0 %v1229
    %1686 = vmatpush.bf16.msra.mxu0 %v1225
    %1687 = vmatpush.bf16.msra.mxu0 %v1221
    %1688 = vmatpush.bf16.msra.mxu0 %v1217
    %1689 = vmatpush.bf16.msra.mxu0 %v1213
    %1690 = vmatpush.bf16.msra.mxu0 %v1209
    %1691 = vmatmul.bf16.gmra.mxu0 %v105
    %v1692 = vpop.f32.mrf.mxu0
    %v1693 = vadd.f32 %v1680, %v1692
    %v1694 = vpop.f32.mrf.mxu0
    %1695 = vdwg.mxu0
    %1696 = vmatpush.bf16.msra.mxu0 %v1269
    %1697 = vmatpush.bf16.msra.mxu0 %v1265
    %1698 = vmatpush.bf16.msra.mxu0 %v1261
    %1699 = vmatpush.bf16.msra.mxu0 %v1257
    %1700 = vmatpush.bf16.msra.mxu0 %v1253
    %1701 = vmatpush.bf16.msra.mxu0 %v1249
    %1702 = vmatpush.bf16.msra.mxu0 %v1245
    %1703 = vmatpush.bf16.msra.mxu0 %v1241
    %1704 = vmatmul.bf16.gmra.mxu0 %v106
    %v1705 = vpop.f32.mrf.mxu0
    %v1706 = vadd.f32 %v1693, %v1705
    %v1707 = vpop.f32.mrf.mxu0
    %1708 = vdwg.mxu0
    %1709 = vmatpush.bf16.msra.mxu0 %v1301
    %1710 = vmatpush.bf16.msra.mxu0 %v1297
    %1711 = vmatpush.bf16.msra.mxu0 %v1293
    %1712 = vmatpush.bf16.msra.mxu0 %v1289
    %1713 = vmatpush.bf16.msra.mxu0 %v1285
    %1714 = vmatpush.bf16.msra.mxu0 %v1281
    %1715 = vmatpush.bf16.msra.mxu0 %v1277
    %1716 = vmatpush.bf16.msra.mxu0 %v1273
    %1717 = vmatmul.bf16.gmra.mxu0 %v107
    %v1718 = vpop.f32.mrf.mxu0
    %v1719 = vadd.f32 %v1706, %v1718
    %v1720 = vpop.f32.mrf.mxu0
    %1721 = vdwg.mxu0
    %1722 = vmatpush.bf16.msra.mxu0 %v1333
    %1723 = vmatpush.bf16.msra.mxu0 %v1329
    %1724 = vmatpush.bf16.msra.mxu0 %v1325
    %1725 = vmatpush.bf16.msra.mxu0 %v1321
    %1726 = vmatpush.bf16.msra.mxu0 %v1317
    %1727 = vmatpush.bf16.msra.mxu0 %v1313
    %1728 = vmatpush.bf16.msra.mxu0 %v1309
    %1729 = vmatpush.bf16.msra.mxu0 %v1305
    %1730 = vmatmul.bf16.gmra.mxu0 %v108
    %v1731 = vpop.f32.mrf.mxu0
    %v1732 = vadd.f32 %v1719, %v1731
    %v1733 = vpop.f32.mrf.mxu0
    %1734 = vdwg.mxu0
    %1735 = vmatpush.bf16.msra.mxu0 %v1365
    %1736 = vmatpush.bf16.msra.mxu0 %v1361
    %1737 = vmatpush.bf16.msra.mxu0 %v1357
    %1738 = vmatpush.bf16.msra.mxu0 %v1353
    %1739 = vmatpush.bf16.msra.mxu0 %v1349
    %1740 = vmatpush.bf16.msra.mxu0 %v1345
    %1741 = vmatpush.bf16.msra.mxu0 %v1341
    %1742 = vmatpush.bf16.msra.mxu0 %v1337
    %1743 = vmatmul.bf16.gmra.mxu0 %v109
    %v1744 = vpop.f32.mrf.mxu0
    %v1745 = vadd.f32 %v1732, %v1744
    %v1746 = vpop.f32.mrf.mxu0
    %1747 = vdwg.mxu0
    %1748 = vmatpush.bf16.msra.mxu0 %v1397
    %1749 = vmatpush.bf16.msra.mxu0 %v1393
    %1750 = vmatpush.bf16.msra.mxu0 %v1389
    %1751 = vmatpush.bf16.msra.mxu0 %v1385
    %1752 = vmatpush.bf16.msra.mxu0 %v1381
    %1753 = vmatpush.bf16.msra.mxu0 %v1377
    %1754 = vmatpush.bf16.msra.mxu0 %v1373
    %1755 = vmatpush.bf16.msra.mxu0 %v1369
    %1756 = vmatmul.bf16.gmra.mxu0 %v110
    %v1757 = vpop.f32.mrf.mxu0
    %v1758 = vadd.f32 %v1745, %v1757
    %v1759 = vpop.f32.mrf.mxu0
    %1760 = vdwg.mxu0
    %1761 = vmatpush.bf16.msra.mxu0 %v1174
    %1762 = vmatpush.bf16.msra.mxu0 %v1170
    %1763 = vmatpush.bf16.msra.mxu0 %v1166
    %1764 = vmatpush.bf16.msra.mxu0 %v1162
    %1765 = vmatpush.bf16.msra.mxu0 %v1158
    %1766 = vmatpush.bf16.msra.mxu0 %v1154
    %1767 = vmatpush.bf16.msra.mxu0 %v1150
    %1768 = vmatpush.bf16.msra.mxu0 %v1146
    %1769 = vmatmul.bf16.gmra.mxu0 %v103
    %v1770 = vpop.f32.mrf.mxu0
    %v1771 = vadd.f32 %v370, %v1770
    %v1772 = vpop.f32.mrf.mxu0
    %1773 = vdwg.mxu0
    %1774 = vmatpush.bf16.msra.mxu0 %v1206
    %1775 = vmatpush.bf16.msra.mxu0 %v1202
    %1776 = vmatpush.bf16.msra.mxu0 %v1198
    %1777 = vmatpush.bf16.msra.mxu0 %v1194
    %1778 = vmatpush.bf16.msra.mxu0 %v1190
    %1779 = vmatpush.bf16.msra.mxu0 %v1186
    %1780 = vmatpush.bf16.msra.mxu0 %v1182
    %1781 = vmatpush.bf16.msra.mxu0 %v1178
    %1782 = vmatmul.bf16.gmra.mxu0 %v104
    %v1783 = vpop.f32.mrf.mxu0
    %v1784 = vadd.f32 %v1771, %v1783
    %v1785 = vpop.f32.mrf.mxu0
    %1786 = vdwg.mxu0
    %1787 = vmatpush.bf16.msra.mxu0 %v1238
    %1788 = vmatpush.bf16.msra.mxu0 %v1234
    %1789 = vmatpush.bf16.msra.mxu0 %v1230
    %1790 = vmatpush.bf16.msra.mxu0 %v1226
    %1791 = vmatpush.bf16.msra.mxu0 %v1222
    %1792 = vmatpush.bf16.msra.mxu0 %v1218
    %1793 = vmatpush.bf16.msra.mxu0 %v1214
    %1794 = vmatpush.bf16.msra.mxu0 %v1210
    %1795 = vmatmul.bf16.gmra.mxu0 %v105
    %v1796 = vpop.f32.mrf.mxu0
    %v1797 = vadd.f32 %v1784, %v1796
    %v1798 = vpop.f32.mrf.mxu0
    %1799 = vdwg.mxu0
    %1800 = vmatpush.bf16.msra.mxu0 %v1270
    %1801 = vmatpush.bf16.msra.mxu0 %v1266
    %1802 = vmatpush.bf16.msra.mxu0 %v1262
    %1803 = vmatpush.bf16.msra.mxu0 %v1258
    %1804 = vmatpush.bf16.msra.mxu0 %v1254
    %1805 = vmatpush.bf16.msra.mxu0 %v1250
    %1806 = vmatpush.bf16.msra.mxu0 %v1246
    %1807 = vmatpush.bf16.msra.mxu0 %v1242
    %1808 = vmatmul.bf16.gmra.mxu0 %v106
    %v1809 = vpop.f32.mrf.mxu0
    %v1810 = vadd.f32 %v1797, %v1809
    %v1811 = vpop.f32.mrf.mxu0
    %1812 = vdwg.mxu0
    %1813 = vmatpush.bf16.msra.mxu0 %v1302
    %1814 = vmatpush.bf16.msra.mxu0 %v1298
    %1815 = vmatpush.bf16.msra.mxu0 %v1294
    %1816 = vmatpush.bf16.msra.mxu0 %v1290
    %1817 = vmatpush.bf16.msra.mxu0 %v1286
    %1818 = vmatpush.bf16.msra.mxu0 %v1282
    %1819 = vmatpush.bf16.msra.mxu0 %v1278
    %1820 = vmatpush.bf16.msra.mxu0 %v1274
    %1821 = vmatmul.bf16.gmra.mxu0 %v107
    %v1822 = vpop.f32.mrf.mxu0
    %v1823 = vadd.f32 %v1810, %v1822
    %v1824 = vpop.f32.mrf.mxu0
    %1825 = vdwg.mxu0
    %1826 = vmatpush.bf16.msra.mxu0 %v1334
    %1827 = vmatpush.bf16.msra.mxu0 %v1330
    %1828 = vmatpush.bf16.msra.mxu0 %v1326
    %1829 = vmatpush.bf16.msra.mxu0 %v1322
    %1830 = vmatpush.bf16.msra.mxu0 %v1318
    %1831 = vmatpush.bf16.msra.mxu0 %v1314
    %1832 = vmatpush.bf16.msra.mxu0 %v1310
    %1833 = vmatpush.bf16.msra.mxu0 %v1306
    %1834 = vmatmul.bf16.gmra.mxu0 %v108
    %v1835 = vpop.f32.mrf.mxu0
    %v1836 = vadd.f32 %v1823, %v1835
    %v1837 = vpop.f32.mrf.mxu0
    %1838 = vdwg.mxu0
    %1839 = vmatpush.bf16.msra.mxu0 %v1366
    %1840 = vmatpush.bf16.msra.mxu0 %v1362
    %1841 = vmatpush.bf16.msra.mxu0 %v1358
    %1842 = vmatpush.bf16.msra.mxu0 %v1354
    %1843 = vmatpush.bf16.msra.mxu0 %v1350
    %1844 = vmatpush.bf16.msra.mxu0 %v1346
    %1845 = vmatpush.bf16.msra.mxu0 %v1342
    %1846 = vmatpush.bf16.msra.mxu0 %v1338
    %1847 = vmatmul.bf16.gmra.mxu0 %v109
    %v1848 = vpop.f32.mrf.mxu0
    %v1849 = vadd.f32 %v1836, %v1848
    %v1850 = vpop.f32.mrf.mxu0
    %1851 = vdwg.mxu0
    %1852 = vmatpush.bf16.msra.mxu0 %v1398
    %1853 = vmatpush.bf16.msra.mxu0 %v1394
    %1854 = vmatpush.bf16.msra.mxu0 %v1390
    %1855 = vmatpush.bf16.msra.mxu0 %v1386
    %1856 = vmatpush.bf16.msra.mxu0 %v1382
    %1857 = vmatpush.bf16.msra.mxu0 %v1378
    %1858 = vmatpush.bf16.msra.mxu0 %v1374
    %1859 = vmatpush.bf16.msra.mxu0 %v1370
    %1860 = vmatmul.bf16.gmra.mxu0 %v110
    %v1861 = vpop.f32.mrf.mxu0
    %v1862 = vadd.f32 %v1849, %v1861
    %v1863 = vpop.f32.mrf.mxu0
    %1864 = vdwg.mxu0
    %1865 = vmatpush.bf16.msra.mxu0 %v1175
    %1866 = vmatpush.bf16.msra.mxu0 %v1171
    %1867 = vmatpush.bf16.msra.mxu0 %v1167
    %1868 = vmatpush.bf16.msra.mxu0 %v1163
    %1869 = vmatpush.bf16.msra.mxu0 %v1159
    %1870 = vmatpush.bf16.msra.mxu0 %v1155
    %1871 = vmatpush.bf16.msra.mxu0 %v1151
    %1872 = vmatpush.bf16.msra.mxu0 %v1147
    %1873 = vmatmul.bf16.gmra.mxu0 %v103
    %v1874 = vpop.f32.mrf.mxu0
    %v1875 = vadd.f32 %v371, %v1874
    %v1876 = vpop.f32.mrf.mxu0
    %1877 = vdwg.mxu0
    %1878 = vmatpush.bf16.msra.mxu0 %v1207
    %1879 = vmatpush.bf16.msra.mxu0 %v1203
    %1880 = vmatpush.bf16.msra.mxu0 %v1199
    %1881 = vmatpush.bf16.msra.mxu0 %v1195
    %1882 = vmatpush.bf16.msra.mxu0 %v1191
    %1883 = vmatpush.bf16.msra.mxu0 %v1187
    %1884 = vmatpush.bf16.msra.mxu0 %v1183
    %1885 = vmatpush.bf16.msra.mxu0 %v1179
    %1886 = vmatmul.bf16.gmra.mxu0 %v104
    %v1887 = vpop.f32.mrf.mxu0
    %v1888 = vadd.f32 %v1875, %v1887
    %v1889 = vpop.f32.mrf.mxu0
    %1890 = vdwg.mxu0
    %1891 = vmatpush.bf16.msra.mxu0 %v1239
    %1892 = vmatpush.bf16.msra.mxu0 %v1235
    %1893 = vmatpush.bf16.msra.mxu0 %v1231
    %1894 = vmatpush.bf16.msra.mxu0 %v1227
    %1895 = vmatpush.bf16.msra.mxu0 %v1223
    %1896 = vmatpush.bf16.msra.mxu0 %v1219
    %1897 = vmatpush.bf16.msra.mxu0 %v1215
    %1898 = vmatpush.bf16.msra.mxu0 %v1211
    %1899 = vmatmul.bf16.gmra.mxu0 %v105
    %v1900 = vpop.f32.mrf.mxu0
    %v1901 = vadd.f32 %v1888, %v1900
    %v1902 = vpop.f32.mrf.mxu0
    %1903 = vdwg.mxu0
    %1904 = vmatpush.bf16.msra.mxu0 %v1271
    %1905 = vmatpush.bf16.msra.mxu0 %v1267
    %1906 = vmatpush.bf16.msra.mxu0 %v1263
    %1907 = vmatpush.bf16.msra.mxu0 %v1259
    %1908 = vmatpush.bf16.msra.mxu0 %v1255
    %1909 = vmatpush.bf16.msra.mxu0 %v1251
    %1910 = vmatpush.bf16.msra.mxu0 %v1247
    %1911 = vmatpush.bf16.msra.mxu0 %v1243
    %1912 = vmatmul.bf16.gmra.mxu0 %v106
    %v1913 = vpop.f32.mrf.mxu0
    %v1914 = vadd.f32 %v1901, %v1913
    %v1915 = vpop.f32.mrf.mxu0
    %1916 = vdwg.mxu0
    %1917 = vmatpush.bf16.msra.mxu0 %v1303
    %1918 = vmatpush.bf16.msra.mxu0 %v1299
    %1919 = vmatpush.bf16.msra.mxu0 %v1295
    %1920 = vmatpush.bf16.msra.mxu0 %v1291
    %1921 = vmatpush.bf16.msra.mxu0 %v1287
    %1922 = vmatpush.bf16.msra.mxu0 %v1283
    %1923 = vmatpush.bf16.msra.mxu0 %v1279
    %1924 = vmatpush.bf16.msra.mxu0 %v1275
    %1925 = vmatmul.bf16.gmra.mxu0 %v107
    %v1926 = vpop.f32.mrf.mxu0
    %v1927 = vadd.f32 %v1914, %v1926
    %v1928 = vpop.f32.mrf.mxu0
    %1929 = vdwg.mxu0
    %1930 = vmatpush.bf16.msra.mxu0 %v1335
    %1931 = vmatpush.bf16.msra.mxu0 %v1331
    %1932 = vmatpush.bf16.msra.mxu0 %v1327
    %1933 = vmatpush.bf16.msra.mxu0 %v1323
    %1934 = vmatpush.bf16.msra.mxu0 %v1319
    %1935 = vmatpush.bf16.msra.mxu0 %v1315
    %1936 = vmatpush.bf16.msra.mxu0 %v1311
    %1937 = vmatpush.bf16.msra.mxu0 %v1307
    %1938 = vmatmul.bf16.gmra.mxu0 %v108
    %v1939 = vpop.f32.mrf.mxu0
    %v1940 = vadd.f32 %v1927, %v1939
    %v1941 = vpop.f32.mrf.mxu0
    %1942 = vdwg.mxu0
    %1943 = vmatpush.bf16.msra.mxu0 %v1367
    %1944 = vmatpush.bf16.msra.mxu0 %v1363
    %1945 = vmatpush.bf16.msra.mxu0 %v1359
    %1946 = vmatpush.bf16.msra.mxu0 %v1355
    %1947 = vmatpush.bf16.msra.mxu0 %v1351
    %1948 = vmatpush.bf16.msra.mxu0 %v1347
    %1949 = vmatpush.bf16.msra.mxu0 %v1343
    %1950 = vmatpush.bf16.msra.mxu0 %v1339
    %1951 = vmatmul.bf16.gmra.mxu0 %v109
    %v1952 = vpop.f32.mrf.mxu0
    %v1953 = vadd.f32 %v1940, %v1952
    %v1954 = vpop.f32.mrf.mxu0
    %1955 = vdwg.mxu0
    %1956 = vmatpush.bf16.msra.mxu0 %v1399
    %1957 = vmatpush.bf16.msra.mxu0 %v1395
    %1958 = vmatpush.bf16.msra.mxu0 %v1391
    %1959 = vmatpush.bf16.msra.mxu0 %v1387
    %1960 = vmatpush.bf16.msra.mxu0 %v1383
    %1961 = vmatpush.bf16.msra.mxu0 %v1379
    %1962 = vmatpush.bf16.msra.mxu0 %v1375
    %1963 = vmatpush.bf16.msra.mxu0 %v1371
    %1964 = vmatmul.bf16.gmra.mxu0 %v110
    %v1965 = vpop.f32.mrf.mxu0
    %v1966 = vadd.f32 %v1953, %v1965
    %v1967 = vpop.f32.mrf.mxu0
    %1968 = vdwg.mxu0
    %1969 = vmatpush.bf16.msra.mxu0 %v1176
    %1970 = vmatpush.bf16.msra.mxu0 %v1172
    %1971 = vmatpush.bf16.msra.mxu0 %v1168
    %1972 = vmatpush.bf16.msra.mxu0 %v1164
    %1973 = vmatpush.bf16.msra.mxu0 %v1160
    %1974 = vmatpush.bf16.msra.mxu0 %v1156
    %1975 = vmatpush.bf16.msra.mxu0 %v1152
    %1976 = vmatpush.bf16.msra.mxu0 %v1148
    %1977 = vmatmul.bf16.gmra.mxu0 %v103
    %v1978 = vpop.f32.mrf.mxu0
    %v1979 = vadd.f32 %v372, %v1978
    %v1980 = vpop.f32.mrf.mxu0
    %1981 = vdwg.mxu0
    %1982 = vmatpush.bf16.msra.mxu0 %v1208
    %1983 = vmatpush.bf16.msra.mxu0 %v1204
    %1984 = vmatpush.bf16.msra.mxu0 %v1200
    %1985 = vmatpush.bf16.msra.mxu0 %v1196
    %1986 = vmatpush.bf16.msra.mxu0 %v1192
    %1987 = vmatpush.bf16.msra.mxu0 %v1188
    %1988 = vmatpush.bf16.msra.mxu0 %v1184
    %1989 = vmatpush.bf16.msra.mxu0 %v1180
    %1990 = vmatmul.bf16.gmra.mxu0 %v104
    %v1991 = vpop.f32.mrf.mxu0
    %v1992 = vadd.f32 %v1979, %v1991
    %v1993 = vpop.f32.mrf.mxu0
    %1994 = vdwg.mxu0
    %1995 = vmatpush.bf16.msra.mxu0 %v1240
    %1996 = vmatpush.bf16.msra.mxu0 %v1236
    %1997 = vmatpush.bf16.msra.mxu0 %v1232
    %1998 = vmatpush.bf16.msra.mxu0 %v1228
    %1999 = vmatpush.bf16.msra.mxu0 %v1224
    %2000 = vmatpush.bf16.msra.mxu0 %v1220
    %2001 = vmatpush.bf16.msra.mxu0 %v1216
    %2002 = vmatpush.bf16.msra.mxu0 %v1212
    %2003 = vmatmul.bf16.gmra.mxu0 %v105
    %v2004 = vpop.f32.mrf.mxu0
    %v2005 = vadd.f32 %v1992, %v2004
    %v2006 = vpop.f32.mrf.mxu0
    %2007 = vdwg.mxu0
    %2008 = vmatpush.bf16.msra.mxu0 %v1272
    %2009 = vmatpush.bf16.msra.mxu0 %v1268
    %2010 = vmatpush.bf16.msra.mxu0 %v1264
    %2011 = vmatpush.bf16.msra.mxu0 %v1260
    %2012 = vmatpush.bf16.msra.mxu0 %v1256
    %2013 = vmatpush.bf16.msra.mxu0 %v1252
    %2014 = vmatpush.bf16.msra.mxu0 %v1248
    %2015 = vmatpush.bf16.msra.mxu0 %v1244
    %2016 = vmatmul.bf16.gmra.mxu0 %v106
    %v2017 = vpop.f32.mrf.mxu0
    %v2018 = vadd.f32 %v2005, %v2017
    %v2019 = vpop.f32.mrf.mxu0
    %2020 = vdwg.mxu0
    %2021 = vmatpush.bf16.msra.mxu0 %v1304
    %2022 = vmatpush.bf16.msra.mxu0 %v1300
    %2023 = vmatpush.bf16.msra.mxu0 %v1296
    %2024 = vmatpush.bf16.msra.mxu0 %v1292
    %2025 = vmatpush.bf16.msra.mxu0 %v1288
    %2026 = vmatpush.bf16.msra.mxu0 %v1284
    %2027 = vmatpush.bf16.msra.mxu0 %v1280
    %2028 = vmatpush.bf16.msra.mxu0 %v1276
    %2029 = vmatmul.bf16.gmra.mxu0 %v107
    %v2030 = vpop.f32.mrf.mxu0
    %v2031 = vadd.f32 %v2018, %v2030
    %v2032 = vpop.f32.mrf.mxu0
    %2033 = vdwg.mxu0
    %2034 = vmatpush.bf16.msra.mxu0 %v1336
    %2035 = vmatpush.bf16.msra.mxu0 %v1332
    %2036 = vmatpush.bf16.msra.mxu0 %v1328
    %2037 = vmatpush.bf16.msra.mxu0 %v1324
    %2038 = vmatpush.bf16.msra.mxu0 %v1320
    %2039 = vmatpush.bf16.msra.mxu0 %v1316
    %2040 = vmatpush.bf16.msra.mxu0 %v1312
    %2041 = vmatpush.bf16.msra.mxu0 %v1308
    %2042 = vmatmul.bf16.gmra.mxu0 %v108
    %v2043 = vpop.f32.mrf.mxu0
    %v2044 = vadd.f32 %v2031, %v2043
    %v2045 = vpop.f32.mrf.mxu0
    %2046 = vdwg.mxu0
    %2047 = vmatpush.bf16.msra.mxu0 %v1368
    %2048 = vmatpush.bf16.msra.mxu0 %v1364
    %2049 = vmatpush.bf16.msra.mxu0 %v1360
    %2050 = vmatpush.bf16.msra.mxu0 %v1356
    %2051 = vmatpush.bf16.msra.mxu0 %v1352
    %2052 = vmatpush.bf16.msra.mxu0 %v1348
    %2053 = vmatpush.bf16.msra.mxu0 %v1344
    %2054 = vmatpush.bf16.msra.mxu0 %v1340
    %2055 = vmatmul.bf16.gmra.mxu0 %v109
    %v2056 = vpop.f32.mrf.mxu0
    %v2057 = vadd.f32 %v2044, %v2056
    %v2058 = vpop.f32.mrf.mxu0
    %2059 = vdwg.mxu0
    %2060 = vmatpush.bf16.msra.mxu0 %v1400
    %2061 = vmatpush.bf16.msra.mxu0 %v1396
    %2062 = vmatpush.bf16.msra.mxu0 %v1392
    %2063 = vmatpush.bf16.msra.mxu0 %v1388
    %2064 = vmatpush.bf16.msra.mxu0 %v1384
    %2065 = vmatpush.bf16.msra.mxu0 %v1380
    %2066 = vmatpush.bf16.msra.mxu0 %v1376
    %2067 = vmatpush.bf16.msra.mxu0 %v1372
    %2068 = vmatmul.bf16.gmra.mxu0 %v110
    %v2069 = vpop.f32.mrf.mxu0
    %v2070 = vadd.f32 %v2057, %v2069
    %v2071 = vpop.f32.mrf.mxu0
    %2072 = vdwg.mxu0
    %v2073 = vmax.f32 %v1758, 0.0
    %v2074 = vmax.f32 %v1862, 0.0
    %v2075 = vmax.f32 %v1966, 0.0
    %v2076 = vmax.f32 %v2070, 0.0
    %v2077 = vpack.c.bf16 %v2073, %v2073
    %v2078 = vpack.c.bf16 %v2074, %v2074
    %v2079 = vpack.c.bf16 %v2075, %v2075
    %v2080 = vpack.c.bf16 %v2076, %v2076
    %v2081 = vld [vmem:[#allocation4] sm:$0xff]
    %v2082 = vld [vmem:[#allocation4 + $0x8] sm:$0xff]
    %v2083 = vld [vmem:[#allocation4 + $0x10] sm:$0xff]
    %v2084 = vld [vmem:[#allocation4 + $0x18] sm:$0xff]
    %v2085 = vld [vmem:[#allocation4 + $0x20] sm:$0xff]
    %v2086 = vld [vmem:[#allocation4 + $0x28] sm:$0xff]
    %v2087 = vld [vmem:[#allocation4 + $0x30] sm:$0xff]
    %v2088 = vld [vmem:[#allocation4 + $0x38] sm:$0xff]
    %v2089 = vld [vmem:[#allocation4 + $0x40] sm:$0xff]
    %v2090 = vld [vmem:[#allocation4 + $0x48] sm:$0xff]
    %v2091 = vld [vmem:[#allocation4 + $0x50] sm:$0xff]
    %v2092 = vld [vmem:[#allocation4 + $0x58] sm:$0xff]
    %v2093 = vld [vmem:[#allocation4 + $0x60] sm:$0xff]
    %v2094 = vld [vmem:[#allocation4 + $0x68] sm:$0xff]
    %v2095 = vld [vmem:[#allocation4 + $0x70] sm:$0xff]
    %v2096 = vld [vmem:[#allocation4 + $0x78] sm:$0xff]
    %v2097 = vld [vmem:[#allocation4 + $0x80] sm:$0xff]
    %v2098 = vld [vmem:[#allocation4 + $0x88] sm:$0xff]
    %v2099 = vld [vmem:[#allocation4 + $0x90] sm:$0xff]
    %v2100 = vld [vmem:[#allocation4 + $0x98] sm:$0xff]
    %v2101 = vld [vmem:[#allocation4 + $0xa0] sm:$0xff]
    %v2102 = vld [vmem:[#allocation4 + $0xa8] sm:$0xff]
    %v2103 = vld [vmem:[#allocation4 + $0xb0] sm:$0xff]
    %v2104 = vld [vmem:[#allocation4 + $0xb8] sm:$0xff]
    %v2105 = vld [vmem:[#allocation4 + $0xc0] sm:$0xff]
    %v2106 = vld [vmem:[#allocation4 + $0xc8] sm:$0xff]
    %v2107 = vld [vmem:[#allocation4 + $0xd0] sm:$0xff]
    %v2108 = vld [vmem:[#allocation4 + $0xd8] sm:$0xff]
    %v2109 = vld [vmem:[#allocation4 + $0xe0] sm:$0xff]
    %v2110 = vld [vmem:[#allocation4 + $0xe8] sm:$0xff]
    %v2111 = vld [vmem:[#allocation4 + $0xf0] sm:$0xff]
    %v2112 = vld [vmem:[#allocation4 + $0xf8] sm:$0xff]
    %v2113 = vld [vmem:[#allocation4 + $0x100] sm:$0xff]
    %v2114 = vld [vmem:[#allocation4 + $0x108] sm:$0xff]
    %v2115 = vld [vmem:[#allocation4 + $0x110] sm:$0xff]
    %v2116 = vld [vmem:[#allocation4 + $0x118] sm:$0xff]
    %v2117 = vld [vmem:[#allocation4 + $0x120] sm:$0xff]
    %v2118 = vld [vmem:[#allocation4 + $0x128] sm:$0xff]
    %v2119 = vld [vmem:[#allocation4 + $0x130] sm:$0xff]
    %v2120 = vld [vmem:[#allocation4 + $0x138] sm:$0xff]
    %v2121 = vld [vmem:[#allocation4 + $0x140] sm:$0xff]
    %v2122 = vld [vmem:[#allocation4 + $0x148] sm:$0xff]
    %v2123 = vld [vmem:[#allocation4 + $0x150] sm:$0xff]
    %v2124 = vld [vmem:[#allocation4 + $0x158] sm:$0xff]
    %v2125 = vld [vmem:[#allocation4 + $0x160] sm:$0xff]
    %v2126 = vld [vmem:[#allocation4 + $0x168] sm:$0xff]
    %v2127 = vld [vmem:[#allocation4 + $0x170] sm:$0xff]
    %v2128 = vld [vmem:[#allocation4 + $0x178] sm:$0xff]
    %v2129 = vld [vmem:[#allocation4 + $0x180] sm:$0xff]
    %v2130 = vld [vmem:[#allocation4 + $0x188] sm:$0xff]
    %v2131 = vld [vmem:[#allocation4 + $0x190] sm:$0xff]
    %v2132 = vld [vmem:[#allocation4 + $0x198] sm:$0xff]
    %v2133 = vld [vmem:[#allocation4 + $0x1a0] sm:$0xff]
    %v2134 = vld [vmem:[#allocation4 + $0x1a8] sm:$0xff]
    %v2135 = vld [vmem:[#allocation4 + $0x1b0] sm:$0xff]
    %v2136 = vld [vmem:[#allocation4 + $0x1b8] sm:$0xff]
    %v2137 = vld [vmem:[#allocation4 + $0x1c0] sm:$0xff]
    %v2138 = vld [vmem:[#allocation4 + $0x1c8] sm:$0xff]
    %v2139 = vld [vmem:[#allocation4 + $0x1d0] sm:$0xff]
    %v2140 = vld [vmem:[#allocation4 + $0x1d8] sm:$0xff]
    %v2141 = vld [vmem:[#allocation4 + $0x1e0] sm:$0xff]
    %v2142 = vld [vmem:[#allocation4 + $0x1e8] sm:$0xff]
    %v2143 = vld [vmem:[#allocation4 + $0x1f0] sm:$0xff]
    %v2144 = vld [vmem:[#allocation4 + $0x1f8] sm:$0xff]
    %v2145 = vld [vmem:[%s4] sm:$0x3]
    %v2147 = vperm.slane %v2145, 0
    %v2148 = vperm.slane %v2145, 1
    %v2215 = vunpack.c.l.b16 %v2081
    %v2216 = vunpack.c.h.b16 %v2081
    %v2217 = vunpack.c.l.b16 %v2082
    %v2218 = vunpack.c.h.b16 %v2082
    %v2219 = vunpack.c.l.b16 %v2083
    %v2220 = vunpack.c.h.b16 %v2083
    %v2221 = vunpack.c.l.b16 %v2084
    %v2222 = vunpack.c.h.b16 %v2084
    %v2223 = vunpack.c.l.b16 %v2085
    %v2224 = vunpack.c.h.b16 %v2085
    %v2225 = vunpack.c.l.b16 %v2086
    %v2226 = vunpack.c.h.b16 %v2086
    %v2227 = vunpack.c.l.b16 %v2087
    %v2228 = vunpack.c.h.b16 %v2087
    %v2229 = vunpack.c.l.b16 %v2088
    %v2230 = vunpack.c.h.b16 %v2088
    %v2231 = vunpack.c.l.b16 %v2089
    %v2232 = vunpack.c.h.b16 %v2089
    %v2233 = vunpack.c.l.b16 %v2090
    %v2234 = vunpack.c.h.b16 %v2090
    %v2235 = vunpack.c.l.b16 %v2091
    %v2236 = vunpack.c.h.b16 %v2091
    %v2237 = vunpack.c.l.b16 %v2092
    %v2238 = vunpack.c.h.b16 %v2092
    %v2239 = vunpack.c.l.b16 %v2093
    %v2240 = vunpack.c.h.b16 %v2093
    %v2241 = vunpack.c.l.b16 %v2094
    %v2242 = vunpack.c.h.b16 %v2094
    %v2243 = vunpack.c.l.b16 %v2095
    %v2244 = vunpack.c.h.b16 %v2095
    %v2245 = vunpack.c.l.b16 %v2096
    %v2246 = vunpack.c.h.b16 %v2096
    %v2247 = vunpack.c.l.b16 %v2097
    %v2248 = vunpack.c.h.b16 %v2097
    %v2249 = vunpack.c.l.b16 %v2098
    %v2250 = vunpack.c.h.b16 %v2098
    %v2251 = vunpack.c.l.b16 %v2099
    %v2252 = vunpack.c.h.b16 %v2099
    %v2253 = vunpack.c.l.b16 %v2100
    %v2254 = vunpack.c.h.b16 %v2100
    %v2255 = vunpack.c.l.b16 %v2101
    %v2256 = vunpack.c.h.b16 %v2101
    %v2257 = vunpack.c.l.b16 %v2102
    %v2258 = vunpack.c.h.b16 %v2102
    %v2259 = vunpack.c.l.b16 %v2103
    %v2260 = vunpack.c.h.b16 %v2103
    %v2261 = vunpack.c.l.b16 %v2104
    %v2262 = vunpack.c.h.b16 %v2104
    %v2263 = vunpack.c.l.b16 %v2105
    %v2264 = vunpack.c.h.b16 %v2105
    %v2265 = vunpack.c.l.b16 %v2106
    %v2266 = vunpack.c.h.b16 %v2106
    %v2267 = vunpack.c.l.b16 %v2107
    %v2268 = vunpack.c.h.b16 %v2107
    %v2269 = vunpack.c.l.b16 %v2108
    %v2270 = vunpack.c.h.b16 %v2108
    %v2271 = vunpack.c.l.b16 %v2109
    %v2272 = vunpack.c.h.b16 %v2109
    %v2273 = vunpack.c.l.b16 %v2110
    %v2274 = vunpack.c.h.b16 %v2110
    %v2275 = vunpack.c.l.b16 %v2111
    %v2276 = vunpack.c.h.b16 %v2111
    %v2277 = vunpack.c.l.b16 %v2112
    %v2278 = vunpack.c.h.b16 %v2112
    %v2279 = vunpack.c.l.b16 %v2113
    %v2280 = vunpack.c.h.b16 %v2113
    %v2281 = vunpack.c.l.b16 %v2114
    %v2282 = vunpack.c.h.b16 %v2114
    %v2283 = vunpack.c.l.b16 %v2115
    %v2284 = vunpack.c.h.b16 %v2115
    %v2285 = vunpack.c.l.b16 %v2116
    %v2286 = vunpack.c.h.b16 %v2116
    %v2287 = vunpack.c.l.b16 %v2117
    %v2288 = vunpack.c.h.b16 %v2117
    %v2289 = vunpack.c.l.b16 %v2118
    %v2290 = vunpack.c.h.b16 %v2118
    %v2291 = vunpack.c.l.b16 %v2119
    %v2292 = vunpack.c.h.b16 %v2119
    %v2293 = vunpack.c.l.b16 %v2120
    %v2294 = vunpack.c.h.b16 %v2120
    %v2295 = vunpack.c.l.b16 %v2121
    %v2296 = vunpack.c.h.b16 %v2121
    %v2297 = vunpack.c.l.b16 %v2122
    %v2298 = vunpack.c.h.b16 %v2122
    %v2299 = vunpack.c.l.b16 %v2123
    %v2300 = vunpack.c.h.b16 %v2123
    %v2301 = vunpack.c.l.b16 %v2124
    %v2302 = vunpack.c.h.b16 %v2124
    %v2303 = vunpack.c.l.b16 %v2125
    %v2304 = vunpack.c.h.b16 %v2125
    %v2305 = vunpack.c.l.b16 %v2126
    %v2306 = vunpack.c.h.b16 %v2126
    %v2307 = vunpack.c.l.b16 %v2127
    %v2308 = vunpack.c.h.b16 %v2127
    %v2309 = vunpack.c.l.b16 %v2128
    %v2310 = vunpack.c.h.b16 %v2128
    %v2311 = vunpack.c.l.b16 %v2129
    %v2312 = vunpack.c.h.b16 %v2129
    %v2313 = vunpack.c.l.b16 %v2130
    %v2314 = vunpack.c.h.b16 %v2130
    %v2315 = vunpack.c.l.b16 %v2131
    %v2316 = vunpack.c.h.b16 %v2131
    %v2317 = vunpack.c.l.b16 %v2132
    %v2318 = vunpack.c.h.b16 %v2132
    %v2319 = vunpack.c.l.b16 %v2133
    %v2320 = vunpack.c.h.b16 %v2133
    %v2321 = vunpack.c.l.b16 %v2134
    %v2322 = vunpack.c.h.b16 %v2134
    %v2323 = vunpack.c.l.b16 %v2135
    %v2324 = vunpack.c.h.b16 %v2135
    %v2325 = vunpack.c.l.b16 %v2136
    %v2326 = vunpack.c.h.b16 %v2136
    %v2327 = vunpack.c.l.b16 %v2137
    %v2328 = vunpack.c.h.b16 %v2137
    %v2329 = vunpack.c.l.b16 %v2138
    %v2330 = vunpack.c.h.b16 %v2138
    %v2331 = vunpack.c.l.b16 %v2139
    %v2332 = vunpack.c.h.b16 %v2139
    %v2333 = vunpack.c.l.b16 %v2140
    %v2334 = vunpack.c.h.b16 %v2140
    %v2335 = vunpack.c.l.b16 %v2141
    %v2336 = vunpack.c.h.b16 %v2141
    %v2337 = vunpack.c.l.b16 %v2142
    %v2338 = vunpack.c.h.b16 %v2142
    %v2339 = vunpack.c.l.b16 %v2143
    %v2340 = vunpack.c.h.b16 %v2143
    %v2341 = vunpack.c.l.b16 %v2144
    %v2342 = vunpack.c.h.b16 %v2144
    %v2343 = vpack.c.b16 %v2217, %v2215
    %v2344 = vpack.c.b16 %v2218, %v2216
    %v2345 = vpack.c.b16 %v2221, %v2219
    %v2346 = vpack.c.b16 %v2222, %v2220
    %v2347 = vpack.c.b16 %v2225, %v2223
    %v2348 = vpack.c.b16 %v2226, %v2224
    %v2349 = vpack.c.b16 %v2229, %v2227
    %v2350 = vpack.c.b16 %v2230, %v2228
    %v2351 = vpack.c.b16 %v2233, %v2231
    %v2352 = vpack.c.b16 %v2234, %v2232
    %v2353 = vpack.c.b16 %v2237, %v2235
    %v2354 = vpack.c.b16 %v2238, %v2236
    %v2355 = vpack.c.b16 %v2241, %v2239
    %v2356 = vpack.c.b16 %v2242, %v2240
    %v2357 = vpack.c.b16 %v2245, %v2243
    %v2358 = vpack.c.b16 %v2246, %v2244
    %v2359 = vpack.c.b16 %v2249, %v2247
    %v2360 = vpack.c.b16 %v2250, %v2248
    %v2361 = vpack.c.b16 %v2253, %v2251
    %v2362 = vpack.c.b16 %v2254, %v2252
    %v2363 = vpack.c.b16 %v2257, %v2255
    %v2364 = vpack.c.b16 %v2258, %v2256
    %v2365 = vpack.c.b16 %v2261, %v2259
    %v2366 = vpack.c.b16 %v2262, %v2260
    %v2367 = vpack.c.b16 %v2265, %v2263
    %v2368 = vpack.c.b16 %v2266, %v2264
    %v2369 = vpack.c.b16 %v2269, %v2267
    %v2370 = vpack.c.b16 %v2270, %v2268
    %v2371 = vpack.c.b16 %v2273, %v2271
    %v2372 = vpack.c.b16 %v2274, %v2272
    %v2373 = vpack.c.b16 %v2277, %v2275
    %v2374 = vpack.c.b16 %v2278, %v2276
    %v2375 = vpack.c.b16 %v2281, %v2279
    %v2376 = vpack.c.b16 %v2282, %v2280
    %v2377 = vpack.c.b16 %v2285, %v2283
    %v2378 = vpack.c.b16 %v2286, %v2284
    %v2379 = vpack.c.b16 %v2289, %v2287
    %v2380 = vpack.c.b16 %v2290, %v2288
    %v2381 = vpack.c.b16 %v2293, %v2291
    %v2382 = vpack.c.b16 %v2294, %v2292
    %v2383 = vpack.c.b16 %v2297, %v2295
    %v2384 = vpack.c.b16 %v2298, %v2296
    %v2385 = vpack.c.b16 %v2301, %v2299
    %v2386 = vpack.c.b16 %v2302, %v2300
    %v2387 = vpack.c.b16 %v2305, %v2303
    %v2388 = vpack.c.b16 %v2306, %v2304
    %v2389 = vpack.c.b16 %v2309, %v2307
    %v2390 = vpack.c.b16 %v2310, %v2308
    %v2391 = vpack.c.b16 %v2313, %v2311
    %v2392 = vpack.c.b16 %v2314, %v2312
    %v2393 = vpack.c.b16 %v2317, %v2315
    %v2394 = vpack.c.b16 %v2318, %v2316
    %v2395 = vpack.c.b16 %v2321, %v2319
    %v2396 = vpack.c.b16 %v2322, %v2320
    %v2397 = vpack.c.b16 %v2325, %v2323
    %v2398 = vpack.c.b16 %v2326, %v2324
    %v2399 = vpack.c.b16 %v2329, %v2327
    %v2400 = vpack.c.b16 %v2330, %v2328
    %v2401 = vpack.c.b16 %v2333, %v2331
    %v2402 = vpack.c.b16 %v2334, %v2332
    %v2403 = vpack.c.b16 %v2337, %v2335
    %v2404 = vpack.c.b16 %v2338, %v2336
    %v2405 = vpack.c.b16 %v2341, %v2339
    %v2406 = vpack.c.b16 %v2342, %v2340
    %2471 = vmatpush.bf16.msra.mxu0 %v2357
    %2472 = vmatpush.bf16.msra.mxu0 %v2355
    %2473 = vmatpush.bf16.msra.mxu0 %v2353
    %2474 = vmatpush.bf16.msra.mxu0 %v2351
    %2475 = vmatpush.bf16.msra.mxu0 %v2349
    %2476 = vmatpush.bf16.msra.mxu0 %v2347
    %2477 = vmatpush.bf16.msra.mxu0 %v2345
    %2478 = vmatpush.bf16.msra.mxu0 %v2343
    %2479 = vmatmul.bf16.gmra.mxu0 %v2077
    %v2480 = vpop.f32.mrf.mxu0
    %v2481 = vadd.f32 %v2147, %v2480
    %v2482 = vpop.f32.mrf.mxu0
    %2483 = vdwg.mxu0
    %2484 = vmatpush.bf16.msra.mxu0 %v2373
    %2485 = vmatpush.bf16.msra.mxu0 %v2371
    %2486 = vmatpush.bf16.msra.mxu0 %v2369
    %2487 = vmatpush.bf16.msra.mxu0 %v2367
    %2488 = vmatpush.bf16.msra.mxu0 %v2365
    %2489 = vmatpush.bf16.msra.mxu0 %v2363
    %2490 = vmatpush.bf16.msra.mxu0 %v2361
    %2491 = vmatpush.bf16.msra.mxu0 %v2359
    %2492 = vmatmul.bf16.gmra.mxu0 %v2078
    %v2493 = vpop.f32.mrf.mxu0
    %v2494 = vadd.f32 %v2481, %v2493
    %v2495 = vpop.f32.mrf.mxu0
    %2496 = vdwg.mxu0
    %2497 = vmatpush.bf16.msra.mxu0 %v2389
    %2498 = vmatpush.bf16.msra.mxu0 %v2387
    %2499 = vmatpush.bf16.msra.mxu0 %v2385
    %2500 = vmatpush.bf16.msra.mxu0 %v2383
    %2501 = vmatpush.bf16.msra.mxu0 %v2381
    %2502 = vmatpush.bf16.msra.mxu0 %v2379
    %2503 = vmatpush.bf16.msra.mxu0 %v2377
    %2504 = vmatpush.bf16.msra.mxu0 %v2375
    %2505 = vmatmul.bf16.gmra.mxu0 %v2079
    %v2506 = vpop.f32.mrf.mxu0
    %v2507 = vadd.f32 %v2494, %v2506
    %v2508 = vpop.f32.mrf.mxu0
    %2509 = vdwg.mxu0
    %2510 = vmatpush.bf16.msra.mxu0 %v2405
    %2511 = vmatpush.bf16.msra.mxu0 %v2403
    %2512 = vmatpush.bf16.msra.mxu0 %v2401
    %2513 = vmatpush.bf16.msra.mxu0 %v2399
    %2514 = vmatpush.bf16.msra.mxu0 %v2397
    %2515 = vmatpush.bf16.msra.mxu0 %v2395
    %2516 = vmatpush.bf16.msra.mxu0 %v2393
    %2517 = vmatpush.bf16.msra.mxu0 %v2391
    %2518 = vmatmul.bf16.gmra.mxu0 %v2080
    %v2519 = vpop.f32.mrf.mxu0
    %v2520 = vadd.f32 %v2507, %v2519
    %v2521 = vpop.f32.mrf.mxu0
    %2522 = vdwg.mxu0
    %2523 = vmatpush.bf16.msra.mxu0 %v2358
    %2524 = vmatpush.bf16.msra.mxu0 %v2356
    %2525 = vmatpush.bf16.msra.mxu0 %v2354
    %2526 = vmatpush.bf16.msra.mxu0 %v2352
    %2527 = vmatpush.bf16.msra.mxu0 %v2350
    %2528 = vmatpush.bf16.msra.mxu0 %v2348
    %2529 = vmatpush.bf16.msra.mxu0 %v2346
    %2530 = vmatpush.bf16.msra.mxu0 %v2344
    %2531 = vmatmul.bf16.gmra.mxu0 %v2077
    %v2532 = vpop.f32.mrf.mxu0
    %v2533 = vadd.f32 %v2148, %v2532
    %v2534 = vpop.f32.mrf.mxu0
    %2535 = vdwg.mxu0
    %2536 = vmatpush.bf16.msra.mxu0 %v2374
    %2537 = vmatpush.bf16.msra.mxu0 %v2372
    %2538 = vmatpush.bf16.msra.mxu0 %v2370
    %2539 = vmatpush.bf16.msra.mxu0 %v2368
    %2540 = vmatpush.bf16.msra.mxu0 %v2366
    %2541 = vmatpush.bf16.msra.mxu0 %v2364
    %2542 = vmatpush.bf16.msra.mxu0 %v2362
    %2543 = vmatpush.bf16.msra.mxu0 %v2360
    %2544 = vmatmul.bf16.gmra.mxu0 %v2078
    %v2545 = vpop.f32.mrf.mxu0
    %v2546 = vadd.f32 %v2533, %v2545
    %v2547 = vpop.f32.mrf.mxu0
    %2548 = vdwg.mxu0
    %2549 = vmatpush.bf16.msra.mxu0 %v2390
    %2550 = vmatpush.bf16.msra.mxu0 %v2388
    %2551 = vmatpush.bf16.msra.mxu0 %v2386
    %2552 = vmatpush.bf16.msra.mxu0 %v2384
    %2553 = vmatpush.bf16.msra.mxu0 %v2382
    %2554 = vmatpush.bf16.msra.mxu0 %v2380
    %2555 = vmatpush.bf16.msra.mxu0 %v2378
    %2556 = vmatpush.bf16.msra.mxu0 %v2376
    %2557 = vmatmul.bf16.gmra.mxu0 %v2079
    %v2558 = vpop.f32.mrf.mxu0
    %v2559 = vadd.f32 %v2546, %v2558
    %v2560 = vpop.f32.mrf.mxu0
    %2561 = vdwg.mxu0
    %2562 = vmatpush.bf16.msra.mxu0 %v2406
    %2563 = vmatpush.bf16.msra.mxu0 %v2404
    %2564 = vmatpush.bf16.msra.mxu0 %v2402
    %2565 = vmatpush.bf16.msra.mxu0 %v2400
    %2566 = vmatpush.bf16.msra.mxu0 %v2398
    %2567 = vmatpush.bf16.msra.mxu0 %v2396
    %2568 = vmatpush.bf16.msra.mxu0 %v2394
    %2569 = vmatpush.bf16.msra.mxu0 %v2392
    %2570 = vmatmul.bf16.gmra.mxu0 %v2080
    %v2571 = vpop.f32.mrf.mxu0
    %v2572 = vadd.f32 %v2559, %v2571
    %v2573 = vpop.f32.mrf.mxu0
    %2574 = vdwg.mxu0
    %v2575 = vmax.f32 %v2520, 0.0
    %v2576 = vmax.f32 %v2572, 0.0
    %v2577 = vpack.c.bf16 %v2575, %v2575
    %v2578 = vpack.c.bf16 %v2576, %v2576
    %v2579 = vld [vmem:[#allocation6] sm:$0xff]
    %v2580 = vld [vmem:[#allocation6 + $0x8] sm:$0xff]
    %v2581 = vld [vmem:[#allocation6 + $0x10] sm:$0xff]
    %v2582 = vld [vmem:[#allocation6 + $0x18] sm:$0xff]
    %v2583 = vld [vmem:[#allocation6 + $0x20] sm:$0xff]
    %v2584 = vld [vmem:[#allocation6 + $0x28] sm:$0xff]
    %v2585 = vld [vmem:[#allocation6 + $0x30] sm:$0xff]
    %v2586 = vld [vmem:[#allocation6 + $0x38] sm:$0xff]
    %v2587 = vld [vmem:[#allocation6 + $0x40] sm:$0xff]
    %v2588 = vld [vmem:[#allocation6 + $0x48] sm:$0xff]
    %v2589 = vld [vmem:[#allocation6 + $0x50] sm:$0xff]
    %v2590 = vld [vmem:[#allocation6 + $0x58] sm:$0xff]
    %v2591 = vld [vmem:[#allocation6 + $0x60] sm:$0xff]
    %v2592 = vld [vmem:[#allocation6 + $0x68] sm:$0xff]
    %v2593 = vld [vmem:[#allocation6 + $0x70] sm:$0xff]
    %v2594 = vld [vmem:[#allocation6 + $0x78] sm:$0xff]
    %v2595 = vld [vmem:[#allocation6 + $0x80] sm:$0xff]
    %v2596 = vld [vmem:[#allocation6 + $0x88] sm:$0xff]
    %v2597 = vld [vmem:[#allocation6 + $0x90] sm:$0xff]
    %v2598 = vld [vmem:[#allocation6 + $0x98] sm:$0xff]
    %v2599 = vld [vmem:[#allocation6 + $0xa0] sm:$0xff]
    %v2600 = vld [vmem:[#allocation6 + $0xa8] sm:$0xff]
    %v2601 = vld [vmem:[#allocation6 + $0xb0] sm:$0xff]
    %v2602 = vld [vmem:[#allocation6 + $0xb8] sm:$0xff]
    %v2603 = vld [vmem:[#allocation6 + $0xc0] sm:$0xff]
    %v2604 = vld [vmem:[#allocation6 + $0xc8] sm:$0xff]
    %v2605 = vld [vmem:[#allocation6 + $0xd0] sm:$0xff]
    %v2606 = vld [vmem:[#allocation6 + $0xd8] sm:$0xff]
    %v2607 = vld [vmem:[#allocation6 + $0xe0] sm:$0xff]
    %v2608 = vld [vmem:[#allocation6 + $0xe8] sm:$0xff]
    %v2609 = vld [vmem:[#allocation6 + $0xf0] sm:$0xff]
    %v2610 = vld [vmem:[#allocation6 + $0xf8] sm:$0xff]
    %v2611 = vld [vmem:[#allocation6 + $0x100] sm:$0xff]
    %v2612 = vld [vmem:[#allocation6 + $0x108] sm:$0xff]
    %v2613 = vld [vmem:[#allocation6 + $0x110] sm:$0xff]
    %v2614 = vld [vmem:[#allocation6 + $0x118] sm:$0xff]
    %v2615 = vld [vmem:[#allocation6 + $0x120] sm:$0xff]
    %v2616 = vld [vmem:[#allocation6 + $0x128] sm:$0xff]
    %v2617 = vld [vmem:[#allocation6 + $0x130] sm:$0xff]
    %v2618 = vld [vmem:[#allocation6 + $0x138] sm:$0xff]
    %v2619 = vld [vmem:[#allocation6 + $0x140] sm:$0xff]
    %v2620 = vld [vmem:[#allocation6 + $0x148] sm:$0xff]
    %v2621 = vld [vmem:[#allocation6 + $0x150] sm:$0xff]
    %v2622 = vld [vmem:[#allocation6 + $0x158] sm:$0xff]
    %v2623 = vld [vmem:[#allocation6 + $0x160] sm:$0xff]
    %v2624 = vld [vmem:[#allocation6 + $0x168] sm:$0xff]
    %v2625 = vld [vmem:[#allocation6 + $0x170] sm:$0xff]
    %v2626 = vld [vmem:[#allocation6 + $0x178] sm:$0xff]
    %v2627 = vld [vmem:[#allocation6 + $0x180] sm:$0xff]
    %v2628 = vld [vmem:[#allocation6 + $0x188] sm:$0xff]
    %v2629 = vld [vmem:[#allocation6 + $0x190] sm:$0xff]
    %v2630 = vld [vmem:[#allocation6 + $0x198] sm:$0xff]
    %v2631 = vld [vmem:[#allocation6 + $0x1a0] sm:$0xff]
    %v2632 = vld [vmem:[#allocation6 + $0x1a8] sm:$0xff]
    %v2633 = vld [vmem:[#allocation6 + $0x1b0] sm:$0xff]
    %v2634 = vld [vmem:[#allocation6 + $0x1b8] sm:$0xff]
    %v2635 = vld [vmem:[#allocation6 + $0x1c0] sm:$0xff]
    %v2636 = vld [vmem:[#allocation6 + $0x1c8] sm:$0xff]
    %v2637 = vld [vmem:[#allocation6 + $0x1d0] sm:$0xff]
    %v2638 = vld [vmem:[#allocation6 + $0x1d8] sm:$0xff]
    %v2639 = vld [vmem:[#allocation6 + $0x1e0] sm:$0xff]
    %v2640 = vld [vmem:[#allocation6 + $0x1e8] sm:$0xff]
    %v2641 = vld [vmem:[#allocation6 + $0x1f0] sm:$0xff]
    %v2642 = vld [vmem:[#allocation6 + $0x1f8] sm:$0xff]
    %v2643 = vld [vmem:[%s6] sm:$0xf]
    %v2645 = vperm.slane %v2643, 0
    %v2646 = vperm.slane %v2643, 1
    %v2647 = vperm.slane %v2643, 2
    %v2648 = vperm.slane %v2643, 3
    %v2717 = vunpack.c.l.b16 %v2579
    %v2718 = vunpack.c.h.b16 %v2579
    %v2719 = vunpack.c.l.b16 %v2580
    %v2720 = vunpack.c.h.b16 %v2580
    %v2721 = vunpack.c.l.b16 %v2581
    %v2722 = vunpack.c.h.b16 %v2581
    %v2723 = vunpack.c.l.b16 %v2582
    %v2724 = vunpack.c.h.b16 %v2582
    %v2725 = vunpack.c.l.b16 %v2583
    %v2726 = vunpack.c.h.b16 %v2583
    %v2727 = vunpack.c.l.b16 %v2584
    %v2728 = vunpack.c.h.b16 %v2584
    %v2729 = vunpack.c.l.b16 %v2585
    %v2730 = vunpack.c.h.b16 %v2585
    %v2731 = vunpack.c.l.b16 %v2586
    %v2732 = vunpack.c.h.b16 %v2586
    %v2733 = vunpack.c.l.b16 %v2587
    %v2734 = vunpack.c.h.b16 %v2587
    %v2735 = vunpack.c.l.b16 %v2588
    %v2736 = vunpack.c.h.b16 %v2588
    %v2737 = vunpack.c.l.b16 %v2589
    %v2738 = vunpack.c.h.b16 %v2589
    %v2739 = vunpack.c.l.b16 %v2590
    %v2740 = vunpack.c.h.b16 %v2590
    %v2741 = vunpack.c.l.b16 %v2591
    %v2742 = vunpack.c.h.b16 %v2591
    %v2743 = vunpack.c.l.b16 %v2592
    %v2744 = vunpack.c.h.b16 %v2592
    %v2745 = vunpack.c.l.b16 %v2593
    %v2746 = vunpack.c.h.b16 %v2593
    %v2747 = vunpack.c.l.b16 %v2594
    %v2748 = vunpack.c.h.b16 %v2594
    %v2749 = vunpack.c.l.b16 %v2595
    %v2750 = vunpack.c.h.b16 %v2595
    %v2751 = vunpack.c.l.b16 %v2596
    %v2752 = vunpack.c.h.b16 %v2596
    %v2753 = vunpack.c.l.b16 %v2597
    %v2754 = vunpack.c.h.b16 %v2597
    %v2755 = vunpack.c.l.b16 %v2598
    %v2756 = vunpack.c.h.b16 %v2598
    %v2757 = vunpack.c.l.b16 %v2599
    %v2758 = vunpack.c.h.b16 %v2599
    %v2759 = vunpack.c.l.b16 %v2600
    %v2760 = vunpack.c.h.b16 %v2600
    %v2761 = vunpack.c.l.b16 %v2601
    %v2762 = vunpack.c.h.b16 %v2601
    %v2763 = vunpack.c.l.b16 %v2602
    %v2764 = vunpack.c.h.b16 %v2602
    %v2765 = vunpack.c.l.b16 %v2603
    %v2766 = vunpack.c.h.b16 %v2603
    %v2767 = vunpack.c.l.b16 %v2604
    %v2768 = vunpack.c.h.b16 %v2604
    %v2769 = vunpack.c.l.b16 %v2605
    %v2770 = vunpack.c.h.b16 %v2605
    %v2771 = vunpack.c.l.b16 %v2606
    %v2772 = vunpack.c.h.b16 %v2606
    %v2773 = vunpack.c.l.b16 %v2607
    %v2774 = vunpack.c.h.b16 %v2607
    %v2775 = vunpack.c.l.b16 %v2608
    %v2776 = vunpack.c.h.b16 %v2608
    %v2777 = vunpack.c.l.b16 %v2609
    %v2778 = vunpack.c.h.b16 %v2609
    %v2779 = vunpack.c.l.b16 %v2610
    %v2780 = vunpack.c.h.b16 %v2610
    %v2781 = vunpack.c.l.b16 %v2611
    %v2782 = vunpack.c.h.b16 %v2611
    %v2783 = vunpack.c.l.b16 %v2612
    %v2784 = vunpack.c.h.b16 %v2612
    %v2785 = vunpack.c.l.b16 %v2613
    %v2786 = vunpack.c.h.b16 %v2613
    %v2787 = vunpack.c.l.b16 %v2614
    %v2788 = vunpack.c.h.b16 %v2614
    %v2789 = vunpack.c.l.b16 %v2615
    %v2790 = vunpack.c.h.b16 %v2615
    %v2791 = vunpack.c.l.b16 %v2616
    %v2792 = vunpack.c.h.b16 %v2616
    %v2793 = vunpack.c.l.b16 %v2617
    %v2794 = vunpack.c.h.b16 %v2617
    %v2795 = vunpack.c.l.b16 %v2618
    %v2796 = vunpack.c.h.b16 %v2618
    %v2797 = vunpack.c.l.b16 %v2619
    %v2798 = vunpack.c.h.b16 %v2619
    %v2799 = vunpack.c.l.b16 %v2620
    %v2800 = vunpack.c.h.b16 %v2620
    %v2801 = vunpack.c.l.b16 %v2621
    %v2802 = vunpack.c.h.b16 %v2621
    %v2803 = vunpack.c.l.b16 %v2622
    %v2804 = vunpack.c.h.b16 %v2622
    %v2805 = vunpack.c.l.b16 %v2623
    %v2806 = vunpack.c.h.b16 %v2623
    %v2807 = vunpack.c.l.b16 %v2624
    %v2808 = vunpack.c.h.b16 %v2624
    %v2809 = vunpack.c.l.b16 %v2625
    %v2810 = vunpack.c.h.b16 %v2625
    %v2811 = vunpack.c.l.b16 %v2626
    %v2812 = vunpack.c.h.b16 %v2626
    %v2813 = vunpack.c.l.b16 %v2627
    %v2814 = vunpack.c.h.b16 %v2627
    %v2815 = vunpack.c.l.b16 %v2628
    %v2816 = vunpack.c.h.b16 %v2628
    %v2817 = vunpack.c.l.b16 %v2629
    %v2818 = vunpack.c.h.b16 %v2629
    %v2819 = vunpack.c.l.b16 %v2630
    %v2820 = vunpack.c.h.b16 %v2630
    %v2821 = vunpack.c.l.b16 %v2631
    %v2822 = vunpack.c.h.b16 %v2631
    %v2823 = vunpack.c.l.b16 %v2632
    %v2824 = vunpack.c.h.b16 %v2632
    %v2825 = vunpack.c.l.b16 %v2633
    %v2826 = vunpack.c.h.b16 %v2633
    %v2827 = vunpack.c.l.b16 %v2634
    %v2828 = vunpack.c.h.b16 %v2634
    %v2829 = vunpack.c.l.b16 %v2635
    %v2830 = vunpack.c.h.b16 %v2635
    %v2831 = vunpack.c.l.b16 %v2636
    %v2832 = vunpack.c.h.b16 %v2636
    %v2833 = vunpack.c.l.b16 %v2637
    %v2834 = vunpack.c.h.b16 %v2637
    %v2835 = vunpack.c.l.b16 %v2638
    %v2836 = vunpack.c.h.b16 %v2638
    %v2837 = vunpack.c.l.b16 %v2639
    %v2838 = vunpack.c.h.b16 %v2639
    %v2839 = vunpack.c.l.b16 %v2640
    %v2840 = vunpack.c.h.b16 %v2640
    %v2841 = vunpack.c.l.b16 %v2641
    %v2842 = vunpack.c.h.b16 %v2641
    %v2843 = vunpack.c.l.b16 %v2642
    %v2844 = vunpack.c.h.b16 %v2642
    %v2845 = vpack.c.b16 %v2721, %v2717
    %v2846 = vpack.c.b16 %v2722, %v2718
    %v2847 = vpack.c.b16 %v2723, %v2719
    %v2848 = vpack.c.b16 %v2724, %v2720
    %v2849 = vpack.c.b16 %v2729, %v2725
    %v2850 = vpack.c.b16 %v2730, %v2726
    %v2851 = vpack.c.b16 %v2731, %v2727
    %v2852 = vpack.c.b16 %v2732, %v2728
    %v2853 = vpack.c.b16 %v2737, %v2733
    %v2854 = vpack.c.b16 %v2738, %v2734
    %v2855 = vpack.c.b16 %v2739, %v2735
    %v2856 = vpack.c.b16 %v2740, %v2736
    %v2857 = vpack.c.b16 %v2745, %v2741
    %v2858 = vpack.c.b16 %v2746, %v2742
    %v2859 = vpack.c.b16 %v2747, %v2743
    %v2860 = vpack.c.b16 %v2748, %v2744
    %v2861 = vpack.c.b16 %v2753, %v2749
    %v2862 = vpack.c.b16 %v2754, %v2750
    %v2863 = vpack.c.b16 %v2755, %v2751
    %v2864 = vpack.c.b16 %v2756, %v2752
    %v2865 = vpack.c.b16 %v2761, %v2757
    %v2866 = vpack.c.b16 %v2762, %v2758
    %v2867 = vpack.c.b16 %v2763, %v2759
    %v2868 = vpack.c.b16 %v2764, %v2760
    %v2869 = vpack.c.b16 %v2769, %v2765
    %v2870 = vpack.c.b16 %v2770, %v2766
    %v2871 = vpack.c.b16 %v2771, %v2767
    %v2872 = vpack.c.b16 %v2772, %v2768
    %v2873 = vpack.c.b16 %v2777, %v2773
    %v2874 = vpack.c.b16 %v2778, %v2774
    %v2875 = vpack.c.b16 %v2779, %v2775
    %v2876 = vpack.c.b16 %v2780, %v2776
    %v2877 = vpack.c.b16 %v2785, %v2781
    %v2878 = vpack.c.b16 %v2786, %v2782
    %v2879 = vpack.c.b16 %v2787, %v2783
    %v2880 = vpack.c.b16 %v2788, %v2784
    %v2881 = vpack.c.b16 %v2793, %v2789
    %v2882 = vpack.c.b16 %v2794, %v2790
    %v2883 = vpack.c.b16 %v2795, %v2791
    %v2884 = vpack.c.b16 %v2796, %v2792
    %v2885 = vpack.c.b16 %v2801, %v2797
    %v2886 = vpack.c.b16 %v2802, %v2798
    %v2887 = vpack.c.b16 %v2803, %v2799
    %v2888 = vpack.c.b16 %v2804, %v2800
    %v2889 = vpack.c.b16 %v2809, %v2805
    %v2890 = vpack.c.b16 %v2810, %v2806
    %v2891 = vpack.c.b16 %v2811, %v2807
    %v2892 = vpack.c.b16 %v2812, %v2808
    %v2893 = vpack.c.b16 %v2817, %v2813
    %v2894 = vpack.c.b16 %v2818, %v2814
    %v2895 = vpack.c.b16 %v2819, %v2815
    %v2896 = vpack.c.b16 %v2820, %v2816
    %v2897 = vpack.c.b16 %v2825, %v2821
    %v2898 = vpack.c.b16 %v2826, %v2822
    %v2899 = vpack.c.b16 %v2827, %v2823
    %v2900 = vpack.c.b16 %v2828, %v2824
    %v2901 = vpack.c.b16 %v2833, %v2829
    %v2902 = vpack.c.b16 %v2834, %v2830
    %v2903 = vpack.c.b16 %v2835, %v2831
    %v2904 = vpack.c.b16 %v2836, %v2832
    %v2905 = vpack.c.b16 %v2841, %v2837
    %v2906 = vpack.c.b16 %v2842, %v2838
    %v2907 = vpack.c.b16 %v2843, %v2839
    %v2908 = vpack.c.b16 %v2844, %v2840
    %2973 = vmatpush.bf16.msra.mxu0 %v2873
    %2974 = vmatpush.bf16.msra.mxu0 %v2869
    %2975 = vmatpush.bf16.msra.mxu0 %v2865
    %2976 = vmatpush.bf16.msra.mxu0 %v2861
    %2977 = vmatpush.bf16.msra.mxu0 %v2857
    %2978 = vmatpush.bf16.msra.mxu0 %v2853
    %2979 = vmatpush.bf16.msra.mxu0 %v2849
    %2980 = vmatpush.bf16.msra.mxu0 %v2845
    %2981 = vmatmul.bf16.gmra.mxu0 %v2577
    %v2982 = vpop.f32.mrf.mxu0
    %v2983 = vadd.f32 %v2645, %v2982
    %v2984 = vpop.f32.mrf.mxu0
    %2985 = vdwg.mxu0
    %2986 = vmatpush.bf16.msra.mxu0 %v2905
    %2987 = vmatpush.bf16.msra.mxu0 %v2901
    %2988 = vmatpush.bf16.msra.mxu0 %v2897
    %2989 = vmatpush.bf16.msra.mxu0 %v2893
    %2990 = vmatpush.bf16.msra.mxu0 %v2889
    %2991 = vmatpush.bf16.msra.mxu0 %v2885
    %2992 = vmatpush.bf16.msra.mxu0 %v2881
    %2993 = vmatpush.bf16.msra.mxu0 %v2877
    %2994 = vmatmul.bf16.gmra.mxu0 %v2578
    %v2995 = vpop.f32.mrf.mxu0
    %v2996 = vadd.f32 %v2983, %v2995
    %v2997 = vpop.f32.mrf.mxu0
    %2998 = vdwg.mxu0
    %2999 = vmatpush.bf16.msra.mxu0 %v2874
    %3000 = vmatpush.bf16.msra.mxu0 %v2870
    %3001 = vmatpush.bf16.msra.mxu0 %v2866
    %3002 = vmatpush.bf16.msra.mxu0 %v2862
    %3003 = vmatpush.bf16.msra.mxu0 %v2858
    %3004 = vmatpush.bf16.msra.mxu0 %v2854
    %3005 = vmatpush.bf16.msra.mxu0 %v2850
    %3006 = vmatpush.bf16.msra.mxu0 %v2846
    %3007 = vmatmul.bf16.gmra.mxu0 %v2577
    %v3008 = vpop.f32.mrf.mxu0
    %v3009 = vadd.f32 %v2646, %v3008
    %v3010 = vpop.f32.mrf.mxu0
    %3011 = vdwg.mxu0
    %3012 = vmatpush.bf16.msra.mxu0 %v2906
    %3013 = vmatpush.bf16.msra.mxu0 %v2902
    %3014 = vmatpush.bf16.msra.mxu0 %v2898
    %3015 = vmatpush.bf16.msra.mxu0 %v2894
    %3016 = vmatpush.bf16.msra.mxu0 %v2890
    %3017 = vmatpush.bf16.msra.mxu0 %v2886
    %3018 = vmatpush.bf16.msra.mxu0 %v2882
    %3019 = vmatpush.bf16.msra.mxu0 %v2878
    %3020 = vmatmul.bf16.gmra.mxu0 %v2578
    %v3021 = vpop.f32.mrf.mxu0
    %v3022 = vadd.f32 %v3009, %v3021
    %v3023 = vpop.f32.mrf.mxu0
    %3024 = vdwg.mxu0
    %3025 = vmatpush.bf16.msra.mxu0 %v2875
    %3026 = vmatpush.bf16.msra.mxu0 %v2871
    %3027 = vmatpush.bf16.msra.mxu0 %v2867
    %3028 = vmatpush.bf16.msra.mxu0 %v2863
    %3029 = vmatpush.bf16.msra.mxu0 %v2859
    %3030 = vmatpush.bf16.msra.mxu0 %v2855
    %3031 = vmatpush.bf16.msra.mxu0 %v2851
    %3032 = vmatpush.bf16.msra.mxu0 %v2847
    %3033 = vmatmul.bf16.gmra.mxu0 %v2577
    %v3034 = vpop.f32.mrf.mxu0
    %v3035 = vadd.f32 %v2647, %v3034
    %v3036 = vpop.f32.mrf.mxu0
    %3037 = vdwg.mxu0
    %3038 = vmatpush.bf16.msra.mxu0 %v2907
    %3039 = vmatpush.bf16.msra.mxu0 %v2903
    %3040 = vmatpush.bf16.msra.mxu0 %v2899
    %3041 = vmatpush.bf16.msra.mxu0 %v2895
    %3042 = vmatpush.bf16.msra.mxu0 %v2891
    %3043 = vmatpush.bf16.msra.mxu0 %v2887
    %3044 = vmatpush.bf16.msra.mxu0 %v2883
    %3045 = vmatpush.bf16.msra.mxu0 %v2879
    %3046 = vmatmul.bf16.gmra.mxu0 %v2578
    %v3047 = vpop.f32.mrf.mxu0
    %v3048 = vadd.f32 %v3035, %v3047
    %v3049 = vpop.f32.mrf.mxu0
    %3050 = vdwg.mxu0
    %3051 = vmatpush.bf16.msra.mxu0 %v2876
    %3052 = vmatpush.bf16.msra.mxu0 %v2872
    %3053 = vmatpush.bf16.msra.mxu0 %v2868
    %3054 = vmatpush.bf16.msra.mxu0 %v2864
    %3055 = vmatpush.bf16.msra.mxu0 %v2860
    %3056 = vmatpush.bf16.msra.mxu0 %v2856
    %3057 = vmatpush.bf16.msra.mxu0 %v2852
    %3058 = vmatpush.bf16.msra.mxu0 %v2848
    %3059 = vmatmul.bf16.gmra.mxu0 %v2577
    %v3060 = vpop.f32.mrf.mxu0
    %v3061 = vadd.f32 %v2648, %v3060
    %v3062 = vpop.f32.mrf.mxu0
    %3063 = vdwg.mxu0
    %3064 = vmatpush.bf16.msra.mxu0 %v2908
    %3065 = vmatpush.bf16.msra.mxu0 %v2904
    %3066 = vmatpush.bf16.msra.mxu0 %v2900
    %3067 = vmatpush.bf16.msra.mxu0 %v2896
    %3068 = vmatpush.bf16.msra.mxu0 %v2892
    %3069 = vmatpush.bf16.msra.mxu0 %v2888
    %3070 = vmatpush.bf16.msra.mxu0 %v2884
    %3071 = vmatpush.bf16.msra.mxu0 %v2880
    %3072 = vmatmul.bf16.gmra.mxu0 %v2578
    %v3073 = vpop.f32.mrf.mxu0
    %v3074 = vadd.f32 %v3061, %v3073
    %v3075 = vpop.f32.mrf.mxu0
    %3076 = vdwg.mxu0
    %v3077 = vmax.f32 %v2996, 0.0
    %v3078 = vmax.f32 %v3022, 0.0
    %v3079 = vmax.f32 %v3048, 0.0
    %v3080 = vmax.f32 %v3074, 0.0
    %v3081 = vpack.c.bf16 %v3077, %v3077
    %v3082 = vpack.c.bf16 %v3078, %v3078
    %v3083 = vpack.c.bf16 %v3079, %v3079
    %v3084 = vpack.c.bf16 %v3080, %v3080
    %v3085 = vld [vmem:[#allocation7] sm:$0xff]
    %v3086 = vld [vmem:[#allocation7 + $0x8] sm:$0xff]
    %v3087 = vld [vmem:[#allocation7 + $0x10] sm:$0xff]
    %v3088 = vld [vmem:[#allocation7 + $0x18] sm:$0xff]
    %v3089 = vld [vmem:[#allocation7 + $0x20] sm:$0xff]
    %v3090 = vld [vmem:[#allocation7 + $0x28] sm:$0xff]
    %v3091 = vld [vmem:[#allocation7 + $0x30] sm:$0xff]
    %v3092 = vld [vmem:[#allocation7 + $0x38] sm:$0xff]
    %v3093 = vld [vmem:[#allocation7 + $0x40] sm:$0xff]
    %v3094 = vld [vmem:[#allocation7 + $0x48] sm:$0xff]
    %v3095 = vld [vmem:[#allocation7 + $0x50] sm:$0xff]
    %v3096 = vld [vmem:[#allocation7 + $0x58] sm:$0xff]
    %v3097 = vld [vmem:[#allocation7 + $0x60] sm:$0xff]
    %v3098 = vld [vmem:[#allocation7 + $0x68] sm:$0xff]
    %v3099 = vld [vmem:[#allocation7 + $0x70] sm:$0xff]
    %v3100 = vld [vmem:[#allocation7 + $0x78] sm:$0xff]
    %v3101 = vld [vmem:[#allocation7 + $0x80] sm:$0xff]
    %v3102 = vld [vmem:[#allocation7 + $0x88] sm:$0xff]
    %v3103 = vld [vmem:[#allocation7 + $0x90] sm:$0xff]
    %v3104 = vld [vmem:[#allocation7 + $0x98] sm:$0xff]
    %v3105 = vld [vmem:[#allocation7 + $0xa0] sm:$0xff]
    %v3106 = vld [vmem:[#allocation7 + $0xa8] sm:$0xff]
    %v3107 = vld [vmem:[#allocation7 + $0xb0] sm:$0xff]
    %v3108 = vld [vmem:[#allocation7 + $0xb8] sm:$0xff]
    %v3109 = vld [vmem:[#allocation7 + $0xc0] sm:$0xff]
    %v3110 = vld [vmem:[#allocation7 + $0xc8] sm:$0xff]
    %v3111 = vld [vmem:[#allocation7 + $0xd0] sm:$0xff]
    %v3112 = vld [vmem:[#allocation7 + $0xd8] sm:$0xff]
    %v3113 = vld [vmem:[#allocation7 + $0xe0] sm:$0xff]
    %v3114 = vld [vmem:[#allocation7 + $0xe8] sm:$0xff]
    %v3115 = vld [vmem:[#allocation7 + $0xf0] sm:$0xff]
    %v3116 = vld [vmem:[#allocation7 + $0xf8] sm:$0xff]
    %v3117 = vld [vmem:[#allocation7 + $0x100] sm:$0xff]
    %v3118 = vld [vmem:[#allocation7 + $0x108] sm:$0xff]
    %v3119 = vld [vmem:[#allocation7 + $0x110] sm:$0xff]
    %v3120 = vld [vmem:[#allocation7 + $0x118] sm:$0xff]
    %v3121 = vld [vmem:[#allocation7 + $0x120] sm:$0xff]
    %v3122 = vld [vmem:[#allocation7 + $0x128] sm:$0xff]
    %v3123 = vld [vmem:[#allocation7 + $0x130] sm:$0xff]
    %v3124 = vld [vmem:[#allocation7 + $0x138] sm:$0xff]
    %v3125 = vld [vmem:[#allocation7 + $0x140] sm:$0xff]
    %v3126 = vld [vmem:[#allocation7 + $0x148] sm:$0xff]
    %v3127 = vld [vmem:[#allocation7 + $0x150] sm:$0xff]
    %v3128 = vld [vmem:[#allocation7 + $0x158] sm:$0xff]
    %v3129 = vld [vmem:[#allocation7 + $0x160] sm:$0xff]
    %v3130 = vld [vmem:[#allocation7 + $0x168] sm:$0xff]
    %v3131 = vld [vmem:[#allocation7 + $0x170] sm:$0xff]
    %v3132 = vld [vmem:[#allocation7 + $0x178] sm:$0xff]
    %v3133 = vld [vmem:[#allocation7 + $0x180] sm:$0xff]
    %v3134 = vld [vmem:[#allocation7 + $0x188] sm:$0xff]
    %v3135 = vld [vmem:[#allocation7 + $0x190] sm:$0xff]
    %v3136 = vld [vmem:[#allocation7 + $0x198] sm:$0xff]
    %v3137 = vld [vmem:[#allocation7 + $0x1a0] sm:$0xff]
    %v3138 = vld [vmem:[#allocation7 + $0x1a8] sm:$0xff]
    %v3139 = vld [vmem:[#allocation7 + $0x1b0] sm:$0xff]
    %v3140 = vld [vmem:[#allocation7 + $0x1b8] sm:$0xff]
    %v3141 = vld [vmem:[#allocation7 + $0x1c0] sm:$0xff]
    %v3142 = vld [vmem:[#allocation7 + $0x1c8] sm:$0xff]
    %v3143 = vld [vmem:[#allocation7 + $0x1d0] sm:$0xff]
    %v3144 = vld [vmem:[#allocation7 + $0x1d8] sm:$0xff]
    %v3145 = vld [vmem:[#allocation7 + $0x1e0] sm:$0xff]
    %v3146 = vld [vmem:[#allocation7 + $0x1e8] sm:$0xff]
    %v3147 = vld [vmem:[#allocation7 + $0x1f0] sm:$0xff]
    %v3148 = vld [vmem:[#allocation7 + $0x1f8] sm:$0xff]
    %v3149 = vld [vmem:[#allocation7 + $0x200] sm:$0xff]
    %v3150 = vld [vmem:[#allocation7 + $0x208] sm:$0xff]
    %v3151 = vld [vmem:[#allocation7 + $0x210] sm:$0xff]
    %v3152 = vld [vmem:[#allocation7 + $0x218] sm:$0xff]
    %v3153 = vld [vmem:[#allocation7 + $0x220] sm:$0xff]
    %v3154 = vld [vmem:[#allocation7 + $0x228] sm:$0xff]
    %v3155 = vld [vmem:[#allocation7 + $0x230] sm:$0xff]
    %v3156 = vld [vmem:[#allocation7 + $0x238] sm:$0xff]
    %v3157 = vld [vmem:[#allocation7 + $0x240] sm:$0xff]
    %v3158 = vld [vmem:[#allocation7 + $0x248] sm:$0xff]
    %v3159 = vld [vmem:[#allocation7 + $0x250] sm:$0xff]
    %v3160 = vld [vmem:[#allocation7 + $0x258] sm:$0xff]
    %v3161 = vld [vmem:[#allocation7 + $0x260] sm:$0xff]
    %v3162 = vld [vmem:[#allocation7 + $0x268] sm:$0xff]
    %v3163 = vld [vmem:[#allocation7 + $0x270] sm:$0xff]
    %v3164 = vld [vmem:[#allocation7 + $0x278] sm:$0xff]
    %v3165 = vld [vmem:[#allocation7 + $0x280] sm:$0xff]
    %v3166 = vld [vmem:[#allocation7 + $0x288] sm:$0xff]
    %v3167 = vld [vmem:[#allocation7 + $0x290] sm:$0xff]
    %v3168 = vld [vmem:[#allocation7 + $0x298] sm:$0xff]
    %v3169 = vld [vmem:[#allocation7 + $0x2a0] sm:$0xff]
    %v3170 = vld [vmem:[#allocation7 + $0x2a8] sm:$0xff]
    %v3171 = vld [vmem:[#allocation7 + $0x2b0] sm:$0xff]
    %v3172 = vld [vmem:[#allocation7 + $0x2b8] sm:$0xff]
    %v3173 = vld [vmem:[#allocation7 + $0x2c0] sm:$0xff]
    %v3174 = vld [vmem:[#allocation7 + $0x2c8] sm:$0xff]
    %v3175 = vld [vmem:[#allocation7 + $0x2d0] sm:$0xff]
    %v3176 = vld [vmem:[#allocation7 + $0x2d8] sm:$0xff]
    %v3177 = vld [vmem:[#allocation7 + $0x2e0] sm:$0xff]
    %v3178 = vld [vmem:[#allocation7 + $0x2e8] sm:$0xff]
    %v3179 = vld [vmem:[#allocation7 + $0x2f0] sm:$0xff]
    %v3180 = vld [vmem:[#allocation7 + $0x2f8] sm:$0xff]
    %v3181 = vld [vmem:[#allocation7 + $0x300] sm:$0xff]
    %v3182 = vld [vmem:[#allocation7 + $0x308] sm:$0xff]
    %v3183 = vld [vmem:[#allocation7 + $0x310] sm:$0xff]
    %v3184 = vld [vmem:[#allocation7 + $0x318] sm:$0xff]
    %v3185 = vld [vmem:[#allocation7 + $0x320] sm:$0xff]
    %v3186 = vld [vmem:[#allocation7 + $0x328] sm:$0xff]
    %v3187 = vld [vmem:[#allocation7 + $0x330] sm:$0xff]
    %v3188 = vld [vmem:[#allocation7 + $0x338] sm:$0xff]
    %v3189 = vld [vmem:[#allocation7 + $0x340] sm:$0xff]
    %v3190 = vld [vmem:[#allocation7 + $0x348] sm:$0xff]
    %v3191 = vld [vmem:[#allocation7 + $0x350] sm:$0xff]
    %v3192 = vld [vmem:[#allocation7 + $0x358] sm:$0xff]
    %v3193 = vld [vmem:[#allocation7 + $0x360] sm:$0xff]
    %v3194 = vld [vmem:[#allocation7 + $0x368] sm:$0xff]
    %v3195 = vld [vmem:[#allocation7 + $0x370] sm:$0xff]
    %v3196 = vld [vmem:[#allocation7 + $0x378] sm:$0xff]
    %v3197 = vld [vmem:[#allocation7 + $0x380] sm:$0xff]
    %v3198 = vld [vmem:[#allocation7 + $0x388] sm:$0xff]
    %v3199 = vld [vmem:[#allocation7 + $0x390] sm:$0xff]
    %v3200 = vld [vmem:[#allocation7 + $0x398] sm:$0xff]
    %v3201 = vld [vmem:[#allocation7 + $0x3a0] sm:$0xff]
    %v3202 = vld [vmem:[#allocation7 + $0x3a8] sm:$0xff]
    %v3203 = vld [vmem:[#allocation7 + $0x3b0] sm:$0xff]
    %v3204 = vld [vmem:[#allocation7 + $0x3b8] sm:$0xff]
    %v3205 = vld [vmem:[#allocation7 + $0x3c0] sm:$0xff]
    %v3206 = vld [vmem:[#allocation7 + $0x3c8] sm:$0xff]
    %v3207 = vld [vmem:[#allocation7 + $0x3d0] sm:$0xff]
    %v3208 = vld [vmem:[#allocation7 + $0x3d8] sm:$0xff]
    %v3209 = vld [vmem:[#allocation7 + $0x3e0] sm:$0xff]
    %v3210 = vld [vmem:[#allocation7 + $0x3e8] sm:$0xff]
    %v3211 = vld [vmem:[#allocation7 + $0x3f0] sm:$0xff]
    %v3212 = vld [vmem:[#allocation7 + $0x3f8] sm:$0xff]
    %v3213 = vld [vmem:[#allocation7 + $0x400] sm:$0xff]
    %v3214 = vld [vmem:[#allocation7 + $0x408] sm:$0xff]
    %v3215 = vld [vmem:[#allocation7 + $0x410] sm:$0xff]
    %v3216 = vld [vmem:[#allocation7 + $0x418] sm:$0xff]
    %v3217 = vld [vmem:[#allocation7 + $0x420] sm:$0xff]
    %v3218 = vld [vmem:[#allocation7 + $0x428] sm:$0xff]
    %v3219 = vld [vmem:[#allocation7 + $0x430] sm:$0xff]
    %v3220 = vld [vmem:[#allocation7 + $0x438] sm:$0xff]
    %v3221 = vld [vmem:[#allocation7 + $0x440] sm:$0xff]
    %v3222 = vld [vmem:[#allocation7 + $0x448] sm:$0xff]
    %v3223 = vld [vmem:[#allocation7 + $0x450] sm:$0xff]
    %v3224 = vld [vmem:[#allocation7 + $0x458] sm:$0xff]
    %v3225 = vld [vmem:[#allocation7 + $0x460] sm:$0xff]
    %v3226 = vld [vmem:[#allocation7 + $0x468] sm:$0xff]
    %v3227 = vld [vmem:[#allocation7 + $0x470] sm:$0xff]
    %v3228 = vld [vmem:[#allocation7 + $0x478] sm:$0xff]
    %v3229 = vld [vmem:[#allocation7 + $0x480] sm:$0xff]
    %v3230 = vld [vmem:[#allocation7 + $0x488] sm:$0xff]
    %v3231 = vld [vmem:[#allocation7 + $0x490] sm:$0xff]
    %v3232 = vld [vmem:[#allocation7 + $0x498] sm:$0xff]
    %v3233 = vld [vmem:[#allocation7 + $0x4a0] sm:$0xff]
    %v3234 = vld [vmem:[#allocation7 + $0x4a8] sm:$0xff]
    %v3235 = vld [vmem:[#allocation7 + $0x4b0] sm:$0xff]
    %v3236 = vld [vmem:[#allocation7 + $0x4b8] sm:$0xff]
    %v3237 = vld [vmem:[#allocation7 + $0x4c0] sm:$0xff]
    %v3238 = vld [vmem:[#allocation7 + $0x4c8] sm:$0xff]
    %v3239 = vld [vmem:[#allocation7 + $0x4d0] sm:$0xff]
    %v3240 = vld [vmem:[#allocation7 + $0x4d8] sm:$0xff]
    %v3241 = vld [vmem:[#allocation7 + $0x4e0] sm:$0xff]
    %v3242 = vld [vmem:[#allocation7 + $0x4e8] sm:$0xff]
    %v3243 = vld [vmem:[#allocation7 + $0x4f0] sm:$0xff]
    %v3244 = vld [vmem:[#allocation7 + $0x4f8] sm:$0xff]
    %v3245 = vld [vmem:[#allocation7 + $0x500] sm:$0xff]
    %v3246 = vld [vmem:[#allocation7 + $0x508] sm:$0xff]
    %v3247 = vld [vmem:[#allocation7 + $0x510] sm:$0xff]
    %v3248 = vld [vmem:[#allocation7 + $0x518] sm:$0xff]
    %v3249 = vld [vmem:[#allocation7 + $0x520] sm:$0xff]
    %v3250 = vld [vmem:[#allocation7 + $0x528] sm:$0xff]
    %v3251 = vld [vmem:[#allocation7 + $0x530] sm:$0xff]
    %v3252 = vld [vmem:[#allocation7 + $0x538] sm:$0xff]
    %v3253 = vld [vmem:[#allocation7 + $0x540] sm:$0xff]
    %v3254 = vld [vmem:[#allocation7 + $0x548] sm:$0xff]
    %v3255 = vld [vmem:[#allocation7 + $0x550] sm:$0xff]
    %v3256 = vld [vmem:[#allocation7 + $0x558] sm:$0xff]
    %v3257 = vld [vmem:[#allocation7 + $0x560] sm:$0xff]
    %v3258 = vld [vmem:[#allocation7 + $0x568] sm:$0xff]
    %v3259 = vld [vmem:[#allocation7 + $0x570] sm:$0xff]
    %v3260 = vld [vmem:[#allocation7 + $0x578] sm:$0xff]
    %v3261 = vld [vmem:[#allocation7 + $0x580] sm:$0xff]
    %v3262 = vld [vmem:[#allocation7 + $0x588] sm:$0xff]
    %v3263 = vld [vmem:[#allocation7 + $0x590] sm:$0xff]
    %v3264 = vld [vmem:[#allocation7 + $0x598] sm:$0xff]
    %v3265 = vld [vmem:[#allocation7 + $0x5a0] sm:$0xff]
    %v3266 = vld [vmem:[#allocation7 + $0x5a8] sm:$0xff]
    %v3267 = vld [vmem:[#allocation7 + $0x5b0] sm:$0xff]
    %v3268 = vld [vmem:[#allocation7 + $0x5b8] sm:$0xff]
    %v3269 = vld [vmem:[#allocation7 + $0x5c0] sm:$0xff]
    %v3270 = vld [vmem:[#allocation7 + $0x5c8] sm:$0xff]
    %v3271 = vld [vmem:[#allocation7 + $0x5d0] sm:$0xff]
    %v3272 = vld [vmem:[#allocation7 + $0x5d8] sm:$0xff]
    %v3273 = vld [vmem:[#allocation7 + $0x5e0] sm:$0xff]
    %v3274 = vld [vmem:[#allocation7 + $0x5e8] sm:$0xff]
    %v3275 = vld [vmem:[#allocation7 + $0x5f0] sm:$0xff]
    %v3276 = vld [vmem:[#allocation7 + $0x5f8] sm:$0xff]
    %v3277 = vld [vmem:[#allocation7 + $0x600] sm:$0xff]
    %v3278 = vld [vmem:[#allocation7 + $0x608] sm:$0xff]
    %v3279 = vld [vmem:[#allocation7 + $0x610] sm:$0xff]
    %v3280 = vld [vmem:[#allocation7 + $0x618] sm:$0xff]
    %v3281 = vld [vmem:[#allocation7 + $0x620] sm:$0xff]
    %v3282 = vld [vmem:[#allocation7 + $0x628] sm:$0xff]
    %v3283 = vld [vmem:[#allocation7 + $0x630] sm:$0xff]
    %v3284 = vld [vmem:[#allocation7 + $0x638] sm:$0xff]
    %v3285 = vld [vmem:[#allocation7 + $0x640] sm:$0xff]
    %v3286 = vld [vmem:[#allocation7 + $0x648] sm:$0xff]
    %v3287 = vld [vmem:[#allocation7 + $0x650] sm:$0xff]
    %v3288 = vld [vmem:[#allocation7 + $0x658] sm:$0xff]
    %v3289 = vld [vmem:[#allocation7 + $0x660] sm:$0xff]
    %v3290 = vld [vmem:[#allocation7 + $0x668] sm:$0xff]
    %v3291 = vld [vmem:[#allocation7 + $0x670] sm:$0xff]
    %v3292 = vld [vmem:[#allocation7 + $0x678] sm:$0xff]
    %v3293 = vld [vmem:[#allocation7 + $0x680] sm:$0xff]
    %v3294 = vld [vmem:[#allocation7 + $0x688] sm:$0xff]
    %v3295 = vld [vmem:[#allocation7 + $0x690] sm:$0xff]
    %v3296 = vld [vmem:[#allocation7 + $0x698] sm:$0xff]
    %v3297 = vld [vmem:[#allocation7 + $0x6a0] sm:$0xff]
    %v3298 = vld [vmem:[#allocation7 + $0x6a8] sm:$0xff]
    %v3299 = vld [vmem:[#allocation7 + $0x6b0] sm:$0xff]
    %v3300 = vld [vmem:[#allocation7 + $0x6b8] sm:$0xff]
    %v3301 = vld [vmem:[#allocation7 + $0x6c0] sm:$0xff]
    %v3302 = vld [vmem:[#allocation7 + $0x6c8] sm:$0xff]
    %v3303 = vld [vmem:[#allocation7 + $0x6d0] sm:$0xff]
    %v3304 = vld [vmem:[#allocation7 + $0x6d8] sm:$0xff]
    %v3305 = vld [vmem:[#allocation7 + $0x6e0] sm:$0xff]
    %v3306 = vld [vmem:[#allocation7 + $0x6e8] sm:$0xff]
    %v3307 = vld [vmem:[#allocation7 + $0x6f0] sm:$0xff]
    %v3308 = vld [vmem:[#allocation7 + $0x6f8] sm:$0xff]
    %v3309 = vld [vmem:[#allocation7 + $0x700] sm:$0xff]
    %v3310 = vld [vmem:[#allocation7 + $0x708] sm:$0xff]
    %v3311 = vld [vmem:[#allocation7 + $0x710] sm:$0xff]
    %v3312 = vld [vmem:[#allocation7 + $0x718] sm:$0xff]
    %v3313 = vld [vmem:[#allocation7 + $0x720] sm:$0xff]
    %v3314 = vld [vmem:[#allocation7 + $0x728] sm:$0xff]
    %v3315 = vld [vmem:[#allocation7 + $0x730] sm:$0xff]
    %v3316 = vld [vmem:[#allocation7 + $0x738] sm:$0xff]
    %v3317 = vld [vmem:[#allocation7 + $0x740] sm:$0xff]
    %v3318 = vld [vmem:[#allocation7 + $0x748] sm:$0xff]
    %v3319 = vld [vmem:[#allocation7 + $0x750] sm:$0xff]
    %v3320 = vld [vmem:[#allocation7 + $0x758] sm:$0xff]
    %v3321 = vld [vmem:[#allocation7 + $0x760] sm:$0xff]
    %v3322 = vld [vmem:[#allocation7 + $0x768] sm:$0xff]
    %v3323 = vld [vmem:[#allocation7 + $0x770] sm:$0xff]
    %v3324 = vld [vmem:[#allocation7 + $0x778] sm:$0xff]
    %v3325 = vld [vmem:[#allocation7 + $0x780] sm:$0xff]
    %v3326 = vld [vmem:[#allocation7 + $0x788] sm:$0xff]
    %v3327 = vld [vmem:[#allocation7 + $0x790] sm:$0xff]
    %v3328 = vld [vmem:[#allocation7 + $0x798] sm:$0xff]
    %v3329 = vld [vmem:[#allocation7 + $0x7a0] sm:$0xff]
    %v3330 = vld [vmem:[#allocation7 + $0x7a8] sm:$0xff]
    %v3331 = vld [vmem:[#allocation7 + $0x7b0] sm:$0xff]
    %v3332 = vld [vmem:[#allocation7 + $0x7b8] sm:$0xff]
    %v3333 = vld [vmem:[#allocation7 + $0x7c0] sm:$0xff]
    %v3334 = vld [vmem:[#allocation7 + $0x7c8] sm:$0xff]
    %v3335 = vld [vmem:[#allocation7 + $0x7d0] sm:$0xff]
    %v3336 = vld [vmem:[#allocation7 + $0x7d8] sm:$0xff]
    %v3337 = vld [vmem:[#allocation7 + $0x7e0] sm:$0xff]
    %v3338 = vld [vmem:[#allocation7 + $0x7e8] sm:$0xff]
    %v3339 = vld [vmem:[#allocation7 + $0x7f0] sm:$0xff]
    %v3340 = vld [vmem:[#allocation7 + $0x7f8] sm:$0xff]
    %v3341 = vld [vmem:[%s8] sm:$0xff]
    %v3343 = vperm.slane %v3341, 0
    %v3344 = vperm.slane %v3341, 1
    %v3345 = vperm.slane %v3341, 2
    %v3346 = vperm.slane %v3341, 3
    %v3347 = vperm.slane %v3341, 4
    %v3348 = vperm.slane %v3341, 5
    %v3349 = vperm.slane %v3341, 6
    %v3350 = vperm.slane %v3341, 7
    %v3615 = vunpack.c.l.b16 %v3085
    %v3616 = vunpack.c.h.b16 %v3085
    %v3617 = vunpack.c.l.b16 %v3086
    %v3618 = vunpack.c.h.b16 %v3086
    %v3619 = vunpack.c.l.b16 %v3087
    %v3620 = vunpack.c.h.b16 %v3087
    %v3621 = vunpack.c.l.b16 %v3088
    %v3622 = vunpack.c.h.b16 %v3088
    %v3623 = vunpack.c.l.b16 %v3089
    %v3624 = vunpack.c.h.b16 %v3089
    %v3625 = vunpack.c.l.b16 %v3090
    %v3626 = vunpack.c.h.b16 %v3090
    %v3627 = vunpack.c.l.b16 %v3091
    %v3628 = vunpack.c.h.b16 %v3091
    %v3629 = vunpack.c.l.b16 %v3092
    %v3630 = vunpack.c.h.b16 %v3092
    %v3631 = vunpack.c.l.b16 %v3093
    %v3632 = vunpack.c.h.b16 %v3093
    %v3633 = vunpack.c.l.b16 %v3094
    %v3634 = vunpack.c.h.b16 %v3094
    %v3635 = vunpack.c.l.b16 %v3095
    %v3636 = vunpack.c.h.b16 %v3095
    %v3637 = vunpack.c.l.b16 %v3096
    %v3638 = vunpack.c.h.b16 %v3096
    %v3639 = vunpack.c.l.b16 %v3097
    %v3640 = vunpack.c.h.b16 %v3097
    %v3641 = vunpack.c.l.b16 %v3098
    %v3642 = vunpack.c.h.b16 %v3098
    %v3643 = vunpack.c.l.b16 %v3099
    %v3644 = vunpack.c.h.b16 %v3099
    %v3645 = vunpack.c.l.b16 %v3100
    %v3646 = vunpack.c.h.b16 %v3100
    %v3647 = vunpack.c.l.b16 %v3101
    %v3648 = vunpack.c.h.b16 %v3101
    %v3649 = vunpack.c.l.b16 %v3102
    %v3650 = vunpack.c.h.b16 %v3102
    %v3651 = vunpack.c.l.b16 %v3103
    %v3652 = vunpack.c.h.b16 %v3103
    %v3653 = vunpack.c.l.b16 %v3104
    %v3654 = vunpack.c.h.b16 %v3104
    %v3655 = vunpack.c.l.b16 %v3105
    %v3656 = vunpack.c.h.b16 %v3105
    %v3657 = vunpack.c.l.b16 %v3106
    %v3658 = vunpack.c.h.b16 %v3106
    %v3659 = vunpack.c.l.b16 %v3107
    %v3660 = vunpack.c.h.b16 %v3107
    %v3661 = vunpack.c.l.b16 %v3108
    %v3662 = vunpack.c.h.b16 %v3108
    %v3663 = vunpack.c.l.b16 %v3109
    %v3664 = vunpack.c.h.b16 %v3109
    %v3665 = vunpack.c.l.b16 %v3110
    %v3666 = vunpack.c.h.b16 %v3110
    %v3667 = vunpack.c.l.b16 %v3111
    %v3668 = vunpack.c.h.b16 %v3111
    %v3669 = vunpack.c.l.b16 %v3112
    %v3670 = vunpack.c.h.b16 %v3112
    %v3671 = vunpack.c.l.b16 %v3113
    %v3672 = vunpack.c.h.b16 %v3113
    %v3673 = vunpack.c.l.b16 %v3114
    %v3674 = vunpack.c.h.b16 %v3114
    %v3675 = vunpack.c.l.b16 %v3115
    %v3676 = vunpack.c.h.b16 %v3115
    %v3677 = vunpack.c.l.b16 %v3116
    %v3678 = vunpack.c.h.b16 %v3116
    %v3679 = vunpack.c.l.b16 %v3117
    %v3680 = vunpack.c.h.b16 %v3117
    %v3681 = vunpack.c.l.b16 %v3118
    %v3682 = vunpack.c.h.b16 %v3118
    %v3683 = vunpack.c.l.b16 %v3119
    %v3684 = vunpack.c.h.b16 %v3119
    %v3685 = vunpack.c.l.b16 %v3120
    %v3686 = vunpack.c.h.b16 %v3120
    %v3687 = vunpack.c.l.b16 %v3121
    %v3688 = vunpack.c.h.b16 %v3121
    %v3689 = vunpack.c.l.b16 %v3122
    %v3690 = vunpack.c.h.b16 %v3122
    %v3691 = vunpack.c.l.b16 %v3123
    %v3692 = vunpack.c.h.b16 %v3123
    %v3693 = vunpack.c.l.b16 %v3124
    %v3694 = vunpack.c.h.b16 %v3124
    %v3695 = vunpack.c.l.b16 %v3125
    %v3696 = vunpack.c.h.b16 %v3125
    %v3697 = vunpack.c.l.b16 %v3126
    %v3698 = vunpack.c.h.b16 %v3126
    %v3699 = vunpack.c.l.b16 %v3127
    %v3700 = vunpack.c.h.b16 %v3127
    %v3701 = vunpack.c.l.b16 %v3128
    %v3702 = vunpack.c.h.b16 %v3128
    %v3703 = vunpack.c.l.b16 %v3129
    %v3704 = vunpack.c.h.b16 %v3129
    %v3705 = vunpack.c.l.b16 %v3130
    %v3706 = vunpack.c.h.b16 %v3130
    %v3707 = vunpack.c.l.b16 %v3131
    %v3708 = vunpack.c.h.b16 %v3131
    %v3709 = vunpack.c.l.b16 %v3132
    %v3710 = vunpack.c.h.b16 %v3132
    %v3711 = vunpack.c.l.b16 %v3133
    %v3712 = vunpack.c.h.b16 %v3133
    %v3713 = vunpack.c.l.b16 %v3134
    %v3714 = vunpack.c.h.b16 %v3134
    %v3715 = vunpack.c.l.b16 %v3135
    %v3716 = vunpack.c.h.b16 %v3135
    %v3717 = vunpack.c.l.b16 %v3136
    %v3718 = vunpack.c.h.b16 %v3136
    %v3719 = vunpack.c.l.b16 %v3137
    %v3720 = vunpack.c.h.b16 %v3137
    %v3721 = vunpack.c.l.b16 %v3138
    %v3722 = vunpack.c.h.b16 %v3138
    %v3723 = vunpack.c.l.b16 %v3139
    %v3724 = vunpack.c.h.b16 %v3139
    %v3725 = vunpack.c.l.b16 %v3140
    %v3726 = vunpack.c.h.b16 %v3140
    %v3727 = vunpack.c.l.b16 %v3141
    %v3728 = vunpack.c.h.b16 %v3141
    %v3729 = vunpack.c.l.b16 %v3142
    %v3730 = vunpack.c.h.b16 %v3142
    %v3731 = vunpack.c.l.b16 %v3143
    %v3732 = vunpack.c.h.b16 %v3143
    %v3733 = vunpack.c.l.b16 %v3144
    %v3734 = vunpack.c.h.b16 %v3144
    %v3735 = vunpack.c.l.b16 %v3145
    %v3736 = vunpack.c.h.b16 %v3145
    %v3737 = vunpack.c.l.b16 %v3146
    %v3738 = vunpack.c.h.b16 %v3146
    %v3739 = vunpack.c.l.b16 %v3147
    %v3740 = vunpack.c.h.b16 %v3147
    %v3741 = vunpack.c.l.b16 %v3148
    %v3742 = vunpack.c.h.b16 %v3148
    %v3743 = vunpack.c.l.b16 %v3149
    %v3744 = vunpack.c.h.b16 %v3149
    %v3745 = vunpack.c.l.b16 %v3150
    %v3746 = vunpack.c.h.b16 %v3150
    %v3747 = vunpack.c.l.b16 %v3151
    %v3748 = vunpack.c.h.b16 %v3151
    %v3749 = vunpack.c.l.b16 %v3152
    %v3750 = vunpack.c.h.b16 %v3152
    %v3751 = vunpack.c.l.b16 %v3153
    %v3752 = vunpack.c.h.b16 %v3153
    %v3753 = vunpack.c.l.b16 %v3154
    %v3754 = vunpack.c.h.b16 %v3154
    %v3755 = vunpack.c.l.b16 %v3155
    %v3756 = vunpack.c.h.b16 %v3155
    %v3757 = vunpack.c.l.b16 %v3156
    %v3758 = vunpack.c.h.b16 %v3156
    %v3759 = vunpack.c.l.b16 %v3157
    %v3760 = vunpack.c.h.b16 %v3157
    %v3761 = vunpack.c.l.b16 %v3158
    %v3762 = vunpack.c.h.b16 %v3158
    %v3763 = vunpack.c.l.b16 %v3159
    %v3764 = vunpack.c.h.b16 %v3159
    %v3765 = vunpack.c.l.b16 %v3160
    %v3766 = vunpack.c.h.b16 %v3160
    %v3767 = vunpack.c.l.b16 %v3161
    %v3768 = vunpack.c.h.b16 %v3161
    %v3769 = vunpack.c.l.b16 %v3162
    %v3770 = vunpack.c.h.b16 %v3162
    %v3771 = vunpack.c.l.b16 %v3163
    %v3772 = vunpack.c.h.b16 %v3163
    %v3773 = vunpack.c.l.b16 %v3164
    %v3774 = vunpack.c.h.b16 %v3164
    %v3775 = vunpack.c.l.b16 %v3165
    %v3776 = vunpack.c.h.b16 %v3165
    %v3777 = vunpack.c.l.b16 %v3166
    %v3778 = vunpack.c.h.b16 %v3166
    %v3779 = vunpack.c.l.b16 %v3167
    %v3780 = vunpack.c.h.b16 %v3167
    %v3781 = vunpack.c.l.b16 %v3168
    %v3782 = vunpack.c.h.b16 %v3168
    %v3783 = vunpack.c.l.b16 %v3169
    %v3784 = vunpack.c.h.b16 %v3169
    %v3785 = vunpack.c.l.b16 %v3170
    %v3786 = vunpack.c.h.b16 %v3170
    %v3787 = vunpack.c.l.b16 %v3171
    %v3788 = vunpack.c.h.b16 %v3171
    %v3789 = vunpack.c.l.b16 %v3172
    %v3790 = vunpack.c.h.b16 %v3172
    %v3791 = vunpack.c.l.b16 %v3173
    %v3792 = vunpack.c.h.b16 %v3173
    %v3793 = vunpack.c.l.b16 %v3174
    %v3794 = vunpack.c.h.b16 %v3174
    %v3795 = vunpack.c.l.b16 %v3175
    %v3796 = vunpack.c.h.b16 %v3175
    %v3797 = vunpack.c.l.b16 %v3176
    %v3798 = vunpack.c.h.b16 %v3176
    %v3799 = vunpack.c.l.b16 %v3177
    %v3800 = vunpack.c.h.b16 %v3177
    %v3801 = vunpack.c.l.b16 %v3178
    %v3802 = vunpack.c.h.b16 %v3178
    %v3803 = vunpack.c.l.b16 %v3179
    %v3804 = vunpack.c.h.b16 %v3179
    %v3805 = vunpack.c.l.b16 %v3180
    %v3806 = vunpack.c.h.b16 %v3180
    %v3807 = vunpack.c.l.b16 %v3181
    %v3808 = vunpack.c.h.b16 %v3181
    %v3809 = vunpack.c.l.b16 %v3182
    %v3810 = vunpack.c.h.b16 %v3182
    %v3811 = vunpack.c.l.b16 %v3183
    %v3812 = vunpack.c.h.b16 %v3183
    %v3813 = vunpack.c.l.b16 %v3184
    %v3814 = vunpack.c.h.b16 %v3184
    %v3815 = vunpack.c.l.b16 %v3185
    %v3816 = vunpack.c.h.b16 %v3185
    %v3817 = vunpack.c.l.b16 %v3186
    %v3818 = vunpack.c.h.b16 %v3186
    %v3819 = vunpack.c.l.b16 %v3187
    %v3820 = vunpack.c.h.b16 %v3187
    %v3821 = vunpack.c.l.b16 %v3188
    %v3822 = vunpack.c.h.b16 %v3188
    %v3823 = vunpack.c.l.b16 %v3189
    %v3824 = vunpack.c.h.b16 %v3189
    %v3825 = vunpack.c.l.b16 %v3190
    %v3826 = vunpack.c.h.b16 %v3190
    %v3827 = vunpack.c.l.b16 %v3191
    %v3828 = vunpack.c.h.b16 %v3191
    %v3829 = vunpack.c.l.b16 %v3192
    %v3830 = vunpack.c.h.b16 %v3192
    %v3831 = vunpack.c.l.b16 %v3193
    %v3832 = vunpack.c.h.b16 %v3193
    %v3833 = vunpack.c.l.b16 %v3194
    %v3834 = vunpack.c.h.b16 %v3194
    %v3835 = vunpack.c.l.b16 %v3195
    %v3836 = vunpack.c.h.b16 %v3195
    %v3837 = vunpack.c.l.b16 %v3196
    %v3838 = vunpack.c.h.b16 %v3196
    %v3839 = vunpack.c.l.b16 %v3197
    %v3840 = vunpack.c.h.b16 %v3197
    %v3841 = vunpack.c.l.b16 %v3198
    %v3842 = vunpack.c.h.b16 %v3198
    %v3843 = vunpack.c.l.b16 %v3199
    %v3844 = vunpack.c.h.b16 %v3199
    %v3845 = vunpack.c.l.b16 %v3200
    %v3846 = vunpack.c.h.b16 %v3200
    %v3847 = vunpack.c.l.b16 %v3201
    %v3848 = vunpack.c.h.b16 %v3201
    %v3849 = vunpack.c.l.b16 %v3202
    %v3850 = vunpack.c.h.b16 %v3202
    %v3851 = vunpack.c.l.b16 %v3203
    %v3852 = vunpack.c.h.b16 %v3203
    %v3853 = vunpack.c.l.b16 %v3204
    %v3854 = vunpack.c.h.b16 %v3204
    %v3855 = vunpack.c.l.b16 %v3205
    %v3856 = vunpack.c.h.b16 %v3205
    %v3857 = vunpack.c.l.b16 %v3206
    %v3858 = vunpack.c.h.b16 %v3206
    %v3859 = vunpack.c.l.b16 %v3207
    %v3860 = vunpack.c.h.b16 %v3207
    %v3861 = vunpack.c.l.b16 %v3208
    %v3862 = vunpack.c.h.b16 %v3208
    %v3863 = vunpack.c.l.b16 %v3209
    %v3864 = vunpack.c.h.b16 %v3209
    %v3865 = vunpack.c.l.b16 %v3210
    %v3866 = vunpack.c.h.b16 %v3210
    %v3867 = vunpack.c.l.b16 %v3211
    %v3868 = vunpack.c.h.b16 %v3211
    %v3869 = vunpack.c.l.b16 %v3212
    %v3870 = vunpack.c.h.b16 %v3212
    %v3871 = vunpack.c.l.b16 %v3213
    %v3872 = vunpack.c.h.b16 %v3213
    %v3873 = vunpack.c.l.b16 %v3214
    %v3874 = vunpack.c.h.b16 %v3214
    %v3875 = vunpack.c.l.b16 %v3215
    %v3876 = vunpack.c.h.b16 %v3215
    %v3877 = vunpack.c.l.b16 %v3216
    %v3878 = vunpack.c.h.b16 %v3216
    %v3879 = vunpack.c.l.b16 %v3217
    %v3880 = vunpack.c.h.b16 %v3217
    %v3881 = vunpack.c.l.b16 %v3218
    %v3882 = vunpack.c.h.b16 %v3218
    %v3883 = vunpack.c.l.b16 %v3219
    %v3884 = vunpack.c.h.b16 %v3219
    %v3885 = vunpack.c.l.b16 %v3220
    %v3886 = vunpack.c.h.b16 %v3220
    %v3887 = vunpack.c.l.b16 %v3221
    %v3888 = vunpack.c.h.b16 %v3221
    %v3889 = vunpack.c.l.b16 %v3222
    %v3890 = vunpack.c.h.b16 %v3222
    %v3891 = vunpack.c.l.b16 %v3223
    %v3892 = vunpack.c.h.b16 %v3223
    %v3893 = vunpack.c.l.b16 %v3224
    %v3894 = vunpack.c.h.b16 %v3224
    %v3895 = vunpack.c.l.b16 %v3225
    %v3896 = vunpack.c.h.b16 %v3225
    %v3897 = vunpack.c.l.b16 %v3226
    %v3898 = vunpack.c.h.b16 %v3226
    %v3899 = vunpack.c.l.b16 %v3227
    %v3900 = vunpack.c.h.b16 %v3227
    %v3901 = vunpack.c.l.b16 %v3228
    %v3902 = vunpack.c.h.b16 %v3228
    %v3903 = vunpack.c.l.b16 %v3229
    %v3904 = vunpack.c.h.b16 %v3229
    %v3905 = vunpack.c.l.b16 %v3230
    %v3906 = vunpack.c.h.b16 %v3230
    %v3907 = vunpack.c.l.b16 %v3231
    %v3908 = vunpack.c.h.b16 %v3231
    %v3909 = vunpack.c.l.b16 %v3232
    %v3910 = vunpack.c.h.b16 %v3232
    %v3911 = vunpack.c.l.b16 %v3233
    %v3912 = vunpack.c.h.b16 %v3233
    %v3913 = vunpack.c.l.b16 %v3234
    %v3914 = vunpack.c.h.b16 %v3234
    %v3915 = vunpack.c.l.b16 %v3235
    %v3916 = vunpack.c.h.b16 %v3235
    %v3917 = vunpack.c.l.b16 %v3236
    %v3918 = vunpack.c.h.b16 %v3236
    %v3919 = vunpack.c.l.b16 %v3237
    %v3920 = vunpack.c.h.b16 %v3237
    %v3921 = vunpack.c.l.b16 %v3238
    %v3922 = vunpack.c.h.b16 %v3238
    %v3923 = vunpack.c.l.b16 %v3239
    %v3924 = vunpack.c.h.b16 %v3239
    %v3925 = vunpack.c.l.b16 %v3240
    %v3926 = vunpack.c.h.b16 %v3240
    %v3927 = vunpack.c.l.b16 %v3241
    %v3928 = vunpack.c.h.b16 %v3241
    %v3929 = vunpack.c.l.b16 %v3242
    %v3930 = vunpack.c.h.b16 %v3242
    %v3931 = vunpack.c.l.b16 %v3243
    %v3932 = vunpack.c.h.b16 %v3243
    %v3933 = vunpack.c.l.b16 %v3244
    %v3934 = vunpack.c.h.b16 %v3244
    %v3935 = vunpack.c.l.b16 %v3245
    %v3936 = vunpack.c.h.b16 %v3245
    %v3937 = vunpack.c.l.b16 %v3246
    %v3938 = vunpack.c.h.b16 %v3246
    %v3939 = vunpack.c.l.b16 %v3247
    %v3940 = vunpack.c.h.b16 %v3247
    %v3941 = vunpack.c.l.b16 %v3248
    %v3942 = vunpack.c.h.b16 %v3248
    %v3943 = vunpack.c.l.b16 %v3249
    %v3944 = vunpack.c.h.b16 %v3249
    %v3945 = vunpack.c.l.b16 %v3250
    %v3946 = vunpack.c.h.b16 %v3250
    %v3947 = vunpack.c.l.b16 %v3251
    %v3948 = vunpack.c.h.b16 %v3251
    %v3949 = vunpack.c.l.b16 %v3252
    %v3950 = vunpack.c.h.b16 %v3252
    %v3951 = vunpack.c.l.b16 %v3253
    %v3952 = vunpack.c.h.b16 %v3253
    %v3953 = vunpack.c.l.b16 %v3254
    %v3954 = vunpack.c.h.b16 %v3254
    %v3955 = vunpack.c.l.b16 %v3255
    %v3956 = vunpack.c.h.b16 %v3255
    %v3957 = vunpack.c.l.b16 %v3256
    %v3958 = vunpack.c.h.b16 %v3256
    %v3959 = vunpack.c.l.b16 %v3257
    %v3960 = vunpack.c.h.b16 %v3257
    %v3961 = vunpack.c.l.b16 %v3258
    %v3962 = vunpack.c.h.b16 %v3258
    %v3963 = vunpack.c.l.b16 %v3259
    %v3964 = vunpack.c.h.b16 %v3259
    %v3965 = vunpack.c.l.b16 %v3260
    %v3966 = vunpack.c.h.b16 %v3260
    %v3967 = vunpack.c.l.b16 %v3261
    %v3968 = vunpack.c.h.b16 %v3261
    %v3969 = vunpack.c.l.b16 %v3262
    %v3970 = vunpack.c.h.b16 %v3262
    %v3971 = vunpack.c.l.b16 %v3263
    %v3972 = vunpack.c.h.b16 %v3263
    %v3973 = vunpack.c.l.b16 %v3264
    %v3974 = vunpack.c.h.b16 %v3264
    %v3975 = vunpack.c.l.b16 %v3265
    %v3976 = vunpack.c.h.b16 %v3265
    %v3977 = vunpack.c.l.b16 %v3266
    %v3978 = vunpack.c.h.b16 %v3266
    %v3979 = vunpack.c.l.b16 %v3267
    %v3980 = vunpack.c.h.b16 %v3267
    %v3981 = vunpack.c.l.b16 %v3268
    %v3982 = vunpack.c.h.b16 %v3268
    %v3983 = vunpack.c.l.b16 %v3269
    %v3984 = vunpack.c.h.b16 %v3269
    %v3985 = vunpack.c.l.b16 %v3270
    %v3986 = vunpack.c.h.b16 %v3270
    %v3987 = vunpack.c.l.b16 %v3271
    %v3988 = vunpack.c.h.b16 %v3271
    %v3989 = vunpack.c.l.b16 %v3272
    %v3990 = vunpack.c.h.b16 %v3272
    %v3991 = vunpack.c.l.b16 %v3273
    %v3992 = vunpack.c.h.b16 %v3273
    %v3993 = vunpack.c.l.b16 %v3274
    %v3994 = vunpack.c.h.b16 %v3274
    %v3995 = vunpack.c.l.b16 %v3275
    %v3996 = vunpack.c.h.b16 %v3275
    %v3997 = vunpack.c.l.b16 %v3276
    %v3998 = vunpack.c.h.b16 %v3276
    %v3999 = vunpack.c.l.b16 %v3277
    %v4000 = vunpack.c.h.b16 %v3277
    %v4001 = vunpack.c.l.b16 %v3278
    %v4002 = vunpack.c.h.b16 %v3278
    %v4003 = vunpack.c.l.b16 %v3279
    %v4004 = vunpack.c.h.b16 %v3279
    %v4005 = vunpack.c.l.b16 %v3280
    %v4006 = vunpack.c.h.b16 %v3280
    %v4007 = vunpack.c.l.b16 %v3281
    %v4008 = vunpack.c.h.b16 %v3281
    %v4009 = vunpack.c.l.b16 %v3282
    %v4010 = vunpack.c.h.b16 %v3282
    %v4011 = vunpack.c.l.b16 %v3283
    %v4012 = vunpack.c.h.b16 %v3283
    %v4013 = vunpack.c.l.b16 %v3284
    %v4014 = vunpack.c.h.b16 %v3284
    %v4015 = vunpack.c.l.b16 %v3285
    %v4016 = vunpack.c.h.b16 %v3285
    %v4017 = vunpack.c.l.b16 %v3286
    %v4018 = vunpack.c.h.b16 %v3286
    %v4019 = vunpack.c.l.b16 %v3287
    %v4020 = vunpack.c.h.b16 %v3287
    %v4021 = vunpack.c.l.b16 %v3288
    %v4022 = vunpack.c.h.b16 %v3288
    %v4023 = vunpack.c.l.b16 %v3289
    %v4024 = vunpack.c.h.b16 %v3289
    %v4025 = vunpack.c.l.b16 %v3290
    %v4026 = vunpack.c.h.b16 %v3290
    %v4027 = vunpack.c.l.b16 %v3291
    %v4028 = vunpack.c.h.b16 %v3291
    %v4029 = vunpack.c.l.b16 %v3292
    %v4030 = vunpack.c.h.b16 %v3292
    %v4031 = vunpack.c.l.b16 %v3293
    %v4032 = vunpack.c.h.b16 %v3293
    %v4033 = vunpack.c.l.b16 %v3294
    %v4034 = vunpack.c.h.b16 %v3294
    %v4035 = vunpack.c.l.b16 %v3295
    %v4036 = vunpack.c.h.b16 %v3295
    %v4037 = vunpack.c.l.b16 %v3296
    %v4038 = vunpack.c.h.b16 %v3296
    %v4039 = vunpack.c.l.b16 %v3297
    %v4040 = vunpack.c.h.b16 %v3297
    %v4041 = vunpack.c.l.b16 %v3298
    %v4042 = vunpack.c.h.b16 %v3298
    %v4043 = vunpack.c.l.b16 %v3299
    %v4044 = vunpack.c.h.b16 %v3299
    %v4045 = vunpack.c.l.b16 %v3300
    %v4046 = vunpack.c.h.b16 %v3300
    %v4047 = vunpack.c.l.b16 %v3301
    %v4048 = vunpack.c.h.b16 %v3301
    %v4049 = vunpack.c.l.b16 %v3302
    %v4050 = vunpack.c.h.b16 %v3302
    %v4051 = vunpack.c.l.b16 %v3303
    %v4052 = vunpack.c.h.b16 %v3303
    %v4053 = vunpack.c.l.b16 %v3304
    %v4054 = vunpack.c.h.b16 %v3304
    %v4055 = vunpack.c.l.b16 %v3305
    %v4056 = vunpack.c.h.b16 %v3305
    %v4057 = vunpack.c.l.b16 %v3306
    %v4058 = vunpack.c.h.b16 %v3306
    %v4059 = vunpack.c.l.b16 %v3307
    %v4060 = vunpack.c.h.b16 %v3307
    %v4061 = vunpack.c.l.b16 %v3308
    %v4062 = vunpack.c.h.b16 %v3308
    %v4063 = vunpack.c.l.b16 %v3309
    %v4064 = vunpack.c.h.b16 %v3309
    %v4065 = vunpack.c.l.b16 %v3310
    %v4066 = vunpack.c.h.b16 %v3310
    %v4067 = vunpack.c.l.b16 %v3311
    %v4068 = vunpack.c.h.b16 %v3311
    %v4069 = vunpack.c.l.b16 %v3312
    %v4070 = vunpack.c.h.b16 %v3312
    %v4071 = vunpack.c.l.b16 %v3313
    %v4072 = vunpack.c.h.b16 %v3313
    %v4073 = vunpack.c.l.b16 %v3314
    %v4074 = vunpack.c.h.b16 %v3314
    %v4075 = vunpack.c.l.b16 %v3315
    %v4076 = vunpack.c.h.b16 %v3315
    %v4077 = vunpack.c.l.b16 %v3316
    %v4078 = vunpack.c.h.b16 %v3316
    %v4079 = vunpack.c.l.b16 %v3317
    %v4080 = vunpack.c.h.b16 %v3317
    %v4081 = vunpack.c.l.b16 %v3318
    %v4082 = vunpack.c.h.b16 %v3318
    %v4083 = vunpack.c.l.b16 %v3319
    %v4084 = vunpack.c.h.b16 %v3319
    %v4085 = vunpack.c.l.b16 %v3320
    %v4086 = vunpack.c.h.b16 %v3320
    %v4087 = vunpack.c.l.b16 %v3321
    %v4088 = vunpack.c.h.b16 %v3321
    %v4089 = vunpack.c.l.b16 %v3322
    %v4090 = vunpack.c.h.b16 %v3322
    %v4091 = vunpack.c.l.b16 %v3323
    %v4092 = vunpack.c.h.b16 %v3323
    %v4093 = vunpack.c.l.b16 %v3324
    %v4094 = vunpack.c.h.b16 %v3324
    %v4095 = vunpack.c.l.b16 %v3325
    %v4096 = vunpack.c.h.b16 %v3325
    %v4097 = vunpack.c.l.b16 %v3326
    %v4098 = vunpack.c.h.b16 %v3326
    %v4099 = vunpack.c.l.b16 %v3327
    %v4100 = vunpack.c.h.b16 %v3327
    %v4101 = vunpack.c.l.b16 %v3328
    %v4102 = vunpack.c.h.b16 %v3328
    %v4103 = vunpack.c.l.b16 %v3329
    %v4104 = vunpack.c.h.b16 %v3329
    %v4105 = vunpack.c.l.b16 %v3330
    %v4106 = vunpack.c.h.b16 %v3330
    %v4107 = vunpack.c.l.b16 %v3331
    %v4108 = vunpack.c.h.b16 %v3331
    %v4109 = vunpack.c.l.b16 %v3332
    %v4110 = vunpack.c.h.b16 %v3332
    %v4111 = vunpack.c.l.b16 %v3333
    %v4112 = vunpack.c.h.b16 %v3333
    %v4113 = vunpack.c.l.b16 %v3334
    %v4114 = vunpack.c.h.b16 %v3334
    %v4115 = vunpack.c.l.b16 %v3335
    %v4116 = vunpack.c.h.b16 %v3335
    %v4117 = vunpack.c.l.b16 %v3336
    %v4118 = vunpack.c.h.b16 %v3336
    %v4119 = vunpack.c.l.b16 %v3337
    %v4120 = vunpack.c.h.b16 %v3337
    %v4121 = vunpack.c.l.b16 %v3338
    %v4122 = vunpack.c.h.b16 %v3338
    %v4123 = vunpack.c.l.b16 %v3339
    %v4124 = vunpack.c.h.b16 %v3339
    %v4125 = vunpack.c.l.b16 %v3340
    %v4126 = vunpack.c.h.b16 %v3340
    %v4127 = vpack.c.b16 %v3623, %v3615
    %v4128 = vpack.c.b16 %v3624, %v3616
    %v4129 = vpack.c.b16 %v3625, %v3617
    %v4130 = vpack.c.b16 %v3626, %v3618
    %v4131 = vpack.c.b16 %v3627, %v3619
    %v4132 = vpack.c.b16 %v3628, %v3620
    %v4133 = vpack.c.b16 %v3629, %v3621
    %v4134 = vpack.c.b16 %v3630, %v3622
    %v4135 = vpack.c.b16 %v3639, %v3631
    %v4136 = vpack.c.b16 %v3640, %v3632
    %v4137 = vpack.c.b16 %v3641, %v3633
    %v4138 = vpack.c.b16 %v3642, %v3634
    %v4139 = vpack.c.b16 %v3643, %v3635
    %v4140 = vpack.c.b16 %v3644, %v3636
    %v4141 = vpack.c.b16 %v3645, %v3637
    %v4142 = vpack.c.b16 %v3646, %v3638
    %v4143 = vpack.c.b16 %v3655, %v3647
    %v4144 = vpack.c.b16 %v3656, %v3648
    %v4145 = vpack.c.b16 %v3657, %v3649
    %v4146 = vpack.c.b16 %v3658, %v3650
    %v4147 = vpack.c.b16 %v3659, %v3651
    %v4148 = vpack.c.b16 %v3660, %v3652
    %v4149 = vpack.c.b16 %v3661, %v3653
    %v4150 = vpack.c.b16 %v3662, %v3654
    %v4151 = vpack.c.b16 %v3671, %v3663
    %v4152 = vpack.c.b16 %v3672, %v3664
    %v4153 = vpack.c.b16 %v3673, %v3665
    %v4154 = vpack.c.b16 %v3674, %v3666
    %v4155 = vpack.c.b16 %v3675, %v3667
    %v4156 = vpack.c.b16 %v3676, %v3668
    %v4157 = vpack.c.b16 %v3677, %v3669
    %v4158 = vpack.c.b16 %v3678, %v3670
    %v4159 = vpack.c.b16 %v3687, %v3679
    %v4160 = vpack.c.b16 %v3688, %v3680
    %v4161 = vpack.c.b16 %v3689, %v3681
    %v4162 = vpack.c.b16 %v3690, %v3682
    %v4163 = vpack.c.b16 %v3691, %v3683
    %v4164 = vpack.c.b16 %v3692, %v3684
    %v4165 = vpack.c.b16 %v3693, %v3685
    %v4166 = vpack.c.b16 %v3694, %v3686
    %v4167 = vpack.c.b16 %v3703, %v3695
    %v4168 = vpack.c.b16 %v3704, %v3696
    %v4169 = vpack.c.b16 %v3705, %v3697
    %v4170 = vpack.c.b16 %v3706, %v3698
    %v4171 = vpack.c.b16 %v3707, %v3699
    %v4172 = vpack.c.b16 %v3708, %v3700
    %v4173 = vpack.c.b16 %v3709, %v3701
    %v4174 = vpack.c.b16 %v3710, %v3702
    %v4175 = vpack.c.b16 %v3719, %v3711
    %v4176 = vpack.c.b16 %v3720, %v3712
    %v4177 = vpack.c.b16 %v3721, %v3713
    %v4178 = vpack.c.b16 %v3722, %v3714
    %v4179 = vpack.c.b16 %v3723, %v3715
    %v4180 = vpack.c.b16 %v3724, %v3716
    %v4181 = vpack.c.b16 %v3725, %v3717
    %v4182 = vpack.c.b16 %v3726, %v3718
    %v4183 = vpack.c.b16 %v3735, %v3727
    %v4184 = vpack.c.b16 %v3736, %v3728
    %v4185 = vpack.c.b16 %v3737, %v3729
    %v4186 = vpack.c.b16 %v3738, %v3730
    %v4187 = vpack.c.b16 %v3739, %v3731
    %v4188 = vpack.c.b16 %v3740, %v3732
    %v4189 = vpack.c.b16 %v3741, %v3733
    %v4190 = vpack.c.b16 %v3742, %v3734
    %v4191 = vpack.c.b16 %v3751, %v3743
    %v4192 = vpack.c.b16 %v3752, %v3744
    %v4193 = vpack.c.b16 %v3753, %v3745
    %v4194 = vpack.c.b16 %v3754, %v3746
    %v4195 = vpack.c.b16 %v3755, %v3747
    %v4196 = vpack.c.b16 %v3756, %v3748
    %v4197 = vpack.c.b16 %v3757, %v3749
    %v4198 = vpack.c.b16 %v3758, %v3750
    %v4199 = vpack.c.b16 %v3767, %v3759
    %v4200 = vpack.c.b16 %v3768, %v3760
    %v4201 = vpack.c.b16 %v3769, %v3761
    %v4202 = vpack.c.b16 %v3770, %v3762
    %v4203 = vpack.c.b16 %v3771, %v3763
    %v4204 = vpack.c.b16 %v3772, %v3764
    %v4205 = vpack.c.b16 %v3773, %v3765
    %v4206 = vpack.c.b16 %v3774, %v3766
    %v4207 = vpack.c.b16 %v3783, %v3775
    %v4208 = vpack.c.b16 %v3784, %v3776
    %v4209 = vpack.c.b16 %v3785, %v3777
    %v4210 = vpack.c.b16 %v3786, %v3778
    %v4211 = vpack.c.b16 %v3787, %v3779
    %v4212 = vpack.c.b16 %v3788, %v3780
    %v4213 = vpack.c.b16 %v3789, %v3781
    %v4214 = vpack.c.b16 %v3790, %v3782
    %v4215 = vpack.c.b16 %v3799, %v3791
    %v4216 = vpack.c.b16 %v3800, %v3792
    %v4217 = vpack.c.b16 %v3801, %v3793
    %v4218 = vpack.c.b16 %v3802, %v3794
    %v4219 = vpack.c.b16 %v3803, %v3795
    %v4220 = vpack.c.b16 %v3804, %v3796
    %v4221 = vpack.c.b16 %v3805, %v3797
    %v4222 = vpack.c.b16 %v3806, %v3798
    %v4223 = vpack.c.b16 %v3815, %v3807
    %v4224 = vpack.c.b16 %v3816, %v3808
    %v4225 = vpack.c.b16 %v3817, %v3809
    %v4226 = vpack.c.b16 %v3818, %v3810
    %v4227 = vpack.c.b16 %v3819, %v3811
    %v4228 = vpack.c.b16 %v3820, %v3812
    %v4229 = vpack.c.b16 %v3821, %v3813
    %v4230 = vpack.c.b16 %v3822, %v3814
    %v4231 = vpack.c.b16 %v3831, %v3823
    %v4232 = vpack.c.b16 %v3832, %v3824
    %v4233 = vpack.c.b16 %v3833, %v3825
    %v4234 = vpack.c.b16 %v3834, %v3826
    %v4235 = vpack.c.b16 %v3835, %v3827
    %v4236 = vpack.c.b16 %v3836, %v3828
    %v4237 = vpack.c.b16 %v3837, %v3829
    %v4238 = vpack.c.b16 %v3838, %v3830
    %v4239 = vpack.c.b16 %v3847, %v3839
    %v4240 = vpack.c.b16 %v3848, %v3840
    %v4241 = vpack.c.b16 %v3849, %v3841
    %v4242 = vpack.c.b16 %v3850, %v3842
    %v4243 = vpack.c.b16 %v3851, %v3843
    %v4244 = vpack.c.b16 %v3852, %v3844
    %v4245 = vpack.c.b16 %v3853, %v3845
    %v4246 = vpack.c.b16 %v3854, %v3846
    %v4247 = vpack.c.b16 %v3863, %v3855
    %v4248 = vpack.c.b16 %v3864, %v3856
    %v4249 = vpack.c.b16 %v3865, %v3857
    %v4250 = vpack.c.b16 %v3866, %v3858
    %v4251 = vpack.c.b16 %v3867, %v3859
    %v4252 = vpack.c.b16 %v3868, %v3860
    %v4253 = vpack.c.b16 %v3869, %v3861
    %v4254 = vpack.c.b16 %v3870, %v3862
    %v4255 = vpack.c.b16 %v3879, %v3871
    %v4256 = vpack.c.b16 %v3880, %v3872
    %v4257 = vpack.c.b16 %v3881, %v3873
    %v4258 = vpack.c.b16 %v3882, %v3874
    %v4259 = vpack.c.b16 %v3883, %v3875
    %v4260 = vpack.c.b16 %v3884, %v3876
    %v4261 = vpack.c.b16 %v3885, %v3877
    %v4262 = vpack.c.b16 %v3886, %v3878
    %v4263 = vpack.c.b16 %v3895, %v3887
    %v4264 = vpack.c.b16 %v3896, %v3888
    %v4265 = vpack.c.b16 %v3897, %v3889
    %v4266 = vpack.c.b16 %v3898, %v3890
    %v4267 = vpack.c.b16 %v3899, %v3891
    %v4268 = vpack.c.b16 %v3900, %v3892
    %v4269 = vpack.c.b16 %v3901, %v3893
    %v4270 = vpack.c.b16 %v3902, %v3894
    %v4271 = vpack.c.b16 %v3911, %v3903
    %v4272 = vpack.c.b16 %v3912, %v3904
    %v4273 = vpack.c.b16 %v3913, %v3905
    %v4274 = vpack.c.b16 %v3914, %v3906
    %v4275 = vpack.c.b16 %v3915, %v3907
    %v4276 = vpack.c.b16 %v3916, %v3908
    %v4277 = vpack.c.b16 %v3917, %v3909
    %v4278 = vpack.c.b16 %v3918, %v3910
    %v4279 = vpack.c.b16 %v3927, %v3919
    %v4280 = vpack.c.b16 %v3928, %v3920
    %v4281 = vpack.c.b16 %v3929, %v3921
    %v4282 = vpack.c.b16 %v3930, %v3922
    %v4283 = vpack.c.b16 %v3931, %v3923
    %v4284 = vpack.c.b16 %v3932, %v3924
    %v4285 = vpack.c.b16 %v3933, %v3925
    %v4286 = vpack.c.b16 %v3934, %v3926
    %v4287 = vpack.c.b16 %v3943, %v3935
    %v4288 = vpack.c.b16 %v3944, %v3936
    %v4289 = vpack.c.b16 %v3945, %v3937
    %v4290 = vpack.c.b16 %v3946, %v3938
    %v4291 = vpack.c.b16 %v3947, %v3939
    %v4292 = vpack.c.b16 %v3948, %v3940
    %v4293 = vpack.c.b16 %v3949, %v3941
    %v4294 = vpack.c.b16 %v3950, %v3942
    %v4295 = vpack.c.b16 %v3959, %v3951
    %v4296 = vpack.c.b16 %v3960, %v3952
    %v4297 = vpack.c.b16 %v3961, %v3953
    %v4298 = vpack.c.b16 %v3962, %v3954
    %v4299 = vpack.c.b16 %v3963, %v3955
    %v4300 = vpack.c.b16 %v3964, %v3956
    %v4301 = vpack.c.b16 %v3965, %v3957
    %v4302 = vpack.c.b16 %v3966, %v3958
    %v4303 = vpack.c.b16 %v3975, %v3967
    %v4304 = vpack.c.b16 %v3976, %v3968
    %v4305 = vpack.c.b16 %v3977, %v3969
    %v4306 = vpack.c.b16 %v3978, %v3970
    %v4307 = vpack.c.b16 %v3979, %v3971
    %v4308 = vpack.c.b16 %v3980, %v3972
    %v4309 = vpack.c.b16 %v3981, %v3973
    %v4310 = vpack.c.b16 %v3982, %v3974
    %v4311 = vpack.c.b16 %v3991, %v3983
    %v4312 = vpack.c.b16 %v3992, %v3984
    %v4313 = vpack.c.b16 %v3993, %v3985
    %v4314 = vpack.c.b16 %v3994, %v3986
    %v4315 = vpack.c.b16 %v3995, %v3987
    %v4316 = vpack.c.b16 %v3996, %v3988
    %v4317 = vpack.c.b16 %v3997, %v3989
    %v4318 = vpack.c.b16 %v3998, %v3990
    %v4319 = vpack.c.b16 %v4007, %v3999
    %v4320 = vpack.c.b16 %v4008, %v4000
    %v4321 = vpack.c.b16 %v4009, %v4001
    %v4322 = vpack.c.b16 %v4010, %v4002
    %v4323 = vpack.c.b16 %v4011, %v4003
    %v4324 = vpack.c.b16 %v4012, %v4004
    %v4325 = vpack.c.b16 %v4013, %v4005
    %v4326 = vpack.c.b16 %v4014, %v4006
    %v4327 = vpack.c.b16 %v4023, %v4015
    %v4328 = vpack.c.b16 %v4024, %v4016
    %v4329 = vpack.c.b16 %v4025, %v4017
    %v4330 = vpack.c.b16 %v4026, %v4018
    %v4331 = vpack.c.b16 %v4027, %v4019
    %v4332 = vpack.c.b16 %v4028, %v4020
    %v4333 = vpack.c.b16 %v4029, %v4021
    %v4334 = vpack.c.b16 %v4030, %v4022
    %v4335 = vpack.c.b16 %v4039, %v4031
    %v4336 = vpack.c.b16 %v4040, %v4032
    %v4337 = vpack.c.b16 %v4041, %v4033
    %v4338 = vpack.c.b16 %v4042, %v4034
    %v4339 = vpack.c.b16 %v4043, %v4035
    %v4340 = vpack.c.b16 %v4044, %v4036
    %v4341 = vpack.c.b16 %v4045, %v4037
    %v4342 = vpack.c.b16 %v4046, %v4038
    %v4343 = vpack.c.b16 %v4055, %v4047
    %v4344 = vpack.c.b16 %v4056, %v4048
    %v4345 = vpack.c.b16 %v4057, %v4049
    %v4346 = vpack.c.b16 %v4058, %v4050
    %v4347 = vpack.c.b16 %v4059, %v4051
    %v4348 = vpack.c.b16 %v4060, %v4052
    %v4349 = vpack.c.b16 %v4061, %v4053
    %v4350 = vpack.c.b16 %v4062, %v4054
    %v4351 = vpack.c.b16 %v4071, %v4063
    %v4352 = vpack.c.b16 %v4072, %v4064
    %v4353 = vpack.c.b16 %v4073, %v4065
    %v4354 = vpack.c.b16 %v4074, %v4066
    %v4355 = vpack.c.b16 %v4075, %v4067
    %v4356 = vpack.c.b16 %v4076, %v4068
    %v4357 = vpack.c.b16 %v4077, %v4069
    %v4358 = vpack.c.b16 %v4078, %v4070
    %v4359 = vpack.c.b16 %v4087, %v4079
    %v4360 = vpack.c.b16 %v4088, %v4080
    %v4361 = vpack.c.b16 %v4089, %v4081
    %v4362 = vpack.c.b16 %v4090, %v4082
    %v4363 = vpack.c.b16 %v4091, %v4083
    %v4364 = vpack.c.b16 %v4092, %v4084
    %v4365 = vpack.c.b16 %v4093, %v4085
    %v4366 = vpack.c.b16 %v4094, %v4086
    %v4367 = vpack.c.b16 %v4103, %v4095
    %v4368 = vpack.c.b16 %v4104, %v4096
    %v4369 = vpack.c.b16 %v4105, %v4097
    %v4370 = vpack.c.b16 %v4106, %v4098
    %v4371 = vpack.c.b16 %v4107, %v4099
    %v4372 = vpack.c.b16 %v4108, %v4100
    %v4373 = vpack.c.b16 %v4109, %v4101
    %v4374 = vpack.c.b16 %v4110, %v4102
    %v4375 = vpack.c.b16 %v4119, %v4111
    %v4376 = vpack.c.b16 %v4120, %v4112
    %v4377 = vpack.c.b16 %v4121, %v4113
    %v4378 = vpack.c.b16 %v4122, %v4114
    %v4379 = vpack.c.b16 %v4123, %v4115
    %v4380 = vpack.c.b16 %v4124, %v4116
    %v4381 = vpack.c.b16 %v4125, %v4117
    %v4382 = vpack.c.b16 %v4126, %v4118
    %4639 = vmatpush.bf16.msra.mxu0 %v4183
    %4640 = vmatpush.bf16.msra.mxu0 %v4175
    %4641 = vmatpush.bf16.msra.mxu0 %v4167
    %4642 = vmatpush.bf16.msra.mxu0 %v4159
    %4643 = vmatpush.bf16.msra.mxu0 %v4151
    %4644 = vmatpush.bf16.msra.mxu0 %v4143
    %4645 = vmatpush.bf16.msra.mxu0 %v4135
    %4646 = vmatpush.bf16.msra.mxu0 %v4127
    %4647 = vmatmul.bf16.gmra.mxu0 %v3081
    %v4648 = vpop.f32.mrf.mxu0
    %v4649 = vadd.f32 %v3343, %v4648
    %v4650 = vpop.f32.mrf.mxu0
    %4651 = vdwg.mxu0
    %4652 = vmatpush.bf16.msra.mxu0 %v4247
    %4653 = vmatpush.bf16.msra.mxu0 %v4239
    %4654 = vmatpush.bf16.msra.mxu0 %v4231
    %4655 = vmatpush.bf16.msra.mxu0 %v4223
    %4656 = vmatpush.bf16.msra.mxu0 %v4215
    %4657 = vmatpush.bf16.msra.mxu0 %v4207
    %4658 = vmatpush.bf16.msra.mxu0 %v4199
    %4659 = vmatpush.bf16.msra.mxu0 %v4191
    %4660 = vmatmul.bf16.gmra.mxu0 %v3082
    %v4661 = vpop.f32.mrf.mxu0
    %v4662 = vadd.f32 %v4649, %v4661
    %v4663 = vpop.f32.mrf.mxu0
    %4664 = vdwg.mxu0
    %4665 = vmatpush.bf16.msra.mxu0 %v4311
    %4666 = vmatpush.bf16.msra.mxu0 %v4303
    %4667 = vmatpush.bf16.msra.mxu0 %v4295
    %4668 = vmatpush.bf16.msra.mxu0 %v4287
    %4669 = vmatpush.bf16.msra.mxu0 %v4279
    %4670 = vmatpush.bf16.msra.mxu0 %v4271
    %4671 = vmatpush.bf16.msra.mxu0 %v4263
    %4672 = vmatpush.bf16.msra.mxu0 %v4255
    %4673 = vmatmul.bf16.gmra.mxu0 %v3083
    %v4674 = vpop.f32.mrf.mxu0
    %v4675 = vadd.f32 %v4662, %v4674
    %v4676 = vpop.f32.mrf.mxu0
    %4677 = vdwg.mxu0
    %4678 = vmatpush.bf16.msra.mxu0 %v4375
    %4679 = vmatpush.bf16.msra.mxu0 %v4367
    %4680 = vmatpush.bf16.msra.mxu0 %v4359
    %4681 = vmatpush.bf16.msra.mxu0 %v4351
    %4682 = vmatpush.bf16.msra.mxu0 %v4343
    %4683 = vmatpush.bf16.msra.mxu0 %v4335
    %4684 = vmatpush.bf16.msra.mxu0 %v4327
    %4685 = vmatpush.bf16.msra.mxu0 %v4319
    %4686 = vmatmul.bf16.gmra.mxu0 %v3084
    %v4687 = vpop.f32.mrf.mxu0
    %v4688 = vadd.f32 %v4675, %v4687
    %v4689 = vpop.f32.mrf.mxu0
    %4690 = vdwg.mxu0
    %4691 = vmatpush.bf16.msra.mxu0 %v4184
    %4692 = vmatpush.bf16.msra.mxu0 %v4176
    %4693 = vmatpush.bf16.msra.mxu0 %v4168
    %4694 = vmatpush.bf16.msra.mxu0 %v4160
    %4695 = vmatpush.bf16.msra.mxu0 %v4152
    %4696 = vmatpush.bf16.msra.mxu0 %v4144
    %4697 = vmatpush.bf16.msra.mxu0 %v4136
    %4698 = vmatpush.bf16.msra.mxu0 %v4128
    %4699 = vmatmul.bf16.gmra.mxu0 %v3081
    %v4700 = vpop.f32.mrf.mxu0
    %v4701 = vadd.f32 %v3344, %v4700
    %v4702 = vpop.f32.mrf.mxu0
    %4703 = vdwg.mxu0
    %4704 = vmatpush.bf16.msra.mxu0 %v4248
    %4705 = vmatpush.bf16.msra.mxu0 %v4240
    %4706 = vmatpush.bf16.msra.mxu0 %v4232
    %4707 = vmatpush.bf16.msra.mxu0 %v4224
    %4708 = vmatpush.bf16.msra.mxu0 %v4216
    %4709 = vmatpush.bf16.msra.mxu0 %v4208
    %4710 = vmatpush.bf16.msra.mxu0 %v4200
    %4711 = vmatpush.bf16.msra.mxu0 %v4192
    %4712 = vmatmul.bf16.gmra.mxu0 %v3082
    %v4713 = vpop.f32.mrf.mxu0
    %v4714 = vadd.f32 %v4701, %v4713
    %v4715 = vpop.f32.mrf.mxu0
    %4716 = vdwg.mxu0
    %4717 = vmatpush.bf16.msra.mxu0 %v4312
    %4718 = vmatpush.bf16.msra.mxu0 %v4304
    %4719 = vmatpush.bf16.msra.mxu0 %v4296
    %4720 = vmatpush.bf16.msra.mxu0 %v4288
    %4721 = vmatpush.bf16.msra.mxu0 %v4280
    %4722 = vmatpush.bf16.msra.mxu0 %v4272
    %4723 = vmatpush.bf16.msra.mxu0 %v4264
    %4724 = vmatpush.bf16.msra.mxu0 %v4256
    %4725 = vmatmul.bf16.gmra.mxu0 %v3083
    %v4726 = vpop.f32.mrf.mxu0
    %v4727 = vadd.f32 %v4714, %v4726
    %v4728 = vpop.f32.mrf.mxu0
    %4729 = vdwg.mxu0
    %4730 = vmatpush.bf16.msra.mxu0 %v4376
    %4731 = vmatpush.bf16.msra.mxu0 %v4368
    %4732 = vmatpush.bf16.msra.mxu0 %v4360
    %4733 = vmatpush.bf16.msra.mxu0 %v4352
    %4734 = vmatpush.bf16.msra.mxu0 %v4344
    %4735 = vmatpush.bf16.msra.mxu0 %v4336
    %4736 = vmatpush.bf16.msra.mxu0 %v4328
    %4737 = vmatpush.bf16.msra.mxu0 %v4320
    %4738 = vmatmul.bf16.gmra.mxu0 %v3084
    %v4739 = vpop.f32.mrf.mxu0
    %v4740 = vadd.f32 %v4727, %v4739
    %v4741 = vpop.f32.mrf.mxu0
    %4742 = vdwg.mxu0
    %4743 = vmatpush.bf16.msra.mxu0 %v4185
    %4744 = vmatpush.bf16.msra.mxu0 %v4177
    %4745 = vmatpush.bf16.msra.mxu0 %v4169
    %4746 = vmatpush.bf16.msra.mxu0 %v4161
    %4747 = vmatpush.bf16.msra.mxu0 %v4153
    %4748 = vmatpush.bf16.msra.mxu0 %v4145
    %4749 = vmatpush.bf16.msra.mxu0 %v4137
    %4750 = vmatpush.bf16.msra.mxu0 %v4129
    %4751 = vmatmul.bf16.gmra.mxu0 %v3081
    %v4752 = vpop.f32.mrf.mxu0
    %v4753 = vadd.f32 %v3345, %v4752
    %v4754 = vpop.f32.mrf.mxu0
    %4755 = vdwg.mxu0
    %4756 = vmatpush.bf16.msra.mxu0 %v4249
    %4757 = vmatpush.bf16.msra.mxu0 %v4241
    %4758 = vmatpush.bf16.msra.mxu0 %v4233
    %4759 = vmatpush.bf16.msra.mxu0 %v4225
    %4760 = vmatpush.bf16.msra.mxu0 %v4217
    %4761 = vmatpush.bf16.msra.mxu0 %v4209
    %4762 = vmatpush.bf16.msra.mxu0 %v4201
    %4763 = vmatpush.bf16.msra.mxu0 %v4193
    %4764 = vmatmul.bf16.gmra.mxu0 %v3082
    %v4765 = vpop.f32.mrf.mxu0
    %v4766 = vadd.f32 %v4753, %v4765
    %v4767 = vpop.f32.mrf.mxu0
    %4768 = vdwg.mxu0
    %4769 = vmatpush.bf16.msra.mxu0 %v4313
    %4770 = vmatpush.bf16.msra.mxu0 %v4305
    %4771 = vmatpush.bf16.msra.mxu0 %v4297
    %4772 = vmatpush.bf16.msra.mxu0 %v4289
    %4773 = vmatpush.bf16.msra.mxu0 %v4281
    %4774 = vmatpush.bf16.msra.mxu0 %v4273
    %4775 = vmatpush.bf16.msra.mxu0 %v4265
    %4776 = vmatpush.bf16.msra.mxu0 %v4257
    %4777 = vmatmul.bf16.gmra.mxu0 %v3083
    %v4778 = vpop.f32.mrf.mxu0
    %v4779 = vadd.f32 %v4766, %v4778
    %v4780 = vpop.f32.mrf.mxu0
    %4781 = vdwg.mxu0
    %4782 = vmatpush.bf16.msra.mxu0 %v4377
    %4783 = vmatpush.bf16.msra.mxu0 %v4369
    %4784 = vmatpush.bf16.msra.mxu0 %v4361
    %4785 = vmatpush.bf16.msra.mxu0 %v4353
    %4786 = vmatpush.bf16.msra.mxu0 %v4345
    %4787 = vmatpush.bf16.msra.mxu0 %v4337
    %4788 = vmatpush.bf16.msra.mxu0 %v4329
    %4789 = vmatpush.bf16.msra.mxu0 %v4321
    %4790 = vmatmul.bf16.gmra.mxu0 %v3084
    %v4791 = vpop.f32.mrf.mxu0
    %v4792 = vadd.f32 %v4779, %v4791
    %v4793 = vpop.f32.mrf.mxu0
    %4794 = vdwg.mxu0
    %4795 = vmatpush.bf16.msra.mxu0 %v4186
    %4796 = vmatpush.bf16.msra.mxu0 %v4178
    %4797 = vmatpush.bf16.msra.mxu0 %v4170
    %4798 = vmatpush.bf16.msra.mxu0 %v4162
    %4799 = vmatpush.bf16.msra.mxu0 %v4154
    %4800 = vmatpush.bf16.msra.mxu0 %v4146
    %4801 = vmatpush.bf16.msra.mxu0 %v4138
    %4802 = vmatpush.bf16.msra.mxu0 %v4130
    %4803 = vmatmul.bf16.gmra.mxu0 %v3081
    %v4804 = vpop.f32.mrf.mxu0
    %v4805 = vadd.f32 %v3346, %v4804
    %v4806 = vpop.f32.mrf.mxu0
    %4807 = vdwg.mxu0
    %4808 = vmatpush.bf16.msra.mxu0 %v4250
    %4809 = vmatpush.bf16.msra.mxu0 %v4242
    %4810 = vmatpush.bf16.msra.mxu0 %v4234
    %4811 = vmatpush.bf16.msra.mxu0 %v4226
    %4812 = vmatpush.bf16.msra.mxu0 %v4218
    %4813 = vmatpush.bf16.msra.mxu0 %v4210
    %4814 = vmatpush.bf16.msra.mxu0 %v4202
    %4815 = vmatpush.bf16.msra.mxu0 %v4194
    %4816 = vmatmul.bf16.gmra.mxu0 %v3082
    %v4817 = vpop.f32.mrf.mxu0
    %v4818 = vadd.f32 %v4805, %v4817
    %v4819 = vpop.f32.mrf.mxu0
    %4820 = vdwg.mxu0
    %4821 = vmatpush.bf16.msra.mxu0 %v4314
    %4822 = vmatpush.bf16.msra.mxu0 %v4306
    %4823 = vmatpush.bf16.msra.mxu0 %v4298
    %4824 = vmatpush.bf16.msra.mxu0 %v4290
    %4825 = vmatpush.bf16.msra.mxu0 %v4282
    %4826 = vmatpush.bf16.msra.mxu0 %v4274
    %4827 = vmatpush.bf16.msra.mxu0 %v4266
    %4828 = vmatpush.bf16.msra.mxu0 %v4258
    %4829 = vmatmul.bf16.gmra.mxu0 %v3083
    %v4830 = vpop.f32.mrf.mxu0
    %v4831 = vadd.f32 %v4818, %v4830
    %v4832 = vpop.f32.mrf.mxu0
    %4833 = vdwg.mxu0
    %4834 = vmatpush.bf16.msra.mxu0 %v4378
    %4835 = vmatpush.bf16.msra.mxu0 %v4370
    %4836 = vmatpush.bf16.msra.mxu0 %v4362
    %4837 = vmatpush.bf16.msra.mxu0 %v4354
    %4838 = vmatpush.bf16.msra.mxu0 %v4346
    %4839 = vmatpush.bf16.msra.mxu0 %v4338
    %4840 = vmatpush.bf16.msra.mxu0 %v4330
    %4841 = vmatpush.bf16.msra.mxu0 %v4322
    %4842 = vmatmul.bf16.gmra.mxu0 %v3084
    %v4843 = vpop.f32.mrf.mxu0
    %v4844 = vadd.f32 %v4831, %v4843
    %v4845 = vpop.f32.mrf.mxu0
    %4846 = vdwg.mxu0
    %4847 = vmatpush.bf16.msra.mxu0 %v4187
    %4848 = vmatpush.bf16.msra.mxu0 %v4179
    %4849 = vmatpush.bf16.msra.mxu0 %v4171
    %4850 = vmatpush.bf16.msra.mxu0 %v4163
    %4851 = vmatpush.bf16.msra.mxu0 %v4155
    %4852 = vmatpush.bf16.msra.mxu0 %v4147
    %4853 = vmatpush.bf16.msra.mxu0 %v4139
    %4854 = vmatpush.bf16.msra.mxu0 %v4131
    %4855 = vmatmul.bf16.gmra.mxu0 %v3081
    %v4856 = vpop.f32.mrf.mxu0
    %v4857 = vadd.f32 %v3347, %v4856
    %v4858 = vpop.f32.mrf.mxu0
    %4859 = vdwg.mxu0
    %4860 = vmatpush.bf16.msra.mxu0 %v4251
    %4861 = vmatpush.bf16.msra.mxu0 %v4243
    %4862 = vmatpush.bf16.msra.mxu0 %v4235
    %4863 = vmatpush.bf16.msra.mxu0 %v4227
    %4864 = vmatpush.bf16.msra.mxu0 %v4219
    %4865 = vmatpush.bf16.msra.mxu0 %v4211
    %4866 = vmatpush.bf16.msra.mxu0 %v4203
    %4867 = vmatpush.bf16.msra.mxu0 %v4195
    %4868 = vmatmul.bf16.gmra.mxu0 %v3082
    %v4869 = vpop.f32.mrf.mxu0
    %v4870 = vadd.f32 %v4857, %v4869
    %v4871 = vpop.f32.mrf.mxu0
    %4872 = vdwg.mxu0
    %4873 = vmatpush.bf16.msra.mxu0 %v4315
    %4874 = vmatpush.bf16.msra.mxu0 %v4307
    %4875 = vmatpush.bf16.msra.mxu0 %v4299
    %4876 = vmatpush.bf16.msra.mxu0 %v4291
    %4877 = vmatpush.bf16.msra.mxu0 %v4283
    %4878 = vmatpush.bf16.msra.mxu0 %v4275
    %4879 = vmatpush.bf16.msra.mxu0 %v4267
    %4880 = vmatpush.bf16.msra.mxu0 %v4259
    %4881 = vmatmul.bf16.gmra.mxu0 %v3083
    %v4882 = vpop.f32.mrf.mxu0
    %v4883 = vadd.f32 %v4870, %v4882
    %v4884 = vpop.f32.mrf.mxu0
    %4885 = vdwg.mxu0
    %4886 = vmatpush.bf16.msra.mxu0 %v4379
    %4887 = vmatpush.bf16.msra.mxu0 %v4371
    %4888 = vmatpush.bf16.msra.mxu0 %v4363
    %4889 = vmatpush.bf16.msra.mxu0 %v4355
    %4890 = vmatpush.bf16.msra.mxu0 %v4347
    %4891 = vmatpush.bf16.msra.mxu0 %v4339
    %4892 = vmatpush.bf16.msra.mxu0 %v4331
    %4893 = vmatpush.bf16.msra.mxu0 %v4323
    %4894 = vmatmul.bf16.gmra.mxu0 %v3084
    %v4895 = vpop.f32.mrf.mxu0
    %v4896 = vadd.f32 %v4883, %v4895
    %v4897 = vpop.f32.mrf.mxu0
    %4898 = vdwg.mxu0
    %4899 = vmatpush.bf16.msra.mxu0 %v4188
    %4900 = vmatpush.bf16.msra.mxu0 %v4180
    %4901 = vmatpush.bf16.msra.mxu0 %v4172
    %4902 = vmatpush.bf16.msra.mxu0 %v4164
    %4903 = vmatpush.bf16.msra.mxu0 %v4156
    %4904 = vmatpush.bf16.msra.mxu0 %v4148
    %4905 = vmatpush.bf16.msra.mxu0 %v4140
    %4906 = vmatpush.bf16.msra.mxu0 %v4132
    %4907 = vmatmul.bf16.gmra.mxu0 %v3081
    %v4908 = vpop.f32.mrf.mxu0
    %v4909 = vadd.f32 %v3348, %v4908
    %v4910 = vpop.f32.mrf.mxu0
    %4911 = vdwg.mxu0
    %4912 = vmatpush.bf16.msra.mxu0 %v4252
    %4913 = vmatpush.bf16.msra.mxu0 %v4244
    %4914 = vmatpush.bf16.msra.mxu0 %v4236
    %4915 = vmatpush.bf16.msra.mxu0 %v4228
    %4916 = vmatpush.bf16.msra.mxu0 %v4220
    %4917 = vmatpush.bf16.msra.mxu0 %v4212
    %4918 = vmatpush.bf16.msra.mxu0 %v4204
    %4919 = vmatpush.bf16.msra.mxu0 %v4196
    %4920 = vmatmul.bf16.gmra.mxu0 %v3082
    %v4921 = vpop.f32.mrf.mxu0
    %v4922 = vadd.f32 %v4909, %v4921
    %v4923 = vpop.f32.mrf.mxu0
    %4924 = vdwg.mxu0
    %4925 = vmatpush.bf16.msra.mxu0 %v4316
    %4926 = vmatpush.bf16.msra.mxu0 %v4308
    %4927 = vmatpush.bf16.msra.mxu0 %v4300
    %4928 = vmatpush.bf16.msra.mxu0 %v4292
    %4929 = vmatpush.bf16.msra.mxu0 %v4284
    %4930 = vmatpush.bf16.msra.mxu0 %v4276
    %4931 = vmatpush.bf16.msra.mxu0 %v4268
    %4932 = vmatpush.bf16.msra.mxu0 %v4260
    %4933 = vmatmul.bf16.gmra.mxu0 %v3083
    %v4934 = vpop.f32.mrf.mxu0
    %v4935 = vadd.f32 %v4922, %v4934
    %v4936 = vpop.f32.mrf.mxu0
    %4937 = vdwg.mxu0
    %4938 = vmatpush.bf16.msra.mxu0 %v4380
    %4939 = vmatpush.bf16.msra.mxu0 %v4372
    %4940 = vmatpush.bf16.msra.mxu0 %v4364
    %4941 = vmatpush.bf16.msra.mxu0 %v4356
    %4942 = vmatpush.bf16.msra.mxu0 %v4348
    %4943 = vmatpush.bf16.msra.mxu0 %v4340
    %4944 = vmatpush.bf16.msra.mxu0 %v4332
    %4945 = vmatpush.bf16.msra.mxu0 %v4324
    %4946 = vmatmul.bf16.gmra.mxu0 %v3084
    %v4947 = vpop.f32.mrf.mxu0
    %v4948 = vadd.f32 %v4935, %v4947
    %v4949 = vpop.f32.mrf.mxu0
    %4950 = vdwg.mxu0
    %4951 = vmatpush.bf16.msra.mxu0 %v4189
    %4952 = vmatpush.bf16.msra.mxu0 %v4181
    %4953 = vmatpush.bf16.msra.mxu0 %v4173
    %4954 = vmatpush.bf16.msra.mxu0 %v4165
    %4955 = vmatpush.bf16.msra.mxu0 %v4157
    %4956 = vmatpush.bf16.msra.mxu0 %v4149
    %4957 = vmatpush.bf16.msra.mxu0 %v4141
    %4958 = vmatpush.bf16.msra.mxu0 %v4133
    %4959 = vmatmul.bf16.gmra.mxu0 %v3081
    %v4960 = vpop.f32.mrf.mxu0
    %v4961 = vadd.f32 %v3349, %v4960
    %v4962 = vpop.f32.mrf.mxu0
    %4963 = vdwg.mxu0
    %4964 = vmatpush.bf16.msra.mxu0 %v4253
    %4965 = vmatpush.bf16.msra.mxu0 %v4245
    %4966 = vmatpush.bf16.msra.mxu0 %v4237
    %4967 = vmatpush.bf16.msra.mxu0 %v4229
    %4968 = vmatpush.bf16.msra.mxu0 %v4221
    %4969 = vmatpush.bf16.msra.mxu0 %v4213
    %4970 = vmatpush.bf16.msra.mxu0 %v4205
    %4971 = vmatpush.bf16.msra.mxu0 %v4197
    %4972 = vmatmul.bf16.gmra.mxu0 %v3082
    %v4973 = vpop.f32.mrf.mxu0
    %v4974 = vadd.f32 %v4961, %v4973
    %v4975 = vpop.f32.mrf.mxu0
    %4976 = vdwg.mxu0
    %4977 = vmatpush.bf16.msra.mxu0 %v4317
    %4978 = vmatpush.bf16.msra.mxu0 %v4309
    %4979 = vmatpush.bf16.msra.mxu0 %v4301
    %4980 = vmatpush.bf16.msra.mxu0 %v4293
    %4981 = vmatpush.bf16.msra.mxu0 %v4285
    %4982 = vmatpush.bf16.msra.mxu0 %v4277
    %4983 = vmatpush.bf16.msra.mxu0 %v4269
    %4984 = vmatpush.bf16.msra.mxu0 %v4261
    %4985 = vmatmul.bf16.gmra.mxu0 %v3083
    %v4986 = vpop.f32.mrf.mxu0
    %v4987 = vadd.f32 %v4974, %v4986
    %v4988 = vpop.f32.mrf.mxu0
    %4989 = vdwg.mxu0
    %4990 = vmatpush.bf16.msra.mxu0 %v4381
    %4991 = vmatpush.bf16.msra.mxu0 %v4373
    %4992 = vmatpush.bf16.msra.mxu0 %v4365
    %4993 = vmatpush.bf16.msra.mxu0 %v4357
    %4994 = vmatpush.bf16.msra.mxu0 %v4349
    %4995 = vmatpush.bf16.msra.mxu0 %v4341
    %4996 = vmatpush.bf16.msra.mxu0 %v4333
    %4997 = vmatpush.bf16.msra.mxu0 %v4325
    %4998 = vmatmul.bf16.gmra.mxu0 %v3084
    %v4999 = vpop.f32.mrf.mxu0
    %v5000 = vadd.f32 %v4987, %v4999
    %v5001 = vpop.f32.mrf.mxu0
    %5002 = vdwg.mxu0
    %5003 = vmatpush.bf16.msra.mxu0 %v4190
    %5004 = vmatpush.bf16.msra.mxu0 %v4182
    %5005 = vmatpush.bf16.msra.mxu0 %v4174
    %5006 = vmatpush.bf16.msra.mxu0 %v4166
    %5007 = vmatpush.bf16.msra.mxu0 %v4158
    %5008 = vmatpush.bf16.msra.mxu0 %v4150
    %5009 = vmatpush.bf16.msra.mxu0 %v4142
    %5010 = vmatpush.bf16.msra.mxu0 %v4134
    %5011 = vmatmul.bf16.gmra.mxu0 %v3081
    %v5012 = vpop.f32.mrf.mxu0
    %v5013 = vadd.f32 %v3350, %v5012
    %v5014 = vpop.f32.mrf.mxu0
    %5015 = vdwg.mxu0
    %5016 = vmatpush.bf16.msra.mxu0 %v4254
    %5017 = vmatpush.bf16.msra.mxu0 %v4246
    %5018 = vmatpush.bf16.msra.mxu0 %v4238
    %5019 = vmatpush.bf16.msra.mxu0 %v4230
    %5020 = vmatpush.bf16.msra.mxu0 %v4222
    %5021 = vmatpush.bf16.msra.mxu0 %v4214
    %5022 = vmatpush.bf16.msra.mxu0 %v4206
    %5023 = vmatpush.bf16.msra.mxu0 %v4198
    %5024 = vmatmul.bf16.gmra.mxu0 %v3082
    %v5025 = vpop.f32.mrf.mxu0
    %v5026 = vadd.f32 %v5013, %v5025
    %v5027 = vpop.f32.mrf.mxu0
    %5028 = vdwg.mxu0
    %5029 = vmatpush.bf16.msra.mxu0 %v4318
    %5030 = vmatpush.bf16.msra.mxu0 %v4310
    %5031 = vmatpush.bf16.msra.mxu0 %v4302
    %5032 = vmatpush.bf16.msra.mxu0 %v4294
    %5033 = vmatpush.bf16.msra.mxu0 %v4286
    %5034 = vmatpush.bf16.msra.mxu0 %v4278
    %5035 = vmatpush.bf16.msra.mxu0 %v4270
    %5036 = vmatpush.bf16.msra.mxu0 %v4262
    %5037 = vmatmul.bf16.gmra.mxu0 %v3083
    %v5038 = vpop.f32.mrf.mxu0
    %v5039 = vadd.f32 %v5026, %v5038
    %v5040 = vpop.f32.mrf.mxu0
    %5041 = vdwg.mxu0
    %5042 = vmatpush.bf16.msra.mxu0 %v4382
    %5043 = vmatpush.bf16.msra.mxu0 %v4374
    %5044 = vmatpush.bf16.msra.mxu0 %v4366
    %5045 = vmatpush.bf16.msra.mxu0 %v4358
    %5046 = vmatpush.bf16.msra.mxu0 %v4350
    %5047 = vmatpush.bf16.msra.mxu0 %v4342
    %5048 = vmatpush.bf16.msra.mxu0 %v4334
    %5049 = vmatpush.bf16.msra.mxu0 %v4326
    %5050 = vmatmul.bf16.gmra.mxu0 %v3084
    %v5051 = vpop.f32.mrf.mxu0
    %v5052 = vadd.f32 %v5039, %v5051
    %v5053 = vpop.f32.mrf.mxu0
    %5054 = vdwg.mxu0
    %v5055 = vtanh.pop %v4688
    %v5056 = vtanh.pop %v4740
    %v5057 = vtanh.pop %v4792
    %v5058 = vtanh.pop %v4844
    %v5059 = vtanh.pop %v4896
    %v5060 = vtanh.pop %v4948
    %v5061 = vtanh.pop %v5000
    %v5062 = vtanh.pop %v5052
    %5063 = vst [vmem:[%s9] sm:$0xff] %v5055
    %5064 = vst [vmem:[%s9 + $0x8] sm:$0xff] %v5056
    %5065 = vst [vmem:[%s9 + $0x10] sm:$0xff] %v5057
    %5066 = vst [vmem:[%s9 + $0x18] sm:$0xff] %v5058
    %5067 = vst [vmem:[%s9 + $0x20] sm:$0xff] %v5059
    %5068 = vst [vmem:[%s9 + $0x28] sm:$0xff] %v5060
    %5069 = vst [vmem:[%s9 + $0x30] sm:$0xff] %v5061
    %5070 = vst [vmem:[%s9 + $0x38] sm:$0xff] %v5062
    // Predicated region
    $region54: #{_lambda_.1} parent=1 // pred_check
      _
    $region55: #{_lambda_.1} parent=1 // pred_check_branch
      %5072 = sbr.rel (0) target = $region57
    $region56: #{_lambda_.1} parent=1 // pred_region
      _
    $region57: #{_lambda_.1} parent=1 // pred_fallthru
      _
    // Predicated region
    $region58: #{_lambda_.1} parent=1 // pred_check
      _
    $region59: #{_lambda_.1} parent=1 // pred_check_branch
      %5074 = sbr.rel (0) target = $region61
    $region60: #{_lambda_.1} parent=1 // pred_region
      _
    $region61: #{_lambda_.1} parent=1 // pred_fallthru
      _
    %5075 = vsyncpa [#allocation3], 1
    %5076 = vsyncpa [#allocation5], 1
    %5077 = vsyncpa [#allocation8], 1

</llo_original>
